<compile_context>
chip_gen: v6e
topology: v6e:2x2x1
jax: 0.10.0
libtpu: 0.0.40
codegen_flags: <defaults>
</compile_context>

<pallas_src>
import functools
import math

import jax
import jax.numpy as jnp
from jax import lax
from jax.experimental import pallas as pl
from jax.experimental.pallas import tpu as pltpu


# ----------------------------- shared block math ----------------------------
# Operates on plain jnp arrays, so it is shared between the Pallas kernel and
# the pure-JAX mirrored reference.

def _decoder_block(x, get_w, get_b, w1, b1, w2, causal_add, recip):
    """One DecoderBlock on a 2-D (S, D) f32 activation.

    get_w(i) -> (D, D) weight in the compute dtype; order:
                [q1*scale, k1, v1, o1_folded, q2*scale, k2, v2, o2_folded]
    get_b(i) -> (1, D) f32 bias / LayerNorm row; order:
                [bq1*s, bk1, bv1, bo1, bq2*s, bk2, bv2, bo2, b2_ffn,
                 g1, beta1, g2, beta2, g3, beta3]
    w1 (D, F), b1 (1, F), w2 (F, D); recip(d) = reciprocal used in softmax.
    """
    cdt = w1.dtype  # bf16 on the kernel path, f32 for the f32 reference

    def mm(a, w):
        return jnp.dot(a.astype(w.dtype), w, preferred_element_type=jnp.float32)

    def attention(q, k, v, mask_add):
        # transpose-free Q·K^T contraction on the last dims
        s = lax.dot_general(q.astype(cdt), k.astype(cdt),
                            (((1,), (1,)), ((), ())),
                            preferred_element_type=jnp.float32)
        if mask_add is not None:
            s = s + mask_add
        m = jnp.max(s, axis=-1, keepdims=True)
        p = jnp.exp(s - m)
        p = p * recip(jnp.sum(p, axis=-1, keepdims=True))
        return mm(p, v.astype(cdt))

    def layer_norm(z, g, b, eps=1e-5):
        mu = jnp.mean(z, axis=-1, keepdims=True)
        var = jnp.mean((z - mu) ** 2, axis=-1, keepdims=True)
        return (z - mu) * lax.rsqrt(var + eps) * g + b

    x_copy = x

    # --- multi_head_attention_1 (Q=K=V=X, no mask) + residual + LayerNorm1 ---
    q = mm(x, get_w(0)) + get_b(0)
    k = mm(x, get_w(1)) + get_b(1)
    v = mm(x, get_w(2)) + get_b(2)
    z = mm(attention(q, k, v, None), get_w(3)) + get_b(3)        # folded heads
    x = layer_norm(x + z, get_b(9), get_b(10))

    # --- multi_head_attention_2 (Q=X, K=V=X_copy, causal mask) + LayerNorm2 ---
    q = mm(x, get_w(4)) + get_b(4)
    k = mm(x_copy, get_w(5)) + get_b(5)
    v = mm(x_copy, get_w(6)) + get_b(6)
    z = mm(attention(q, k, v, causal_add), get_w(7)) + get_b(7)
    x = layer_norm(x + z, get_b(11), get_b(12))

    # --- feed forward (Linear -> ReLU -> Linear) + LayerNorm3 ---
    h = jnp.maximum(mm(x, w1) + b1, 0.0)
    z = mm(h, w2) + get_b(8)
    x = layer_norm(x + z, get_b(13), get_b(14))
    return x


# ------------------------------ Pallas kernel --------------------------------

def decoder_kernel(x_ref, wdd_ref, w1_ref, w2_ref, bvec_ref, b1_ref, o_ref,
                   *, num_layers):
    S, D = x_ref.shape
    x = x_ref[...].astype(jnp.float32)                       # (S, D), f32

    # Additive causal mask, built once per kernel invocation (not per layer).
    # -1e30 (not -inf) so a fully-masked row could never produce NaN.
    row = lax.broadcasted_iota(jnp.int32, (S, S), 0)
    col = lax.broadcasted_iota(jnp.int32, (S, S), 1)
    causal_add = jnp.where(col > row, jnp.float32(-1e30), jnp.float32(0.0))

    recip = lambda d: pl.reciprocal(d, approx=True)           # EUP slot

    # TODO(synk): a static unroll is right for small L; for deep stacks switch
    # to lax.fori_loop or a streamed layer grid axis with pl.Buffered prefetch.
    for l in range(num_layers):
        x = _decoder_block(
            x,
            get_w=lambda i, l=l: wdd_ref[l, i],               # (D, D) bf16
            get_b=lambda i, l=l: bvec_ref[l, i:i + 1, :],     # (1, D) f32
            w1=w1_ref[l], b1=b1_ref[l], w2=w2_ref[l],
            causal_add=causal_add, recip=recip)

    o_ref[...] = x.astype(o_ref.dtype)


def _vmem_limit_bytes():
    """Generation-aware scoped-VMEM budget (v5e/v6e: 128 MiB physical, v7x: 64)."""
    try:
        cap = pltpu.get_tpu_info().vmem_capacity_bytes
    except Exception:       # unknown runtime -> conservative default
        return 32 * 1024 * 1024
    return int(min(cap * 3 // 4, 96 * 1024 * 1024))


def decoder_forward(x, packed):
    """Run the whole Decoder as a single Pallas kernel.

    grid=(B,) is a *parallel* batch axis; all layer weights are passed as full
    stacked slabs with constant index_maps (DMA'd once, VMEM-resident); the
    layer loop runs inside the kernel.
    """
    wdd, w1, w2, bvec, b1 = packed
    B, S, D = x.shape
    L = wdd.shape[0]

    def resident(p):
        nd = p.ndim
        return pl.BlockSpec(p.shape, lambda b: (0,) * nd)

    kernel = functools.partial(decoder_kernel, num_layers=L)
    return pl.pallas_call(
        kernel,
        out_shape=jax.ShapeDtypeStruct((B, S, D), x.dtype),
        grid=(B,),
        in_specs=[pl.BlockSpec((None, S, D), lambda b: (b, 0, 0)),
                  resident(wdd), resident(w1), resident(w2),
                  resident(bvec), resident(b1)],
        out_specs=pl.BlockSpec((None, S, D), lambda b: (b, 0, 0)),
        compiler_params=pltpu.CompilerParams(
            dimension_semantics=("parallel",),   # batch elems are independent
            vmem_limit_bytes=_vmem_limit_bytes(),
        ),
    )(x, wdd, w1, w2, bvec, b1)


# --------------------------- parameter handling ------------------------------

def _linear_params(key, fan_in, fan_out):
    # PyTorch-like uniform(-1/sqrt(fan_in), 1/sqrt(fan_in)); weight stored (in, out).
    kw, kb = jax.random.split(key)
    bound = 1.0 / math.sqrt(fan_in)
    w = jax.random.uniform(kw, (fan_in, fan_out), jnp.float32, -bound, bound)
    b = jax.random.uniform(kb, (1, fan_out), jnp.float32, -bound, bound)
    return w, b


def make_raw_block_params(key, D, H, F):
    """Raw parameters of one DecoderBlock, mirroring the torch module layout."""
    keys = jax.random.split(key, 10)
    p = []
    for i in range(3):                                        # MHA1: WQ, WK, WV
        p += list(_linear_params(keys[i], D, D))
    p += list(_linear_params(keys[3], D * H, D))              # MHA1: out linear
    p += [jnp.ones((1, D), jnp.float32), jnp.zeros((1, D), jnp.float32)]   # LN1
    for i in range(4, 7):                                     # MHA2: WQ, WK, WV
        p += list(_linear_params(keys[i], D, D))
    p += list(_linear_params(keys[7], D * H, D))              # MHA2: out linear
    p += [jnp.ones((1, D), jnp.float32), jnp.zeros((1, D), jnp.float32)]   # LN2
    p += list(_linear_params(keys[8], D, F))                  # FFN linear 1
    p += list(_linear_params(keys[9], F, D))                  # FFN linear 2
    p += [jnp.ones((1, D), jnp.float32), jnp.zeros((1, D), jnp.float32)]   # LN3
    return tuple(p)


def pack_decoder_params(raw_layers, D, H, compute_dtype=jnp.bfloat16):
    """Fold + pack all layers into 5 stacked slabs:
         wdd  (L, 8, D, D)  compute_dtype,
         w1   (L, D, F),  w2 (L, F, D)  compute_dtype,
         bvec (L, 15, D)  f32  (biases + LayerNorm gamma/beta rows),
         b1   (L, 1, F)   f32.
    """
    scale = 1.0 / math.sqrt(D)
    wdd_l, w1_l, w2_l, bvec_l, b1_l = [], [], [], [], []
    for raw in raw_layers:
        (wq1, bq1, wk1, bk1, wv1, bv1, wl1, bl1, g1, be1,
         wq2, bq2, wk2, bk2, wv2, bv2, wl2, bl2, g2, be2,
         w1, b1, w2, b2, g3, be3) = raw
        # Fold the 1/sqrt(D) softmax scale into the Q projections.
        wq1s, bq1s = wq1 * scale, bq1 * scale
        wq2s, bq2s = wq2 * scale, bq2 * scale
        # Fold identical heads: concat([z]*H) @ Wl == z @ sum_h Wl[h*D:(h+1)*D].
        wo1 = wl1.reshape(H, D, D).sum(axis=0)
        wo2 = wl2.reshape(H, D, D).sum(axis=0)
        wdd_l.append(jnp.stack([wq1s, wk1, wv1, wo1, wq2s, wk2, wv2, wo2]))
        bvec_l.append(jnp.concatenate(
            [bq1s, bk1, bv1, bl1, bq2s, bk2, bv2, bl2, b2,
             g1, be1, g2, be2, g3, be3], axis=0))
        w1_l.append(w1); w2_l.append(w2); b1_l.append(b1)
    stack = lambda lst, dt: jnp.stack(lst).astype(dt)
    return (stack(wdd_l, compute_dtype), stack(w1_l, compute_dtype),
            stack(w2_l, compute_dtype), stack(bvec_l, jnp.float32),
            stack(b1_l, jnp.float32))


# ---------------------------- pure-JAX references ----------------------------

def _ref_self_attention(xq, xk, xv, wq, bq, wk, bk, wv, bv, causal):
    q = xq @ wq + bq
    k = xk @ wk + bk
    v = xv @ wv + bv
    s = (q @ k.T) / math.sqrt(q.shape[-1])
    if causal:
        sq = s.shape[0]
        mask = jnp.triu(jnp.ones((sq, sq), bool), k=1)
        s = jnp.where(mask, -jnp.inf, s)
    return jax.nn.softmax(s, axis=-1) @ v


def _ref_mha(xq, xk, xv, wq, bq, wk, bk, wv, bv, wl, bl, H, causal):
    z = _ref_self_attention(xq, xk, xv, wq, bq, wk, bk, wv, bv, causal)
    zc = jnp.concatenate([z] * H, axis=-1)   # identical heads (shared SelfAttention)
    return zc @ wl + bl


def _ref_layer_norm(x, g, b, eps=1e-5):
    mu = x.mean(-1, keepdims=True)
    var = ((x - mu) ** 2).mean(-1, keepdims=True)
    return (x - mu) / jnp.sqrt(var + eps) * g + b


def reference_decoder_original(x, raw_layers, H):
    """Faithful f32 reproduction of the torch module (separate linears, concat
    heads, scale applied to the scores)."""
    def block(xb, raw):
        (wq1, bq1, wk1, bk1, wv1, bv1, wl1, bl1, g1, be1,
         wq2, bq2, wk2, bk2, wv2, bv2, wl2, bl2, g2, be2,
         w1, b1, w2, b2, g3, be3) = raw
        xc = xb
        z = _ref_mha(xb, xb, xb, wq1, bq1, wk1, bk1, wv1, bv1, wl1, bl1, H, False)
        xb = _ref_layer_norm(xb + z, g1, be1)
        z = _ref_mha(xb, xc, xc, wq2, bq2, wk2, bk2, wv2, bv2, wl2, bl2, H, True)
        xb = _ref_layer_norm(xb + z, g2, be2)
        h = jnp.maximum(xb @ w1 + b1, 0.0)
        z = h @ w2 + b2
        return _ref_layer_norm(xb + z, g3, be3)

    for raw in raw_layers:
        x = jax.vmap(lambda xb, _raw=raw: block(xb, _raw))(x)
    return x


def reference_decoder_packed(x, packed):
    """Same math as the Pallas kernel (folded/packed params, same precision
    policy), run as plain JAX (exact division instead of the EUP approx recip)."""
    wdd, w1, w2, bvec, b1 = packed
    B, S, D = x.shape
    L = wdd.shape[0]
    row = lax.broadcasted_iota(jnp.int32, (S, S), 0)
    col = lax.broadcasted_iota(jnp.int32, (S, S), 1)
    causal_add = jnp.where(col > row, jnp.float32(-1e30), jnp.float32(0.0))
    recip = lambda d: 1.0 / d

    def one_example(xe):
        xe = xe.astype(jnp.float32)
        for l in range(L):
            xe = _decoder_block(
                xe,
                get_w=lambda i, l=l: wdd[l, i],
                get_b=lambda i, l=l: bvec[l, i:i + 1, :],
                w1=w1[l], b1=b1[l], w2=w2[l],
                causal_add=causal_add, recip=recip)
        return xe

    return jax.vmap(one_example)(x)


# ----------------------------------- main ------------------------------------

if __name__ == "__main__":
    B, S, D = 2, 8, 32          # batch, seq, dim_input
    H = 2                       # num_heads
    F = 64                      # dim_feed_forward
    L = 2                       # num_layers

    root = jax.random.PRNGKey(0)
    kx, kp = jax.random.split(root)
    x = jax.random.normal(kx, (B, S, D), jnp.float32)

    layer_keys = jax.random.split(kp, L)
    raw_layers = [make_raw_block_params(k, D, H, F) for k in layer_keys]

    packed_bf16 = pack_decoder_params(raw_layers, D, H, jnp.bfloat16)
    packed_f32 = pack_decoder_params(raw_layers, D, H, jnp.float32)

    out = jax.block_until_ready(decoder_forward(x, packed_bf16))
    assert out.shape == (B, S, D) and out.dtype == x.dtype

    # Check 1 (algebra only, no kernel): folding/packing (scale fold, head fold)
    # preserves the original torch semantics exactly (both in f32).
    ref_orig = jax.block_until_ready(reference_decoder_original(x, raw_layers, H))
    ref_packed_f32 = jax.block_until_ready(reference_decoder_packed(x, packed_f32))
    assert jnp.allclose(ref_orig, ref_packed_f32, rtol=1e-4, atol=1e-4), \
        "packed-parameter algebra mismatch vs original semantics"

    # Check 2: Pallas kernel (bf16 MXU inputs, f32 accumulation/softmax/LN,
    # EUP approx reciprocal) vs the original f32 semantics.
    assert jnp.allclose(out, ref_orig, rtol=2.5e-2, atol=2.5e-2), \
        "Pallas kernel mismatch vs original f32 reference"

    # Check 3: tighter check against the mirrored packed bf16 reference.
    ref_packed_bf16 = jax.block_until_ready(reference_decoder_packed(x, packed_bf16))
    assert jnp.allclose(out, ref_packed_bf16, rtol=1e-2, atol=1e-2), \
        "Pallas kernel mismatch vs mirrored packed reference"

    print("KERNEL_OK")
</pallas_src>

<mosaic_0001>
module attributes {stable_mosaic.version = 11 : i64} {
  func.func @decoder_kernel(%arg0: i32, %arg1: memref<1x8x32xf32, #tpu.memory_space<vmem>>, %arg2: memref<2x8x32x32xbf16, #tpu.memory_space<vmem>>, %arg3: memref<2x32x64xbf16, #tpu.memory_space<vmem>>, %arg4: memref<2x64x32xbf16, #tpu.memory_space<vmem>>, %arg5: memref<2x15x32xf32, #tpu.memory_space<vmem>>, %arg6: memref<2x1x64xf32, #tpu.memory_space<vmem>>, %arg7: memref<1x8x32xf32, #tpu.memory_space<vmem>>) attributes {dimension_semantics = [#tpu.dimension_semantics<parallel>], iteration_bounds = array<i64: 2>, scalar_prefetch = 0 : i64, scratch_operands = 0 : i64, tpu.core_type = #tpu.core_type<tc>, window_params = [{transform_indices = @transform_0, window_bounds = array<i64: 1, 8, 32>}, {pipeline_mode = #tpu.pipeline_mode<synchronous>, transform_indices = @transform_1, window_bounds = array<i64: 2, 8, 32, 32>}, {pipeline_mode = #tpu.pipeline_mode<synchronous>, transform_indices = @transform_2, window_bounds = array<i64: 2, 32, 64>}, {pipeline_mode = #tpu.pipeline_mode<synchronous>, transform_indices = @transform_3, window_bounds = array<i64: 2, 64, 32>}, {pipeline_mode = #tpu.pipeline_mode<synchronous>, transform_indices = @transform_4, window_bounds = array<i64: 2, 15, 32>}, {pipeline_mode = #tpu.pipeline_mode<synchronous>, transform_indices = @transform_5, window_bounds = array<i64: 2, 1, 64>}, {transform_indices = @transform_6, window_bounds = array<i64: 1, 8, 32>}]} {
    %c0 = arith.constant 0 : index
    %c0_0 = arith.constant 0 : index
    %c0_1 = arith.constant 0 : index
    %0 = vector.load %arg1[%c0, %c0_0, %c0_1] : memref<1x8x32xf32, #tpu.memory_space<vmem>>, vector<1x8x32xf32>
    %1 = vector.shape_cast %0 : vector<1x8x32xf32> to vector<8x32xf32>
    %2 = tpu.iota {dimensions = array<i32: 0>} : vector<8x8xi32>
    %3 = tpu.iota {dimensions = array<i32: 1>} : vector<8x8xi32>
    %4 = arith.cmpi sgt, %3, %2 : vector<8x8xi32>
    %cst = arith.constant -1.000000e+30 : f32
    %cst_2 = arith.constant 0.000000e+00 : f32
    %5 = vector.broadcast %cst : f32 to vector<8x8xf32>
    %6 = vector.broadcast %cst_2 : f32 to vector<8x8xf32>
    %7 = arith.select %4, %5, %6 : vector<8x8xi1>, vector<8x8xf32>
    %c0_3 = arith.constant 0 : index
    %c0_4 = arith.constant 0 : index
    %c0_5 = arith.constant 0 : index
    %8 = vector.load %arg3[%c0_3, %c0_4, %c0_5] : memref<2x32x64xbf16, #tpu.memory_space<vmem>>, vector<1x32x64xbf16>
    %9 = vector.shape_cast %8 : vector<1x32x64xbf16> to vector<32x64xbf16>
    %c0_6 = arith.constant 0 : index
    %c0_7 = arith.constant 0 : index
    %c0_8 = arith.constant 0 : index
    %10 = vector.load %arg6[%c0_6, %c0_7, %c0_8] : memref<2x1x64xf32, #tpu.memory_space<vmem>>, vector<1x1x64xf32>
    %11 = vector.shape_cast %10 : vector<1x1x64xf32> to vector<1x64xf32>
    %c0_9 = arith.constant 0 : index
    %c0_10 = arith.constant 0 : index
    %c0_11 = arith.constant 0 : index
    %12 = vector.load %arg4[%c0_9, %c0_10, %c0_11] : memref<2x64x32xbf16, #tpu.memory_space<vmem>>, vector<1x64x32xbf16>
    %13 = vector.shape_cast %12 : vector<1x64x32xbf16> to vector<64x32xbf16>
    %c0_12 = arith.constant 0 : index
    %c0_13 = arith.constant 0 : index
    %c0_14 = arith.constant 0 : index
    %c0_15 = arith.constant 0 : index
    %14 = vector.load %arg2[%c0_12, %c0_13, %c0_14, %c0_15] : memref<2x8x32x32xbf16, #tpu.memory_space<vmem>>, vector<1x1x32x32xbf16>
    %15 = vector.shape_cast %14 : vector<1x1x32x32xbf16> to vector<32x32xbf16>
    %16 = arith.truncf %1 : vector<8x32xf32> to vector<8x32xbf16>
    %cst_16 = arith.constant dense<0.000000e+00> : vector<8x32xf32>
    %17 = tpu.matmul %16, %15, %cst_16 {dimension_numbers = #tpu.dot_dimension_numbers<[1], [0], [0], [1], [0, 0, 1, 1], [], []>} : vector<8x32xbf16>, vector<32x32xbf16>, vector<8x32xf32> -> vector<8x32xf32>
    %c0_17 = arith.constant 0 : index
    %c0_18 = arith.constant 0 : index
    %c0_19 = arith.constant 0 : index
    %18 = vector.load %arg5[%c0_17, %c0_18, %c0_19] : memref<2x15x32xf32, #tpu.memory_space<vmem>>, vector<1x1x32xf32>
    %19 = vector.shape_cast %18 : vector<1x1x32xf32> to vector<1x32xf32>
    %20 = vector.broadcast %19 : vector<1x32xf32> to vector<8x32xf32>
    %21 = arith.addf %17, %20 : vector<8x32xf32>
    %c0_20 = arith.constant 0 : index
    %c1 = arith.constant 1 : index
    %c0_21 = arith.constant 0 : index
    %c0_22 = arith.constant 0 : index
    %22 = vector.load %arg2[%c0_20, %c1, %c0_21, %c0_22] : memref<2x8x32x32xbf16, #tpu.memory_space<vmem>>, vector<1x1x32x32xbf16>
    %23 = vector.shape_cast %22 : vector<1x1x32x32xbf16> to vector<32x32xbf16>
    %24 = arith.truncf %1 : vector<8x32xf32> to vector<8x32xbf16>
    %cst_23 = arith.constant dense<0.000000e+00> : vector<8x32xf32>
    %25 = tpu.matmul %24, %23, %cst_23 {dimension_numbers = #tpu.dot_dimension_numbers<[1], [0], [0], [1], [0, 0, 1, 1], [], []>} : vector<8x32xbf16>, vector<32x32xbf16>, vector<8x32xf32> -> vector<8x32xf32>
    %c0_24 = arith.constant 0 : index
    %c1_25 = arith.constant 1 : index
    %c0_26 = arith.constant 0 : index
    %26 = vector.load %arg5[%c0_24, %c1_25, %c0_26] : memref<2x15x32xf32, #tpu.memory_space<vmem>>, vector<1x1x32xf32>
    %27 = vector.shape_cast %26 : vector<1x1x32xf32> to vector<1x32xf32>
    %28 = vector.broadcast %27 : vector<1x32xf32> to vector<8x32xf32>
    %29 = arith.addf %25, %28 : vector<8x32xf32>
    %c0_27 = arith.constant 0 : index
    %c2 = arith.constant 2 : index
    %c0_28 = arith.constant 0 : index
    %c0_29 = arith.constant 0 : index
    %30 = vector.load %arg2[%c0_27, %c2, %c0_28, %c0_29] : memref<2x8x32x32xbf16, #tpu.memory_space<vmem>>, vector<1x1x32x32xbf16>
    %31 = vector.shape_cast %30 : vector<1x1x32x32xbf16> to vector<32x32xbf16>
    %32 = arith.truncf %1 : vector<8x32xf32> to vector<8x32xbf16>
    %cst_30 = arith.constant dense<0.000000e+00> : vector<8x32xf32>
    %33 = tpu.matmul %32, %31, %cst_30 {dimension_numbers = #tpu.dot_dimension_numbers<[1], [0], [0], [1], [0, 0, 1, 1], [], []>} : vector<8x32xbf16>, vector<32x32xbf16>, vector<8x32xf32> -> vector<8x32xf32>
    %c0_31 = arith.constant 0 : index
    %c2_32 = arith.constant 2 : index
    %c0_33 = arith.constant 0 : index
    %34 = vector.load %arg5[%c0_31, %c2_32, %c0_33] : memref<2x15x32xf32, #tpu.memory_space<vmem>>, vector<1x1x32xf32>
    %35 = vector.shape_cast %34 : vector<1x1x32xf32> to vector<1x32xf32>
    %36 = vector.broadcast %35 : vector<1x32xf32> to vector<8x32xf32>
    %37 = arith.addf %33, %36 : vector<8x32xf32>
    %38 = arith.truncf %21 : vector<8x32xf32> to vector<8x32xbf16>
    %39 = arith.truncf %29 : vector<8x32xf32> to vector<8x32xbf16>
    %cst_34 = arith.constant dense<0.000000e+00> : vector<8x8xf32>
    %40 = tpu.matmul %38, %39, %cst_34 {dimension_numbers = #tpu.dot_dimension_numbers<[1], [1], [0], [0], [0, 0, 1, 0], [], []>} : vector<8x32xbf16>, vector<8x32xbf16>, vector<8x8xf32> -> vector<8x8xf32>
    %cst_35 = arith.constant dense<0xFF800000> : vector<8xf32>
    %41 = vector.multi_reduction <maximumf>, %40, %cst_35 [1] : vector<8x8xf32> to vector<8xf32>
    %42 = vector.shape_cast %41 : vector<8xf32> to vector<8x1xf32>
    %43 = vector.broadcast %42 : vector<8x1xf32> to vector<8x8xf32>
    %44 = arith.subf %40, %43 : vector<8x8xf32>
    %45 = math.exp %44 : vector<8x8xf32>
    %cst_36 = arith.constant dense<0.000000e+00> : vector<8xf32>
    %46 = vector.multi_reduction <add>, %45, %cst_36 [1] : vector<8x8xf32> to vector<8xf32>
    %47 = vector.shape_cast %46 : vector<8xf32> to vector<8x1xf32>
    %48 = tpu.reciprocal %47 {approx = true} : vector<8x1xf32> -> vector<8x1xf32>
    %49 = vector.broadcast %48 : vector<8x1xf32> to vector<8x8xf32>
    %50 = arith.mulf %45, %49 : vector<8x8xf32>
    %51 = arith.truncf %37 : vector<8x32xf32> to vector<8x32xbf16>
    %52 = arith.truncf %50 : vector<8x8xf32> to vector<8x8xbf16>
    %cst_37 = arith.constant dense<0.000000e+00> : vector<8x32xf32>
    %53 = tpu.matmul %52, %51, %cst_37 {dimension_numbers = #tpu.dot_dimension_numbers<[1], [0], [0], [1], [0, 0, 1, 1], [], []>} : vector<8x8xbf16>, vector<8x32xbf16>, vector<8x32xf32> -> vector<8x32xf32>
    %c0_38 = arith.constant 0 : index
    %c3 = arith.constant 3 : index
    %c0_39 = arith.constant 0 : index
    %c0_40 = arith.constant 0 : index
    %54 = vector.load %arg2[%c0_38, %c3, %c0_39, %c0_40] : memref<2x8x32x32xbf16, #tpu.memory_space<vmem>>, vector<1x1x32x32xbf16>
    %55 = vector.shape_cast %54 : vector<1x1x32x32xbf16> to vector<32x32xbf16>
    %56 = arith.truncf %53 : vector<8x32xf32> to vector<8x32xbf16>
    %cst_41 = arith.constant dense<0.000000e+00> : vector<8x32xf32>
    %57 = tpu.matmul %56, %55, %cst_41 {dimension_numbers = #tpu.dot_dimension_numbers<[1], [0], [0], [1], [0, 0, 1, 1], [], []>} : vector<8x32xbf16>, vector<32x32xbf16>, vector<8x32xf32> -> vector<8x32xf32>
    %c0_42 = arith.constant 0 : index
    %c3_43 = arith.constant 3 : index
    %c0_44 = arith.constant 0 : index
    %58 = vector.load %arg5[%c0_42, %c3_43, %c0_44] : memref<2x15x32xf32, #tpu.memory_space<vmem>>, vector<1x1x32xf32>
    %59 = vector.shape_cast %58 : vector<1x1x32xf32> to vector<1x32xf32>
    %60 = vector.broadcast %59 : vector<1x32xf32> to vector<8x32xf32>
    %61 = arith.addf %57, %60 : vector<8x32xf32>
    %62 = arith.addf %1, %61 : vector<8x32xf32>
    %c0_45 = arith.constant 0 : index
    %c9 = arith.constant 9 : index
    %c0_46 = arith.constant 0 : index
    %63 = vector.load %arg5[%c0_45, %c9, %c0_46] : memref<2x15x32xf32, #tpu.memory_space<vmem>>, vector<1x1x32xf32>
    %64 = vector.shape_cast %63 : vector<1x1x32xf32> to vector<1x32xf32>
    %c0_47 = arith.constant 0 : index
    %c10 = arith.constant 10 : index
    %c0_48 = arith.constant 0 : index
    %65 = vector.load %arg5[%c0_47, %c10, %c0_48] : memref<2x15x32xf32, #tpu.memory_space<vmem>>, vector<1x1x32xf32>
    %66 = vector.shape_cast %65 : vector<1x1x32xf32> to vector<1x32xf32>
    %cst_49 = arith.constant dense<0.000000e+00> : vector<8xf32>
    %67 = vector.multi_reduction <add>, %62, %cst_49 [1] : vector<8x32xf32> to vector<8xf32>
    %68 = vector.shape_cast %67 : vector<8xf32> to vector<8x1xf32>
    %cst_50 = arith.constant 3.200000e+01 : f32
    %69 = vector.broadcast %cst_50 : f32 to vector<8x1xf32>
    %70 = arith.divf %68, %69 : vector<8x1xf32>
    %71 = vector.broadcast %70 : vector<8x1xf32> to vector<8x32xf32>
    %72 = arith.subf %62, %71 : vector<8x32xf32>
    %73 = arith.mulf %72, %72 : vector<8x32xf32>
    %cst_51 = arith.constant dense<0.000000e+00> : vector<8xf32>
    %74 = vector.multi_reduction <add>, %73, %cst_51 [1] : vector<8x32xf32> to vector<8xf32>
    %75 = vector.shape_cast %74 : vector<8xf32> to vector<8x1xf32>
    %cst_52 = arith.constant 3.200000e+01 : f32
    %76 = vector.broadcast %cst_52 : f32 to vector<8x1xf32>
    %77 = arith.divf %75, %76 : vector<8x1xf32>
    %78 = vector.broadcast %70 : vector<8x1xf32> to vector<8x32xf32>
    %79 = arith.subf %62, %78 : vector<8x32xf32>
    %cst_53 = arith.constant 9.99999974E-6 : f32
    %80 = vector.broadcast %cst_53 : f32 to vector<8x1xf32>
    %81 = arith.addf %77, %80 : vector<8x1xf32>
    %82 = math.rsqrt %81 : vector<8x1xf32>
    %83 = vector.broadcast %82 : vector<8x1xf32> to vector<8x32xf32>
    %84 = arith.mulf %79, %83 : vector<8x32xf32>
    %85 = vector.broadcast %64 : vector<1x32xf32> to vector<8x32xf32>
    %86 = arith.mulf %84, %85 : vector<8x32xf32>
    %87 = vector.broadcast %66 : vector<1x32xf32> to vector<8x32xf32>
    %88 = arith.addf %86, %87 : vector<8x32xf32>
    %c0_54 = arith.constant 0 : index
    %c4 = arith.constant 4 : index
    %c0_55 = arith.constant 0 : index
    %c0_56 = arith.constant 0 : index
    %89 = vector.load %arg2[%c0_54, %c4, %c0_55, %c0_56] : memref<2x8x32x32xbf16, #tpu.memory_space<vmem>>, vector<1x1x32x32xbf16>
    %90 = vector.shape_cast %89 : vector<1x1x32x32xbf16> to vector<32x32xbf16>
    %91 = arith.truncf %88 : vector<8x32xf32> to vector<8x32xbf16>
    %cst_57 = arith.constant dense<0.000000e+00> : vector<8x32xf32>
    %92 = tpu.matmul %91, %90, %cst_57 {dimension_numbers = #tpu.dot_dimension_numbers<[1], [0], [0], [1], [0, 0, 1, 1], [], []>} : vector<8x32xbf16>, vector<32x32xbf16>, vector<8x32xf32> -> vector<8x32xf32>
    %c0_58 = arith.constant 0 : index
    %c4_59 = arith.constant 4 : index
    %c0_60 = arith.constant 0 : index
    %93 = vector.load %arg5[%c0_58, %c4_59, %c0_60] : memref<2x15x32xf32, #tpu.memory_space<vmem>>, vector<1x1x32xf32>
    %94 = vector.shape_cast %93 : vector<1x1x32xf32> to vector<1x32xf32>
    %95 = vector.broadcast %94 : vector<1x32xf32> to vector<8x32xf32>
    %96 = arith.addf %92, %95 : vector<8x32xf32>
    %c0_61 = arith.constant 0 : index
    %c5 = arith.constant 5 : index
    %c0_62 = arith.constant 0 : index
    %c0_63 = arith.constant 0 : index
    %97 = vector.load %arg2[%c0_61, %c5, %c0_62, %c0_63] : memref<2x8x32x32xbf16, #tpu.memory_space<vmem>>, vector<1x1x32x32xbf16>
    %98 = vector.shape_cast %97 : vector<1x1x32x32xbf16> to vector<32x32xbf16>
    %99 = arith.truncf %1 : vector<8x32xf32> to vector<8x32xbf16>
    %cst_64 = arith.constant dense<0.000000e+00> : vector<8x32xf32>
    %100 = tpu.matmul %99, %98, %cst_64 {dimension_numbers = #tpu.dot_dimension_numbers<[1], [0], [0], [1], [0, 0, 1, 1], [], []>} : vector<8x32xbf16>, vector<32x32xbf16>, vector<8x32xf32> -> vector<8x32xf32>
    %c0_65 = arith.constant 0 : index
    %c5_66 = arith.constant 5 : index
    %c0_67 = arith.constant 0 : index
    %101 = vector.load %arg5[%c0_65, %c5_66, %c0_67] : memref<2x15x32xf32, #tpu.memory_space<vmem>>, vector<1x1x32xf32>
    %102 = vector.shape_cast %101 : vector<1x1x32xf32> to vector<1x32xf32>
    %103 = vector.broadcast %102 : vector<1x32xf32> to vector<8x32xf32>
    %104 = arith.addf %100, %103 : vector<8x32xf32>
    %c0_68 = arith.constant 0 : index
    %c6 = arith.constant 6 : index
    %c0_69 = arith.constant 0 : index
    %c0_70 = arith.constant 0 : index
    %105 = vector.load %arg2[%c0_68, %c6, %c0_69, %c0_70] : memref<2x8x32x32xbf16, #tpu.memory_space<vmem>>, vector<1x1x32x32xbf16>
    %106 = vector.shape_cast %105 : vector<1x1x32x32xbf16> to vector<32x32xbf16>
    %107 = arith.truncf %1 : vector<8x32xf32> to vector<8x32xbf16>
    %cst_71 = arith.constant dense<0.000000e+00> : vector<8x32xf32>
    %108 = tpu.matmul %107, %106, %cst_71 {dimension_numbers = #tpu.dot_dimension_numbers<[1], [0], [0], [1], [0, 0, 1, 1], [], []>} : vector<8x32xbf16>, vector<32x32xbf16>, vector<8x32xf32> -> vector<8x32xf32>
    %c0_72 = arith.constant 0 : index
    %c6_73 = arith.constant 6 : index
    %c0_74 = arith.constant 0 : index
    %109 = vector.load %arg5[%c0_72, %c6_73, %c0_74] : memref<2x15x32xf32, #tpu.memory_space<vmem>>, vector<1x1x32xf32>
    %110 = vector.shape_cast %109 : vector<1x1x32xf32> to vector<1x32xf32>
    %111 = vector.broadcast %110 : vector<1x32xf32> to vector<8x32xf32>
    %112 = arith.addf %108, %111 : vector<8x32xf32>
    %113 = arith.truncf %96 : vector<8x32xf32> to vector<8x32xbf16>
    %114 = arith.truncf %104 : vector<8x32xf32> to vector<8x32xbf16>
    %cst_75 = arith.constant dense<0.000000e+00> : vector<8x8xf32>
    %115 = tpu.matmul %113, %114, %cst_75 {dimension_numbers = #tpu.dot_dimension_numbers<[1], [1], [0], [0], [0, 0, 1, 0], [], []>} : vector<8x32xbf16>, vector<8x32xbf16>, vector<8x8xf32> -> vector<8x8xf32>
    %116 = arith.addf %115, %7 : vector<8x8xf32>
    %cst_76 = arith.constant dense<0xFF800000> : vector<8xf32>
    %117 = vector.multi_reduction <maximumf>, %116, %cst_76 [1] : vector<8x8xf32> to vector<8xf32>
    %118 = vector.shape_cast %117 : vector<8xf32> to vector<8x1xf32>
    %119 = vector.broadcast %118 : vector<8x1xf32> to vector<8x8xf32>
    %120 = arith.subf %116, %119 : vector<8x8xf32>
    %121 = math.exp %120 : vector<8x8xf32>
    %cst_77 = arith.constant dense<0.000000e+00> : vector<8xf32>
    %122 = vector.multi_reduction <add>, %121, %cst_77 [1] : vector<8x8xf32> to vector<8xf32>
    %123 = vector.shape_cast %122 : vector<8xf32> to vector<8x1xf32>
    %124 = tpu.reciprocal %123 {approx = true} : vector<8x1xf32> -> vector<8x1xf32>
    %125 = vector.broadcast %124 : vector<8x1xf32> to vector<8x8xf32>
    %126 = arith.mulf %121, %125 : vector<8x8xf32>
    %127 = arith.truncf %112 : vector<8x32xf32> to vector<8x32xbf16>
    %128 = arith.truncf %126 : vector<8x8xf32> to vector<8x8xbf16>
    %cst_78 = arith.constant dense<0.000000e+00> : vector<8x32xf32>
    %129 = tpu.matmul %128, %127, %cst_78 {dimension_numbers = #tpu.dot_dimension_numbers<[1], [0], [0], [1], [0, 0, 1, 1], [], []>} : vector<8x8xbf16>, vector<8x32xbf16>, vector<8x32xf32> -> vector<8x32xf32>
    %c0_79 = arith.constant 0 : index
    %c7 = arith.constant 7 : index
    %c0_80 = arith.constant 0 : index
    %c0_81 = arith.constant 0 : index
    %130 = vector.load %arg2[%c0_79, %c7, %c0_80, %c0_81] : memref<2x8x32x32xbf16, #tpu.memory_space<vmem>>, vector<1x1x32x32xbf16>
    %131 = vector.shape_cast %130 : vector<1x1x32x32xbf16> to vector<32x32xbf16>
    %132 = arith.truncf %129 : vector<8x32xf32> to vector<8x32xbf16>
    %cst_82 = arith.constant dense<0.000000e+00> : vector<8x32xf32>
    %133 = tpu.matmul %132, %131, %cst_82 {dimension_numbers = #tpu.dot_dimension_numbers<[1], [0], [0], [1], [0, 0, 1, 1], [], []>} : vector<8x32xbf16>, vector<32x32xbf16>, vector<8x32xf32> -> vector<8x32xf32>
    %c0_83 = arith.constant 0 : index
    %c7_84 = arith.constant 7 : index
    %c0_85 = arith.constant 0 : index
    %134 = vector.load %arg5[%c0_83, %c7_84, %c0_85] : memref<2x15x32xf32, #tpu.memory_space<vmem>>, vector<1x1x32xf32>
    %135 = vector.shape_cast %134 : vector<1x1x32xf32> to vector<1x32xf32>
    %136 = vector.broadcast %135 : vector<1x32xf32> to vector<8x32xf32>
    %137 = arith.addf %133, %136 : vector<8x32xf32>
    %138 = arith.addf %88, %137 : vector<8x32xf32>
    %c0_86 = arith.constant 0 : index
    %c11 = arith.constant 11 : index
    %c0_87 = arith.constant 0 : index
    %139 = vector.load %arg5[%c0_86, %c11, %c0_87] : memref<2x15x32xf32, #tpu.memory_space<vmem>>, vector<1x1x32xf32>
    %140 = vector.shape_cast %139 : vector<1x1x32xf32> to vector<1x32xf32>
    %c0_88 = arith.constant 0 : index
    %c12 = arith.constant 12 : index
    %c0_89 = arith.constant 0 : index
    %141 = vector.load %arg5[%c0_88, %c12, %c0_89] : memref<2x15x32xf32, #tpu.memory_space<vmem>>, vector<1x1x32xf32>
    %142 = vector.shape_cast %141 : vector<1x1x32xf32> to vector<1x32xf32>
    %cst_90 = arith.constant dense<0.000000e+00> : vector<8xf32>
    %143 = vector.multi_reduction <add>, %138, %cst_90 [1] : vector<8x32xf32> to vector<8xf32>
    %144 = vector.shape_cast %143 : vector<8xf32> to vector<8x1xf32>
    %cst_91 = arith.constant 3.200000e+01 : f32
    %145 = vector.broadcast %cst_91 : f32 to vector<8x1xf32>
    %146 = arith.divf %144, %145 : vector<8x1xf32>
    %147 = vector.broadcast %146 : vector<8x1xf32> to vector<8x32xf32>
    %148 = arith.subf %138, %147 : vector<8x32xf32>
    %149 = arith.mulf %148, %148 : vector<8x32xf32>
    %cst_92 = arith.constant dense<0.000000e+00> : vector<8xf32>
    %150 = vector.multi_reduction <add>, %149, %cst_92 [1] : vector<8x32xf32> to vector<8xf32>
    %151 = vector.shape_cast %150 : vector<8xf32> to vector<8x1xf32>
    %cst_93 = arith.constant 3.200000e+01 : f32
    %152 = vector.broadcast %cst_93 : f32 to vector<8x1xf32>
    %153 = arith.divf %151, %152 : vector<8x1xf32>
    %154 = vector.broadcast %146 : vector<8x1xf32> to vector<8x32xf32>
    %155 = arith.subf %138, %154 : vector<8x32xf32>
    %cst_94 = arith.constant 9.99999974E-6 : f32
    %156 = vector.broadcast %cst_94 : f32 to vector<8x1xf32>
    %157 = arith.addf %153, %156 : vector<8x1xf32>
    %158 = math.rsqrt %157 : vector<8x1xf32>
    %159 = vector.broadcast %158 : vector<8x1xf32> to vector<8x32xf32>
    %160 = arith.mulf %155, %159 : vector<8x32xf32>
    %161 = vector.broadcast %140 : vector<1x32xf32> to vector<8x32xf32>
    %162 = arith.mulf %160, %161 : vector<8x32xf32>
    %163 = vector.broadcast %142 : vector<1x32xf32> to vector<8x32xf32>
    %164 = arith.addf %162, %163 : vector<8x32xf32>
    %165 = arith.truncf %164 : vector<8x32xf32> to vector<8x32xbf16>
    %cst_95 = arith.constant dense<0.000000e+00> : vector<8x64xf32>
    %166 = tpu.matmul %165, %9, %cst_95 {dimension_numbers = #tpu.dot_dimension_numbers<[1], [0], [0], [1], [0, 0, 1, 1], [], []>} : vector<8x32xbf16>, vector<32x64xbf16>, vector<8x64xf32> -> vector<8x64xf32>
    %167 = vector.broadcast %11 : vector<1x64xf32> to vector<8x64xf32>
    %168 = arith.addf %166, %167 : vector<8x64xf32>
    %cst_96 = arith.constant 0.000000e+00 : f32
    %169 = vector.broadcast %cst_96 : f32 to vector<8x64xf32>
    %170 = arith.maximumf %168, %169 : vector<8x64xf32>
    %171 = arith.truncf %170 : vector<8x64xf32> to vector<8x64xbf16>
    %cst_97 = arith.constant dense<0.000000e+00> : vector<8x32xf32>
    %172 = tpu.matmul %171, %13, %cst_97 {dimension_numbers = #tpu.dot_dimension_numbers<[1], [0], [0], [1], [0, 0, 1, 1], [], []>} : vector<8x64xbf16>, vector<64x32xbf16>, vector<8x32xf32> -> vector<8x32xf32>
    %c0_98 = arith.constant 0 : index
    %c8 = arith.constant 8 : index
    %c0_99 = arith.constant 0 : index
    %173 = vector.load %arg5[%c0_98, %c8, %c0_99] : memref<2x15x32xf32, #tpu.memory_space<vmem>>, vector<1x1x32xf32>
    %174 = vector.shape_cast %173 : vector<1x1x32xf32> to vector<1x32xf32>
    %175 = vector.broadcast %174 : vector<1x32xf32> to vector<8x32xf32>
    %176 = arith.addf %172, %175 : vector<8x32xf32>
    %177 = arith.addf %164, %176 : vector<8x32xf32>
    %c0_100 = arith.constant 0 : index
    %c13 = arith.constant 13 : index
    %c0_101 = arith.constant 0 : index
    %178 = vector.load %arg5[%c0_100, %c13, %c0_101] : memref<2x15x32xf32, #tpu.memory_space<vmem>>, vector<1x1x32xf32>
    %179 = vector.shape_cast %178 : vector<1x1x32xf32> to vector<1x32xf32>
    %c0_102 = arith.constant 0 : index
    %c14 = arith.constant 14 : index
    %c0_103 = arith.constant 0 : index
    %180 = vector.load %arg5[%c0_102, %c14, %c0_103] : memref<2x15x32xf32, #tpu.memory_space<vmem>>, vector<1x1x32xf32>
    %181 = vector.shape_cast %180 : vector<1x1x32xf32> to vector<1x32xf32>
    %cst_104 = arith.constant dense<0.000000e+00> : vector<8xf32>
    %182 = vector.multi_reduction <add>, %177, %cst_104 [1] : vector<8x32xf32> to vector<8xf32>
    %183 = vector.shape_cast %182 : vector<8xf32> to vector<8x1xf32>
    %cst_105 = arith.constant 3.200000e+01 : f32
    %184 = vector.broadcast %cst_105 : f32 to vector<8x1xf32>
    %185 = arith.divf %183, %184 : vector<8x1xf32>
    %186 = vector.broadcast %185 : vector<8x1xf32> to vector<8x32xf32>
    %187 = arith.subf %177, %186 : vector<8x32xf32>
    %188 = arith.mulf %187, %187 : vector<8x32xf32>
    %cst_106 = arith.constant dense<0.000000e+00> : vector<8xf32>
    %189 = vector.multi_reduction <add>, %188, %cst_106 [1] : vector<8x32xf32> to vector<8xf32>
    %190 = vector.shape_cast %189 : vector<8xf32> to vector<8x1xf32>
    %cst_107 = arith.constant 3.200000e+01 : f32
    %191 = vector.broadcast %cst_107 : f32 to vector<8x1xf32>
    %192 = arith.divf %190, %191 : vector<8x1xf32>
    %193 = vector.broadcast %185 : vector<8x1xf32> to vector<8x32xf32>
    %194 = arith.subf %177, %193 : vector<8x32xf32>
    %cst_108 = arith.constant 9.99999974E-6 : f32
    %195 = vector.broadcast %cst_108 : f32 to vector<8x1xf32>
    %196 = arith.addf %192, %195 : vector<8x1xf32>
    %197 = math.rsqrt %196 : vector<8x1xf32>
    %198 = vector.broadcast %197 : vector<8x1xf32> to vector<8x32xf32>
    %199 = arith.mulf %194, %198 : vector<8x32xf32>
    %200 = vector.broadcast %179 : vector<1x32xf32> to vector<8x32xf32>
    %201 = arith.mulf %199, %200 : vector<8x32xf32>
    %202 = vector.broadcast %181 : vector<1x32xf32> to vector<8x32xf32>
    %203 = arith.addf %201, %202 : vector<8x32xf32>
    %c1_109 = arith.constant 1 : index
    %c0_110 = arith.constant 0 : index
    %c0_111 = arith.constant 0 : index
    %204 = vector.load %arg3[%c1_109, %c0_110, %c0_111] : memref<2x32x64xbf16, #tpu.memory_space<vmem>>, vector<1x32x64xbf16>
    %205 = vector.shape_cast %204 : vector<1x32x64xbf16> to vector<32x64xbf16>
    %c1_112 = arith.constant 1 : index
    %c0_113 = arith.constant 0 : index
    %c0_114 = arith.constant 0 : index
    %206 = vector.load %arg6[%c1_112, %c0_113, %c0_114] : memref<2x1x64xf32, #tpu.memory_space<vmem>>, vector<1x1x64xf32>
    %207 = vector.shape_cast %206 : vector<1x1x64xf32> to vector<1x64xf32>
    %c1_115 = arith.constant 1 : index
    %c0_116 = arith.constant 0 : index
    %c0_117 = arith.constant 0 : index
    %208 = vector.load %arg4[%c1_115, %c0_116, %c0_117] : memref<2x64x32xbf16, #tpu.memory_space<vmem>>, vector<1x64x32xbf16>
    %209 = vector.shape_cast %208 : vector<1x64x32xbf16> to vector<64x32xbf16>
    %c1_118 = arith.constant 1 : index
    %c0_119 = arith.constant 0 : index
    %c0_120 = arith.constant 0 : index
    %c0_121 = arith.constant 0 : index
    %210 = vector.load %arg2[%c1_118, %c0_119, %c0_120, %c0_121] : memref<2x8x32x32xbf16, #tpu.memory_space<vmem>>, vector<1x1x32x32xbf16>
    %211 = vector.shape_cast %210 : vector<1x1x32x32xbf16> to vector<32x32xbf16>
    %212 = arith.truncf %203 : vector<8x32xf32> to vector<8x32xbf16>
    %cst_122 = arith.constant dense<0.000000e+00> : vector<8x32xf32>
    %213 = tpu.matmul %212, %211, %cst_122 {dimension_numbers = #tpu.dot_dimension_numbers<[1], [0], [0], [1], [0, 0, 1, 1], [], []>} : vector<8x32xbf16>, vector<32x32xbf16>, vector<8x32xf32> -> vector<8x32xf32>
    %c1_123 = arith.constant 1 : index
    %c0_124 = arith.constant 0 : index
    %c0_125 = arith.constant 0 : index
    %214 = vector.load %arg5[%c1_123, %c0_124, %c0_125] : memref<2x15x32xf32, #tpu.memory_space<vmem>>, vector<1x1x32xf32>
    %215 = vector.shape_cast %214 : vector<1x1x32xf32> to vector<1x32xf32>
    %216 = vector.broadcast %215 : vector<1x32xf32> to vector<8x32xf32>
    %217 = arith.addf %213, %216 : vector<8x32xf32>
    %c1_126 = arith.constant 1 : index
    %c1_127 = arith.constant 1 : index
    %c0_128 = arith.constant 0 : index
    %c0_129 = arith.constant 0 : index
    %218 = vector.load %arg2[%c1_126, %c1_127, %c0_128, %c0_129] : memref<2x8x32x32xbf16, #tpu.memory_space<vmem>>, vector<1x1x32x32xbf16>
    %219 = vector.shape_cast %218 : vector<1x1x32x32xbf16> to vector<32x32xbf16>
    %220 = arith.truncf %203 : vector<8x32xf32> to vector<8x32xbf16>
    %cst_130 = arith.constant dense<0.000000e+00> : vector<8x32xf32>
    %221 = tpu.matmul %220, %219, %cst_130 {dimension_numbers = #tpu.dot_dimension_numbers<[1], [0], [0], [1], [0, 0, 1, 1], [], []>} : vector<8x32xbf16>, vector<32x32xbf16>, vector<8x32xf32> -> vector<8x32xf32>
    %c1_131 = arith.constant 1 : index
    %c1_132 = arith.constant 1 : index
    %c0_133 = arith.constant 0 : index
    %222 = vector.load %arg5[%c1_131, %c1_132, %c0_133] : memref<2x15x32xf32, #tpu.memory_space<vmem>>, vector<1x1x32xf32>
    %223 = vector.shape_cast %222 : vector<1x1x32xf32> to vector<1x32xf32>
    %224 = vector.broadcast %223 : vector<1x32xf32> to vector<8x32xf32>
    %225 = arith.addf %221, %224 : vector<8x32xf32>
    %c1_134 = arith.constant 1 : index
    %c2_135 = arith.constant 2 : index
    %c0_136 = arith.constant 0 : index
    %c0_137 = arith.constant 0 : index
    %226 = vector.load %arg2[%c1_134, %c2_135, %c0_136, %c0_137] : memref<2x8x32x32xbf16, #tpu.memory_space<vmem>>, vector<1x1x32x32xbf16>
    %227 = vector.shape_cast %226 : vector<1x1x32x32xbf16> to vector<32x32xbf16>
    %228 = arith.truncf %203 : vector<8x32xf32> to vector<8x32xbf16>
    %cst_138 = arith.constant dense<0.000000e+00> : vector<8x32xf32>
    %229 = tpu.matmul %228, %227, %cst_138 {dimension_numbers = #tpu.dot_dimension_numbers<[1], [0], [0], [1], [0, 0, 1, 1], [], []>} : vector<8x32xbf16>, vector<32x32xbf16>, vector<8x32xf32> -> vector<8x32xf32>
    %c1_139 = arith.constant 1 : index
    %c2_140 = arith.constant 2 : index
    %c0_141 = arith.constant 0 : index
    %230 = vector.load %arg5[%c1_139, %c2_140, %c0_141] : memref<2x15x32xf32, #tpu.memory_space<vmem>>, vector<1x1x32xf32>
    %231 = vector.shape_cast %230 : vector<1x1x32xf32> to vector<1x32xf32>
    %232 = vector.broadcast %231 : vector<1x32xf32> to vector<8x32xf32>
    %233 = arith.addf %229, %232 : vector<8x32xf32>
    %234 = arith.truncf %217 : vector<8x32xf32> to vector<8x32xbf16>
    %235 = arith.truncf %225 : vector<8x32xf32> to vector<8x32xbf16>
    %cst_142 = arith.constant dense<0.000000e+00> : vector<8x8xf32>
    %236 = tpu.matmul %234, %235, %cst_142 {dimension_numbers = #tpu.dot_dimension_numbers<[1], [1], [0], [0], [0, 0, 1, 0], [], []>} : vector<8x32xbf16>, vector<8x32xbf16>, vector<8x8xf32> -> vector<8x8xf32>
    %cst_143 = arith.constant dense<0xFF800000> : vector<8xf32>
    %237 = vector.multi_reduction <maximumf>, %236, %cst_143 [1] : vector<8x8xf32> to vector<8xf32>
    %238 = vector.shape_cast %237 : vector<8xf32> to vector<8x1xf32>
    %239 = vector.broadcast %238 : vector<8x1xf32> to vector<8x8xf32>
    %240 = arith.subf %236, %239 : vector<8x8xf32>
    %241 = math.exp %240 : vector<8x8xf32>
    %cst_144 = arith.constant dense<0.000000e+00> : vector<8xf32>
    %242 = vector.multi_reduction <add>, %241, %cst_144 [1] : vector<8x8xf32> to vector<8xf32>
    %243 = vector.shape_cast %242 : vector<8xf32> to vector<8x1xf32>
    %244 = tpu.reciprocal %243 {approx = true} : vector<8x1xf32> -> vector<8x1xf32>
    %245 = vector.broadcast %244 : vector<8x1xf32> to vector<8x8xf32>
    %246 = arith.mulf %241, %245 : vector<8x8xf32>
    %247 = arith.truncf %233 : vector<8x32xf32> to vector<8x32xbf16>
    %248 = arith.truncf %246 : vector<8x8xf32> to vector<8x8xbf16>
    %cst_145 = arith.constant dense<0.000000e+00> : vector<8x32xf32>
    %249 = tpu.matmul %248, %247, %cst_145 {dimension_numbers = #tpu.dot_dimension_numbers<[1], [0], [0], [1], [0, 0, 1, 1], [], []>} : vector<8x8xbf16>, vector<8x32xbf16>, vector<8x32xf32> -> vector<8x32xf32>
    %c1_146 = arith.constant 1 : index
    %c3_147 = arith.constant 3 : index
    %c0_148 = arith.constant 0 : index
    %c0_149 = arith.constant 0 : index
    %250 = vector.load %arg2[%c1_146, %c3_147, %c0_148, %c0_149] : memref<2x8x32x32xbf16, #tpu.memory_space<vmem>>, vector<1x1x32x32xbf16>
    %251 = vector.shape_cast %250 : vector<1x1x32x32xbf16> to vector<32x32xbf16>
    %252 = arith.truncf %249 : vector<8x32xf32> to vector<8x32xbf16>
    %cst_150 = arith.constant dense<0.000000e+00> : vector<8x32xf32>
    %253 = tpu.matmul %252, %251, %cst_150 {dimension_numbers = #tpu.dot_dimension_numbers<[1], [0], [0], [1], [0, 0, 1, 1], [], []>} : vector<8x32xbf16>, vector<32x32xbf16>, vector<8x32xf32> -> vector<8x32xf32>
    %c1_151 = arith.constant 1 : index
    %c3_152 = arith.constant 3 : index
    %c0_153 = arith.constant 0 : index
    %254 = vector.load %arg5[%c1_151, %c3_152, %c0_153] : memref<2x15x32xf32, #tpu.memory_space<vmem>>, vector<1x1x32xf32>
    %255 = vector.shape_cast %254 : vector<1x1x32xf32> to vector<1x32xf32>
    %256 = vector.broadcast %255 : vector<1x32xf32> to vector<8x32xf32>
    %257 = arith.addf %253, %256 : vector<8x32xf32>
    %258 = arith.addf %203, %257 : vector<8x32xf32>
    %c1_154 = arith.constant 1 : index
    %c9_155 = arith.constant 9 : index
    %c0_156 = arith.constant 0 : index
    %259 = vector.load %arg5[%c1_154, %c9_155, %c0_156] : memref<2x15x32xf32, #tpu.memory_space<vmem>>, vector<1x1x32xf32>
    %260 = vector.shape_cast %259 : vector<1x1x32xf32> to vector<1x32xf32>
    %c1_157 = arith.constant 1 : index
    %c10_158 = arith.constant 10 : index
    %c0_159 = arith.constant 0 : index
    %261 = vector.load %arg5[%c1_157, %c10_158, %c0_159] : memref<2x15x32xf32, #tpu.memory_space<vmem>>, vector<1x1x32xf32>
    %262 = vector.shape_cast %261 : vector<1x1x32xf32> to vector<1x32xf32>
    %cst_160 = arith.constant dense<0.000000e+00> : vector<8xf32>
    %263 = vector.multi_reduction <add>, %258, %cst_160 [1] : vector<8x32xf32> to vector<8xf32>
    %264 = vector.shape_cast %263 : vector<8xf32> to vector<8x1xf32>
    %cst_161 = arith.constant 3.200000e+01 : f32
    %265 = vector.broadcast %cst_161 : f32 to vector<8x1xf32>
    %266 = arith.divf %264, %265 : vector<8x1xf32>
    %267 = vector.broadcast %266 : vector<8x1xf32> to vector<8x32xf32>
    %268 = arith.subf %258, %267 : vector<8x32xf32>
    %269 = arith.mulf %268, %268 : vector<8x32xf32>
    %cst_162 = arith.constant dense<0.000000e+00> : vector<8xf32>
    %270 = vector.multi_reduction <add>, %269, %cst_162 [1] : vector<8x32xf32> to vector<8xf32>
    %271 = vector.shape_cast %270 : vector<8xf32> to vector<8x1xf32>
    %cst_163 = arith.constant 3.200000e+01 : f32
    %272 = vector.broadcast %cst_163 : f32 to vector<8x1xf32>
    %273 = arith.divf %271, %272 : vector<8x1xf32>
    %274 = vector.broadcast %266 : vector<8x1xf32> to vector<8x32xf32>
    %275 = arith.subf %258, %274 : vector<8x32xf32>
    %cst_164 = arith.constant 9.99999974E-6 : f32
    %276 = vector.broadcast %cst_164 : f32 to vector<8x1xf32>
    %277 = arith.addf %273, %276 : vector<8x1xf32>
    %278 = math.rsqrt %277 : vector<8x1xf32>
    %279 = vector.broadcast %278 : vector<8x1xf32> to vector<8x32xf32>
    %280 = arith.mulf %275, %279 : vector<8x32xf32>
    %281 = vector.broadcast %260 : vector<1x32xf32> to vector<8x32xf32>
    %282 = arith.mulf %280, %281 : vector<8x32xf32>
    %283 = vector.broadcast %262 : vector<1x32xf32> to vector<8x32xf32>
    %284 = arith.addf %282, %283 : vector<8x32xf32>
    %c1_165 = arith.constant 1 : index
    %c4_166 = arith.constant 4 : index
    %c0_167 = arith.constant 0 : index
    %c0_168 = arith.constant 0 : index
    %285 = vector.load %arg2[%c1_165, %c4_166, %c0_167, %c0_168] : memref<2x8x32x32xbf16, #tpu.memory_space<vmem>>, vector<1x1x32x32xbf16>
    %286 = vector.shape_cast %285 : vector<1x1x32x32xbf16> to vector<32x32xbf16>
    %287 = arith.truncf %284 : vector<8x32xf32> to vector<8x32xbf16>
    %cst_169 = arith.constant dense<0.000000e+00> : vector<8x32xf32>
    %288 = tpu.matmul %287, %286, %cst_169 {dimension_numbers = #tpu.dot_dimension_numbers<[1], [0], [0], [1], [0, 0, 1, 1], [], []>} : vector<8x32xbf16>, vector<32x32xbf16>, vector<8x32xf32> -> vector<8x32xf32>
    %c1_170 = arith.constant 1 : index
    %c4_171 = arith.constant 4 : index
    %c0_172 = arith.constant 0 : index
    %289 = vector.load %arg5[%c1_170, %c4_171, %c0_172] : memref<2x15x32xf32, #tpu.memory_space<vmem>>, vector<1x1x32xf32>
    %290 = vector.shape_cast %289 : vector<1x1x32xf32> to vector<1x32xf32>
    %291 = vector.broadcast %290 : vector<1x32xf32> to vector<8x32xf32>
    %292 = arith.addf %288, %291 : vector<8x32xf32>
    %c1_173 = arith.constant 1 : index
    %c5_174 = arith.constant 5 : index
    %c0_175 = arith.constant 0 : index
    %c0_176 = arith.constant 0 : index
    %293 = vector.load %arg2[%c1_173, %c5_174, %c0_175, %c0_176] : memref<2x8x32x32xbf16, #tpu.memory_space<vmem>>, vector<1x1x32x32xbf16>
    %294 = vector.shape_cast %293 : vector<1x1x32x32xbf16> to vector<32x32xbf16>
    %295 = arith.truncf %203 : vector<8x32xf32> to vector<8x32xbf16>
    %cst_177 = arith.constant dense<0.000000e+00> : vector<8x32xf32>
    %296 = tpu.matmul %295, %294, %cst_177 {dimension_numbers = #tpu.dot_dimension_numbers<[1], [0], [0], [1], [0, 0, 1, 1], [], []>} : vector<8x32xbf16>, vector<32x32xbf16>, vector<8x32xf32> -> vector<8x32xf32>
    %c1_178 = arith.constant 1 : index
    %c5_179 = arith.constant 5 : index
    %c0_180 = arith.constant 0 : index
    %297 = vector.load %arg5[%c1_178, %c5_179, %c0_180] : memref<2x15x32xf32, #tpu.memory_space<vmem>>, vector<1x1x32xf32>
    %298 = vector.shape_cast %297 : vector<1x1x32xf32> to vector<1x32xf32>
    %299 = vector.broadcast %298 : vector<1x32xf32> to vector<8x32xf32>
    %300 = arith.addf %296, %299 : vector<8x32xf32>
    %c1_181 = arith.constant 1 : index
    %c6_182 = arith.constant 6 : index
    %c0_183 = arith.constant 0 : index
    %c0_184 = arith.constant 0 : index
    %301 = vector.load %arg2[%c1_181, %c6_182, %c0_183, %c0_184] : memref<2x8x32x32xbf16, #tpu.memory_space<vmem>>, vector<1x1x32x32xbf16>
    %302 = vector.shape_cast %301 : vector<1x1x32x32xbf16> to vector<32x32xbf16>
    %303 = arith.truncf %203 : vector<8x32xf32> to vector<8x32xbf16>
    %cst_185 = arith.constant dense<0.000000e+00> : vector<8x32xf32>
    %304 = tpu.matmul %303, %302, %cst_185 {dimension_numbers = #tpu.dot_dimension_numbers<[1], [0], [0], [1], [0, 0, 1, 1], [], []>} : vector<8x32xbf16>, vector<32x32xbf16>, vector<8x32xf32> -> vector<8x32xf32>
    %c1_186 = arith.constant 1 : index
    %c6_187 = arith.constant 6 : index
    %c0_188 = arith.constant 0 : index
    %305 = vector.load %arg5[%c1_186, %c6_187, %c0_188] : memref<2x15x32xf32, #tpu.memory_space<vmem>>, vector<1x1x32xf32>
    %306 = vector.shape_cast %305 : vector<1x1x32xf32> to vector<1x32xf32>
    %307 = vector.broadcast %306 : vector<1x32xf32> to vector<8x32xf32>
    %308 = arith.addf %304, %307 : vector<8x32xf32>
    %309 = arith.truncf %292 : vector<8x32xf32> to vector<8x32xbf16>
    %310 = arith.truncf %300 : vector<8x32xf32> to vector<8x32xbf16>
    %cst_189 = arith.constant dense<0.000000e+00> : vector<8x8xf32>
    %311 = tpu.matmul %309, %310, %cst_189 {dimension_numbers = #tpu.dot_dimension_numbers<[1], [1], [0], [0], [0, 0, 1, 0], [], []>} : vector<8x32xbf16>, vector<8x32xbf16>, vector<8x8xf32> -> vector<8x8xf32>
    %312 = arith.addf %311, %7 : vector<8x8xf32>
    %cst_190 = arith.constant dense<0xFF800000> : vector<8xf32>
    %313 = vector.multi_reduction <maximumf>, %312, %cst_190 [1] : vector<8x8xf32> to vector<8xf32>
    %314 = vector.shape_cast %313 : vector<8xf32> to vector<8x1xf32>
    %315 = vector.broadcast %314 : vector<8x1xf32> to vector<8x8xf32>
    %316 = arith.subf %312, %315 : vector<8x8xf32>
    %317 = math.exp %316 : vector<8x8xf32>
    %cst_191 = arith.constant dense<0.000000e+00> : vector<8xf32>
    %318 = vector.multi_reduction <add>, %317, %cst_191 [1] : vector<8x8xf32> to vector<8xf32>
    %319 = vector.shape_cast %318 : vector<8xf32> to vector<8x1xf32>
    %320 = tpu.reciprocal %319 {approx = true} : vector<8x1xf32> -> vector<8x1xf32>
    %321 = vector.broadcast %320 : vector<8x1xf32> to vector<8x8xf32>
    %322 = arith.mulf %317, %321 : vector<8x8xf32>
    %323 = arith.truncf %308 : vector<8x32xf32> to vector<8x32xbf16>
    %324 = arith.truncf %322 : vector<8x8xf32> to vector<8x8xbf16>
    %cst_192 = arith.constant dense<0.000000e+00> : vector<8x32xf32>
    %325 = tpu.matmul %324, %323, %cst_192 {dimension_numbers = #tpu.dot_dimension_numbers<[1], [0], [0], [1], [0, 0, 1, 1], [], []>} : vector<8x8xbf16>, vector<8x32xbf16>, vector<8x32xf32> -> vector<8x32xf32>
    %c1_193 = arith.constant 1 : index
    %c7_194 = arith.constant 7 : index
    %c0_195 = arith.constant 0 : index
    %c0_196 = arith.constant 0 : index
    %326 = vector.load %arg2[%c1_193, %c7_194, %c0_195, %c0_196] : memref<2x8x32x32xbf16, #tpu.memory_space<vmem>>, vector<1x1x32x32xbf16>
    %327 = vector.shape_cast %326 : vector<1x1x32x32xbf16> to vector<32x32xbf16>
    %328 = arith.truncf %325 : vector<8x32xf32> to vector<8x32xbf16>
    %cst_197 = arith.constant dense<0.000000e+00> : vector<8x32xf32>
    %329 = tpu.matmul %328, %327, %cst_197 {dimension_numbers = #tpu.dot_dimension_numbers<[1], [0], [0], [1], [0, 0, 1, 1], [], []>} : vector<8x32xbf16>, vector<32x32xbf16>, vector<8x32xf32> -> vector<8x32xf32>
    %c1_198 = arith.constant 1 : index
    %c7_199 = arith.constant 7 : index
    %c0_200 = arith.constant 0 : index
    %330 = vector.load %arg5[%c1_198, %c7_199, %c0_200] : memref<2x15x32xf32, #tpu.memory_space<vmem>>, vector<1x1x32xf32>
    %331 = vector.shape_cast %330 : vector<1x1x32xf32> to vector<1x32xf32>
    %332 = vector.broadcast %331 : vector<1x32xf32> to vector<8x32xf32>
    %333 = arith.addf %329, %332 : vector<8x32xf32>
    %334 = arith.addf %284, %333 : vector<8x32xf32>
    %c1_201 = arith.constant 1 : index
    %c11_202 = arith.constant 11 : index
    %c0_203 = arith.constant 0 : index
    %335 = vector.load %arg5[%c1_201, %c11_202, %c0_203] : memref<2x15x32xf32, #tpu.memory_space<vmem>>, vector<1x1x32xf32>
    %336 = vector.shape_cast %335 : vector<1x1x32xf32> to vector<1x32xf32>
    %c1_204 = arith.constant 1 : index
    %c12_205 = arith.constant 12 : index
    %c0_206 = arith.constant 0 : index
    %337 = vector.load %arg5[%c1_204, %c12_205, %c0_206] : memref<2x15x32xf32, #tpu.memory_space<vmem>>, vector<1x1x32xf32>
    %338 = vector.shape_cast %337 : vector<1x1x32xf32> to vector<1x32xf32>
    %cst_207 = arith.constant dense<0.000000e+00> : vector<8xf32>
    %339 = vector.multi_reduction <add>, %334, %cst_207 [1] : vector<8x32xf32> to vector<8xf32>
    %340 = vector.shape_cast %339 : vector<8xf32> to vector<8x1xf32>
    %cst_208 = arith.constant 3.200000e+01 : f32
    %341 = vector.broadcast %cst_208 : f32 to vector<8x1xf32>
    %342 = arith.divf %340, %341 : vector<8x1xf32>
    %343 = vector.broadcast %342 : vector<8x1xf32> to vector<8x32xf32>
    %344 = arith.subf %334, %343 : vector<8x32xf32>
    %345 = arith.mulf %344, %344 : vector<8x32xf32>
    %cst_209 = arith.constant dense<0.000000e+00> : vector<8xf32>
    %346 = vector.multi_reduction <add>, %345, %cst_209 [1] : vector<8x32xf32> to vector<8xf32>
    %347 = vector.shape_cast %346 : vector<8xf32> to vector<8x1xf32>
    %cst_210 = arith.constant 3.200000e+01 : f32
    %348 = vector.broadcast %cst_210 : f32 to vector<8x1xf32>
    %349 = arith.divf %347, %348 : vector<8x1xf32>
    %350 = vector.broadcast %342 : vector<8x1xf32> to vector<8x32xf32>
    %351 = arith.subf %334, %350 : vector<8x32xf32>
    %cst_211 = arith.constant 9.99999974E-6 : f32
    %352 = vector.broadcast %cst_211 : f32 to vector<8x1xf32>
    %353 = arith.addf %349, %352 : vector<8x1xf32>
    %354 = math.rsqrt %353 : vector<8x1xf32>
    %355 = vector.broadcast %354 : vector<8x1xf32> to vector<8x32xf32>
    %356 = arith.mulf %351, %355 : vector<8x32xf32>
    %357 = vector.broadcast %336 : vector<1x32xf32> to vector<8x32xf32>
    %358 = arith.mulf %356, %357 : vector<8x32xf32>
    %359 = vector.broadcast %338 : vector<1x32xf32> to vector<8x32xf32>
    %360 = arith.addf %358, %359 : vector<8x32xf32>
    %361 = arith.truncf %360 : vector<8x32xf32> to vector<8x32xbf16>
    %cst_212 = arith.constant dense<0.000000e+00> : vector<8x64xf32>
    %362 = tpu.matmul %361, %205, %cst_212 {dimension_numbers = #tpu.dot_dimension_numbers<[1], [0], [0], [1], [0, 0, 1, 1], [], []>} : vector<8x32xbf16>, vector<32x64xbf16>, vector<8x64xf32> -> vector<8x64xf32>
    %363 = vector.broadcast %207 : vector<1x64xf32> to vector<8x64xf32>
    %364 = arith.addf %362, %363 : vector<8x64xf32>
    %cst_213 = arith.constant 0.000000e+00 : f32
    %365 = vector.broadcast %cst_213 : f32 to vector<8x64xf32>
    %366 = arith.maximumf %364, %365 : vector<8x64xf32>
    %367 = arith.truncf %366 : vector<8x64xf32> to vector<8x64xbf16>
    %cst_214 = arith.constant dense<0.000000e+00> : vector<8x32xf32>
    %368 = tpu.matmul %367, %209, %cst_214 {dimension_numbers = #tpu.dot_dimension_numbers<[1], [0], [0], [1], [0, 0, 1, 1], [], []>} : vector<8x64xbf16>, vector<64x32xbf16>, vector<8x32xf32> -> vector<8x32xf32>
    %c1_215 = arith.constant 1 : index
    %c8_216 = arith.constant 8 : index
    %c0_217 = arith.constant 0 : index
    %369 = vector.load %arg5[%c1_215, %c8_216, %c0_217] : memref<2x15x32xf32, #tpu.memory_space<vmem>>, vector<1x1x32xf32>
    %370 = vector.shape_cast %369 : vector<1x1x32xf32> to vector<1x32xf32>
    %371 = vector.broadcast %370 : vector<1x32xf32> to vector<8x32xf32>
    %372 = arith.addf %368, %371 : vector<8x32xf32>
    %373 = arith.addf %360, %372 : vector<8x32xf32>
    %c1_218 = arith.constant 1 : index
    %c13_219 = arith.constant 13 : index
    %c0_220 = arith.constant 0 : index
    %374 = vector.load %arg5[%c1_218, %c13_219, %c0_220] : memref<2x15x32xf32, #tpu.memory_space<vmem>>, vector<1x1x32xf32>
    %375 = vector.shape_cast %374 : vector<1x1x32xf32> to vector<1x32xf32>
    %c1_221 = arith.constant 1 : index
    %c14_222 = arith.constant 14 : index
    %c0_223 = arith.constant 0 : index
    %376 = vector.load %arg5[%c1_221, %c14_222, %c0_223] : memref<2x15x32xf32, #tpu.memory_space<vmem>>, vector<1x1x32xf32>
    %377 = vector.shape_cast %376 : vector<1x1x32xf32> to vector<1x32xf32>
    %cst_224 = arith.constant dense<0.000000e+00> : vector<8xf32>
    %378 = vector.multi_reduction <add>, %373, %cst_224 [1] : vector<8x32xf32> to vector<8xf32>
    %379 = vector.shape_cast %378 : vector<8xf32> to vector<8x1xf32>
    %cst_225 = arith.constant 3.200000e+01 : f32
    %380 = vector.broadcast %cst_225 : f32 to vector<8x1xf32>
    %381 = arith.divf %379, %380 : vector<8x1xf32>
    %382 = vector.broadcast %381 : vector<8x1xf32> to vector<8x32xf32>
    %383 = arith.subf %373, %382 : vector<8x32xf32>
    %384 = arith.mulf %383, %383 : vector<8x32xf32>
    %cst_226 = arith.constant dense<0.000000e+00> : vector<8xf32>
    %385 = vector.multi_reduction <add>, %384, %cst_226 [1] : vector<8x32xf32> to vector<8xf32>
    %386 = vector.shape_cast %385 : vector<8xf32> to vector<8x1xf32>
    %cst_227 = arith.constant 3.200000e+01 : f32
    %387 = vector.broadcast %cst_227 : f32 to vector<8x1xf32>
    %388 = arith.divf %386, %387 : vector<8x1xf32>
    %389 = vector.broadcast %381 : vector<8x1xf32> to vector<8x32xf32>
    %390 = arith.subf %373, %389 : vector<8x32xf32>
    %cst_228 = arith.constant 9.99999974E-6 : f32
    %391 = vector.broadcast %cst_228 : f32 to vector<8x1xf32>
    %392 = arith.addf %388, %391 : vector<8x1xf32>
    %393 = math.rsqrt %392 : vector<8x1xf32>
    %394 = vector.broadcast %393 : vector<8x1xf32> to vector<8x32xf32>
    %395 = arith.mulf %390, %394 : vector<8x32xf32>
    %396 = vector.broadcast %375 : vector<1x32xf32> to vector<8x32xf32>
    %397 = arith.mulf %395, %396 : vector<8x32xf32>
    %398 = vector.broadcast %377 : vector<1x32xf32> to vector<8x32xf32>
    %399 = arith.addf %397, %398 : vector<8x32xf32>
    %c0_229 = arith.constant 0 : index
    %c0_230 = arith.constant 0 : index
    %c0_231 = arith.constant 0 : index
    %400 = vector.load %arg7[%c0_229, %c0_230, %c0_231] : memref<1x8x32xf32, #tpu.memory_space<vmem>>, vector<1x8x32xf32>
    %401 = vector.shape_cast %400 : vector<1x8x32xf32> to vector<8x32xf32>
    %402 = vector.shape_cast %399 : vector<8x32xf32> to vector<1x8x32xf32>
    tpu.vector_store %arg7[%c0_229, %c0_230, %c0_231], %402 {strides = array<i32>} : memref<1x8x32xf32, #tpu.memory_space<vmem>>, vector<1x8x32xf32>,
    return
  }
  func.func @transform_0(%arg0: i32) -> (i32, i32, i32) {
    %c0_i32 = arith.constant 0 : i32
    %c0_i32_0 = arith.constant 0 : i32
    %c0_i32_1 = arith.constant 0 : i32
    return %arg0, %c0_i32, %c0_i32_0 : i32, i32, i32
  }
  func.func @transform_1(%arg0: i32) -> (i32, i32, i32, i32) {
    %c0_i32 = arith.constant 0 : i32
    %c0_i32_0 = arith.constant 0 : i32
    %c0_i32_1 = arith.constant 0 : i32
    %c0_i32_2 = arith.constant 0 : i32
    %c0_i32_3 = arith.constant 0 : i32
    return %c0_i32, %c0_i32_0, %c0_i32_1, %c0_i32_2 : i32, i32, i32, i32
  }
  func.func @transform_2(%arg0: i32) -> (i32, i32, i32) {
    %c0_i32 = arith.constant 0 : i32
    %c0_i32_0 = arith.constant 0 : i32
    %c0_i32_1 = arith.constant 0 : i32
    %c0_i32_2 = arith.constant 0 : i32
    return %c0_i32, %c0_i32_0, %c0_i32_1 : i32, i32, i32
  }
  func.func @transform_3(%arg0: i32) -> (i32, i32, i32) {
    %c0_i32 = arith.constant 0 : i32
    %c0_i32_0 = arith.constant 0 : i32
    %c0_i32_1 = arith.constant 0 : i32
    %c0_i32_2 = arith.constant 0 : i32
    return %c0_i32, %c0_i32_0, %c0_i32_1 : i32, i32, i32
  }
  func.func @transform_4(%arg0: i32) -> (i32, i32, i32) {
    %c0_i32 = arith.constant 0 : i32
    %c0_i32_0 = arith.constant 0 : i32
    %c0_i32_1 = arith.constant 0 : i32
    %c0_i32_2 = arith.constant 0 : i32
    return %c0_i32, %c0_i32_0, %c0_i32_1 : i32, i32, i32
  }
  func.func @transform_5(%arg0: i32) -> (i32, i32, i32) {
    %c0_i32 = arith.constant 0 : i32
    %c0_i32_0 = arith.constant 0 : i32
    %c0_i32_1 = arith.constant 0 : i32
    %c0_i32_2 = arith.constant 0 : i32
    return %c0_i32, %c0_i32_0, %c0_i32_1 : i32, i32, i32
  }
  func.func @transform_6(%arg0: i32) -> (i32, i32, i32) {
    %c0_i32 = arith.constant 0 : i32
    %c0_i32_0 = arith.constant 0 : i32
    %c0_i32_1 = arith.constant 0 : i32
    return %arg0, %c0_i32, %c0_i32_0 : i32, i32, i32
  }
}

</mosaic_0001>

<llo_original>
// kernel: tpu_custom_call.1
$region0: #{tpu_custom_call.1}
  #allocation0 [shape = 'u32[]', space=smem, size = 0x4, offset = 0x4, fixed_abs, tag = 'smem constant byte address 0x4 - core index']
  #allocation1 [shape = 'u32[144,128]{1,0:T(1,128)}', space=vmem, size = 0x12000, scoped, tag = 'internal scratch']
  %s0 = inlined_call_operand.vmem [shape: f32[2,8,32], index: 0, kind: input, shape index: {}]
  %s1 = inlined_call_operand.hbm [shape: bf16[2,8,32,32], index: 1, kind: input, shape index: {}]
  %s2 = inlined_call_operand.vmem [shape: bf16[2,32,64], index: 2, kind: input, shape index: {}]
  %s3 = inlined_call_operand.vmem [shape: bf16[2,64,32], index: 3, kind: input, shape index: {}]
  %s4 = inlined_call_operand.vmem [shape: f32[2,15,32], index: 4, kind: input, shape index: {}]
  %s5 = inlined_call_operand.vmem [shape: f32[2,1,64], index: 5, kind: input, shape index: {}]
  %s6 = inlined_call_operand.hbm [shape: f32[2,8,32], index: 6, kind: output, shape index: {}]
  %s7 = sld [smem:[#allocation0]]
  $region61: #{tpu_custom_call.1} parent=0
    _
  %s9 = ssub.s32 1, %s7
  %s10 = scalar_select 0, %s9, %s7
  $region1: #{tpu_custom_call.1} parent=0
    #allocation2 [shape = 'u8[131072]{0}', space=vmem, size = 0x20000, scoped, tag = 'input window, operand 1, single buffered']
    #allocation3 [shape = 's32[2]{0}', space=sflag, size = 0x8, scoped, tag = 'scoped memory for tpu_custom_call.1']
    #allocation4 [shape = 's32[2]{0}', space=sflag, size = 0x8, scoped, tag = 'scoped memory for tpu_custom_call.1']
    #allocation5 [shape = 'u8[8192]{0}', space=vmem, size = 0x2000, scoped, tag = 'output window, operand 0']
    %11 = vsyncpa [#allocation3], 0
    %12 = vsyncpa [#allocation4], 0
    %s13 = scalar_lea.sflag [#allocation4], 1
    %14 = vsyncpa %s13, 0
    loop: start=0, step=1, limit=4
    $region2: #{tpu_custom_call.1} parent=1 // loop_pre_header
      _
    $region3: #{tpu_custom_call.1} parent=1 // loop_header
      %s16 = sphi 0, %s20
      %p17 = scmp.ge.s32.totalorder %s16, 4
      %s26 = sphi 0, %s28
      %s29 = sphi 0, %s26
      %s30 = sphi 0, %s29
      %s46 = sphi 0, %s30
      %s50 = sphi 0, %s50
      %s52 = sphi 0, %s50
      %s53 = sphi 0, %s52
      %s67 = sphi 0, %s53
      %s71 = sphi 0, %s71
      %s73 = sphi 0, %s71
      %s74 = sphi 0, %s73
      %s88 = sphi 0, %s74
      %s92 = sphi 0, %s92
      %s94 = sphi 0, %s92
      %s95 = sphi 0, %s94
      %s109 = sphi 0, %s95
      %s113 = sphi 0, %s113
      %s115 = sphi 0, %s113
      %s116 = sphi 0, %s115
      %s130 = sphi 0, %s116
      %s134 = sphi 0, %s134
      %s136 = sphi 0, %s134
      %s137 = sphi 0, %s136
      %s151 = sphi 0, %s137
      %s157 = sphi 0, %s159
      %s160 = sphi 0, %s157
      %s161 = sphi 0, %s160
      %s177 = sphi 0, %s161
    $region4: #{tpu_custom_call.1} parent=1 // loop_header_branch
      %19 = sbr.rel (%p17) target = $region8
    $region5: #{tpu_custom_call.1} parent=1 // loop_body
      %s21 = ssub.s32 %s16, 1
      %s22 = ssub.s32 %s16, 2
      %s23 = sadd.s32 %s16, 1
      %s24 = ssub.s32 %s16, %s23
      %p25 = scmp.eq.s32.totalorder %s24, 0
      %s27 = sadd.s32 %s26, 1
      %s28 = scalar_select %p25, %s26, %s27
      %p31 = pneg %p25
      %p32 = scmp.eq.s32.totalorder %s16, 1
      %p33 = por %p31, %p32
      %p34 = scmp.ne.s32.totalorder %s26, %s29
      %p35 = scmp.eq.s32.totalorder %s16, 0
      %p36 = por %p34, %p35
      %p37 = scmp.ne.s32.totalorder %s26, %s29
      %p38 = scmp.eq.s32.totalorder %s21, 1
      %p39 = por %p37, %p38
      %p40 = scmp.ne.s32.totalorder %s29, %s30
      %p41 = scmp.eq.s32.totalorder %s21, 0
      %p42 = por %p40, %p41
      %p43 = scmp.ne.s32.totalorder %s29, %s30
      %p44 = scmp.eq.s32.totalorder %s22, 1
      %p45 = por %p43, %p44
      %p47 = scmp.ne.s32.totalorder %s30, %s46
      %p48 = scmp.eq.s32.totalorder %s22, 0
      %p49 = por %p47, %p48
      %s51 = sadd.s32 %s50, 1
      %p54 = scmp.eq.s32.totalorder %s16, 1
      %p55 = scmp.ne.s32.totalorder %s50, %s52
      %p56 = scmp.eq.s32.totalorder %s16, 0
      %p57 = por %p55, %p56
      %p58 = scmp.ne.s32.totalorder %s50, %s52
      %p59 = scmp.eq.s32.totalorder %s21, 1
      %p60 = por %p58, %p59
      %p61 = scmp.ne.s32.totalorder %s52, %s53
      %p62 = scmp.eq.s32.totalorder %s21, 0
      %p63 = por %p61, %p62
      %p64 = scmp.ne.s32.totalorder %s52, %s53
      %p65 = scmp.eq.s32.totalorder %s22, 1
      %p66 = por %p64, %p65
      %p68 = scmp.ne.s32.totalorder %s53, %s67
      %p69 = scmp.eq.s32.totalorder %s22, 0
      %p70 = por %p68, %p69
      %s72 = sadd.s32 %s71, 1
      %p75 = scmp.eq.s32.totalorder %s16, 1
      %p76 = scmp.ne.s32.totalorder %s71, %s73
      %p77 = scmp.eq.s32.totalorder %s16, 0
      %p78 = por %p76, %p77
      %p79 = scmp.ne.s32.totalorder %s71, %s73
      %p80 = scmp.eq.s32.totalorder %s21, 1
      %p81 = por %p79, %p80
      %p82 = scmp.ne.s32.totalorder %s73, %s74
      %p83 = scmp.eq.s32.totalorder %s21, 0
      %p84 = por %p82, %p83
      %p85 = scmp.ne.s32.totalorder %s73, %s74
      %p86 = scmp.eq.s32.totalorder %s22, 1
      %p87 = por %p85, %p86
      %p89 = scmp.ne.s32.totalorder %s74, %s88
      %p90 = scmp.eq.s32.totalorder %s22, 0
      %p91 = por %p89, %p90
      %s93 = sadd.s32 %s92, 1
      %p96 = scmp.eq.s32.totalorder %s16, 1
      %p97 = scmp.ne.s32.totalorder %s92, %s94
      %p98 = scmp.eq.s32.totalorder %s16, 0
      %p99 = por %p97, %p98
      %p100 = scmp.ne.s32.totalorder %s92, %s94
      %p101 = scmp.eq.s32.totalorder %s21, 1
      %p102 = por %p100, %p101
      %p103 = scmp.ne.s32.totalorder %s94, %s95
      %p104 = scmp.eq.s32.totalorder %s21, 0
      %p105 = por %p103, %p104
      %p106 = scmp.ne.s32.totalorder %s94, %s95
      %p107 = scmp.eq.s32.totalorder %s22, 1
      %p108 = por %p106, %p107
      %p110 = scmp.ne.s32.totalorder %s95, %s109
      %p111 = scmp.eq.s32.totalorder %s22, 0
      %p112 = por %p110, %p111
      %s114 = sadd.s32 %s113, 1
      %p117 = scmp.eq.s32.totalorder %s16, 1
      %p118 = scmp.ne.s32.totalorder %s113, %s115
      %p119 = scmp.eq.s32.totalorder %s16, 0
      %p120 = por %p118, %p119
      %p121 = scmp.ne.s32.totalorder %s113, %s115
      %p122 = scmp.eq.s32.totalorder %s21, 1
      %p123 = por %p121, %p122
      %p124 = scmp.ne.s32.totalorder %s115, %s116
      %p125 = scmp.eq.s32.totalorder %s21, 0
      %p126 = por %p124, %p125
      %p127 = scmp.ne.s32.totalorder %s115, %s116
      %p128 = scmp.eq.s32.totalorder %s22, 1
      %p129 = por %p127, %p128
      %p131 = scmp.ne.s32.totalorder %s116, %s130
      %p132 = scmp.eq.s32.totalorder %s22, 0
      %p133 = por %p131, %p132
      %s135 = sadd.s32 %s134, 1
      %p138 = scmp.eq.s32.totalorder %s16, 1
      %p139 = scmp.ne.s32.totalorder %s134, %s136
      %p140 = scmp.eq.s32.totalorder %s16, 0
      %p141 = por %p139, %p140
      %p142 = scmp.ne.s32.totalorder %s134, %s136
      %p143 = scmp.eq.s32.totalorder %s21, 1
      %p144 = por %p142, %p143
      %p145 = scmp.ne.s32.totalorder %s136, %s137
      %p146 = scmp.eq.s32.totalorder %s21, 0
      %p147 = por %p145, %p146
      %p148 = scmp.ne.s32.totalorder %s136, %s137
      %p149 = scmp.eq.s32.totalorder %s22, 1
      %p150 = por %p148, %p149
      %p152 = scmp.ne.s32.totalorder %s137, %s151
      %p153 = scmp.eq.s32.totalorder %s22, 0
      %p154 = por %p152, %p153
      %s155 = ssub.s32 %s16, %s23
      %p156 = scmp.eq.s32.totalorder %s155, 0
      %s158 = sadd.s32 %s157, 1
      %s159 = scalar_select %p156, %s157, %s158
      %p162 = pneg %p156
      %p163 = scmp.eq.s32.totalorder %s16, 1
      %p164 = por %p162, %p163
      %p165 = scmp.ne.s32.totalorder %s157, %s160
      %p166 = scmp.eq.s32.totalorder %s16, 0
      %p167 = por %p165, %p166
      %p168 = scmp.ne.s32.totalorder %s157, %s160
      %p169 = scmp.eq.s32.totalorder %s21, 1
      %p170 = por %p168, %p169
      %p171 = scmp.ne.s32.totalorder %s160, %s161
      %p172 = scmp.eq.s32.totalorder %s21, 0
      %p173 = por %p171, %p172
      %p174 = scmp.ne.s32.totalorder %s160, %s161
      %p175 = scmp.eq.s32.totalorder %s22, 1
      %p176 = por %p174, %p175
      %p178 = scmp.ne.s32.totalorder %s161, %s177
      %p179 = scmp.eq.s32.totalorder %s22, 0
      %p180 = por %p178, %p179
      %p181 = scmp.le.s32.totalorder 1, %s16
      %p182 = scmp.lt.s32.totalorder %s16, 3
      %p183 = pnand %p181, %p182
      %p184 = pneg %p183
      // Predicated region
      $region9: #{tpu_custom_call.1} parent=5 // pred_check
        _
      $region10: #{tpu_custom_call.1} parent=5 // pred_check_branch
        %186 = sbr.rel (%p183) target = $region12
      $region11: #{tpu_custom_call.1} parent=5 // pred_region
        %s187 = ssub.s32 %s16, 1
        // Predicated region
        $region13: #{tpu_custom_call.1} parent=11 // pred_check
          %p188 = pneg %p63
        $region14: #{tpu_custom_call.1} parent=11 // pred_check_branch
          %190 = sbr.rel (%p188) target = $region16
        $region15: #{tpu_custom_call.1} parent=11 // pred_region
          %s192 = ssub.s32 4096, 4096
          %193 = vsyncadd [#allocation3], %s192
          %s194 = sshll.u32 [#allocation2], 4
          %s195 = int_to_ptr.vmem [resolvable:$true] %s194
          %200 = dma.hbm_to_vmem [thread:$0]  %s1, 4096, %s195, [#allocation3], 64, 64, 4
        $region16: #{tpu_custom_call.1} parent=11 // pred_fallthru
          _
        // Predicated region
        $region17: #{tpu_custom_call.1} parent=11 // pred_check
          %p201 = pneg %p84
        $region18: #{tpu_custom_call.1} parent=11 // pred_check_branch
          %203 = sbr.rel (%p201) target = $region20
        $region19: #{tpu_custom_call.1} parent=11 // pred_region
          _
        $region20: #{tpu_custom_call.1} parent=11 // pred_fallthru
          _
        // Predicated region
        $region21: #{tpu_custom_call.1} parent=11 // pred_check
          %p204 = pneg %p105
        $region22: #{tpu_custom_call.1} parent=11 // pred_check_branch
          %206 = sbr.rel (%p204) target = $region24
        $region23: #{tpu_custom_call.1} parent=11 // pred_region
          _
        $region24: #{tpu_custom_call.1} parent=11 // pred_fallthru
          _
        // Predicated region
        $region25: #{tpu_custom_call.1} parent=11 // pred_check
          %p207 = pneg %p126
        $region26: #{tpu_custom_call.1} parent=11 // pred_check_branch
          %209 = sbr.rel (%p207) target = $region28
        $region27: #{tpu_custom_call.1} parent=11 // pred_region
          _
        $region28: #{tpu_custom_call.1} parent=11 // pred_fallthru
          _
        // Predicated region
        $region29: #{tpu_custom_call.1} parent=11 // pred_check
          %p210 = pneg %p147
        $region30: #{tpu_custom_call.1} parent=11 // pred_check_branch
          %212 = sbr.rel (%p210) target = $region32
        $region31: #{tpu_custom_call.1} parent=11 // pred_region
          _
        $region32: #{tpu_custom_call.1} parent=11 // pred_fallthru
          _
      $region12: #{tpu_custom_call.1} parent=5 // pred_fallthru
        _
      %p213 = scmp.lt.s32.totalorder %s16, 2
      // Predicated region
      $region33: #{tpu_custom_call.1} parent=5 // pred_check
        %p214 = pneg %p213
      $region34: #{tpu_custom_call.1} parent=5 // pred_check_branch
        %216 = sbr.rel (%p214) target = $region36
      $region35: #{tpu_custom_call.1} parent=5 // pred_region
        // Predicated region
        $region37: #{tpu_custom_call.1} parent=35 // pred_check
          %p217 = pneg %p36
        $region38: #{tpu_custom_call.1} parent=35 // pred_check_branch
          %219 = sbr.rel (%p217) target = $region40
        $region39: #{tpu_custom_call.1} parent=35 // pred_region
          %p220 = scmp.lt.s32.totalorder %s16, 1
          %s221 = scalar_select %p220, %s16, 1
          %s222 = smul.addr %s221, 8
          %s223 = scalar_lea.vmem %s0, %s222
        $region40: #{tpu_custom_call.1} parent=35 // pred_fallthru
          _
      $region36: #{tpu_custom_call.1} parent=5 // pred_fallthru
        _
      %p224 = scmp.le.s32.totalorder 1, %s16
      %p225 = scmp.lt.s32.totalorder %s16, 3
      %p226 = pnand %p224, %p225
      %p227 = pneg %p226
      // Predicated region
      $region41: #{tpu_custom_call.1} parent=5 // pred_check
        _
      $region42: #{tpu_custom_call.1} parent=5 // pred_check_branch
        %229 = sbr.rel (%p226) target = $region44
      $region43: #{tpu_custom_call.1} parent=5 // pred_region
        %s230 = ssub.s32 %s16, 1
        // Predicated region
        $region45: #{tpu_custom_call.1} parent=43 // pred_check
          %p231 = pneg %p63
        $region46: #{tpu_custom_call.1} parent=43 // pred_check_branch
          %233 = sbr.rel (%p231) target = $region48
        $region47: #{tpu_custom_call.1} parent=43 // pred_region
          %234 = dma.done [#allocation3], 4096
        $region48: #{tpu_custom_call.1} parent=43 // pred_fallthru
          _
        %p235 = scmp.lt.s32.totalorder %s21, 1
        %s236 = scalar_select %p235, %s21, 1
        %s237 = smul.addr %s236, 8
        %s238 = scalar_lea.vmem %s0, %s237
        %p239 = pneg %p42
        %p240 = pneg %p39
        %p241 = pneg %p63
        %p242 = pneg %p60
        %p243 = pneg %p84
        %p244 = pneg %p81
        %p245 = pneg %p105
        %p246 = pneg %p102
        %p247 = pneg %p126
        %p248 = pneg %p123
        %p249 = pneg %p147
        %p250 = pneg %p144
        %p251 = pneg %p173
        %p252 = pneg %p170
        %s253 = sand.u32 %s160, 1
        %s254 = scalar_lea.sflag [#allocation4], %s253
        %s255 = sand.u32 %s160, 1
        %s256 = smul.addr %s255, 8
        %s257 = scalar_lea.vmem [#allocation5], %s256
        %p258 = scmp.lt.s32.totalorder %s21, 1
        %s259 = scalar_select %p258, %s21, 1
        %s260 = smul.addr %s259, 8
        %s261 = scalar_lea.vmem %s0, %s260
        %v263 = vld [vmem:[%s261] sm:$0xff]
        %v264 = vlaneseq
        %v265 = vshrl.u32 %v264, 7
        %v266 = vlaneseq
        %v267 = vand.u32 %v266, 127
        %vm268 = vcmp.gt.s32.totalorder %v267, %v265
        %v269 = vsel %vm268, -1e+30, 0.0
        %v270 = vld [vmem:[%s2] sm:$0xf]
        %v271 = vld [vmem:[%s2 + $0x4] sm:$0xf]
        %v272 = vld [vmem:[%s2 + $0x8] sm:$0xf]
        %v273 = vld [vmem:[%s2 + $0xc] sm:$0xf]
        %v274 = vld [vmem:[%s5] sm:$0x1]
        %v275 = vld [vmem:[%s3] sm:$0xf]
        %v276 = vld [vmem:[%s3 + $0x4] sm:$0xf]
        %v277 = vld [vmem:[%s3 + $0x8] sm:$0xf]
        %v278 = vld [vmem:[%s3 + $0xc] sm:$0xf]
        %v279 = vld [vmem:[%s3 + $0x10] sm:$0xf]
        %v280 = vld [vmem:[%s3 + $0x14] sm:$0xf]
        %v281 = vld [vmem:[%s3 + $0x18] sm:$0xf]
        %v282 = vld [vmem:[%s3 + $0x1c] sm:$0xf]
        %v283 = vld [vmem:[#allocation2] sm:$0xf]
        %v284 = vld [vmem:[#allocation2 + $0x4] sm:$0xf]
        %v285 = vld [vmem:[#allocation2 + $0x8] sm:$0xf]
        %v286 = vld [vmem:[#allocation2 + $0xc] sm:$0xf]
        %v287 = vpack.c.bf16 %v263, %v263
        %v288 = vld [vmem:[%s4] sm:$0x1]
        %v289 = vlaneseq
        %v290 = vshrl.u32 %v289, 7
        %v291 = vsub.s32 0, %v290
        %v292 = vrot.slane %v288, %v291
        %v297 = vunpack.c.l.b16 %v283
        %v298 = vunpack.c.l.b16 %v284
        %v299 = vunpack.c.l.b16 %v285
        %v300 = vunpack.c.l.b16 %v286
        %v301 = vpack.c.b16 %v298, %v297
        %v302 = vpack.c.b16 %v300, %v299
        %vm305 = vcmask 261120
        %v307 = vsel %vm305, %v287, 0
        %309 = vmatprep.subr.bf16.mxu0 0
        %310 = vmatpush1.bf16.msra.mxu0 0
        %311 = vmatprep.subr.bf16.mxu0 0
        %312 = vmatpush1.bf16.msra.mxu0 0
        %313 = vmatprep.subr.bf16.mxu0 0
        %314 = vmatpush1.bf16.msra.mxu0 0
        %315 = vmatprep.subr.bf16.mxu0 0
        %316 = vmatpush1.bf16.msra.mxu0 0
        %317 = vmatprep.subr.bf16.mxu0 0
        %318 = vmatpush1.bf16.msra.mxu0 0
        %319 = vmatprep.subr.bf16.mxu0 0
        %320 = vmatpush1.bf16.msra.mxu0 0
        %321 = vmatprep.subr.bf16.mxu0 0
        %322 = vmatpush1.bf16.msra.mxu0 %v302
        %323 = vmatprep.subr.bf16.mxu0 0
        %324 = vmatpush1.bf16.msra.mxu0 %v301
        %325 = vmatprep.subr.bf16.mxu0 0
        %326 = vmatpush2.bf16.msra.mxu0 0
        %327 = vmatprep.subr.bf16.mxu0 0
        %328 = vmatpush2.bf16.msra.mxu0 0
        %329 = vmatprep.subr.bf16.mxu0 0
        %330 = vmatpush2.bf16.msra.mxu0 0
        %331 = vmatprep.subr.bf16.mxu0 0
        %332 = vmatpush2.bf16.msra.mxu0 0
        %333 = vmatprep.subr.bf16.mxu0 0
        %334 = vmatpush2.bf16.msra.mxu0 0
        %335 = vmatprep.subr.bf16.mxu0 0
        %336 = vmatpush2.bf16.msra.mxu0 0
        %337 = vmatprep.subr.bf16.mxu0 0
        %338 = vmatpush2.bf16.msra.mxu0 0
        %339 = vmatprep.subr.bf16.mxu0 0
        %340 = vmatpush2.bf16.msra.mxu0 0
        %341 = vmatprep.mubr.bf16.mxu0 0
        %342 = vmatmul.mubr.bf16.gmra.mxu0 %v307
        %v343 = vpop.f32.mrf.mxu0
        %v344 = vadd.f32 %v292, %v343
        %v345 = vpop.f32.mrf.mxu0
        %v346 = vpop.f32.mrf.mxu0
        %v347 = vpop.f32.mrf.mxu0
        %348 = vdwg.mxu0
        %s349 = scalar_lea.vmem [#allocation2], 16
        %v350 = vld [vmem:[%s349] sm:$0xf]
        %v351 = vld [vmem:[%s349 + $0x4] sm:$0xf]
        %v352 = vld [vmem:[%s349 + $0x8] sm:$0xf]
        %v353 = vld [vmem:[%s349 + $0xc] sm:$0xf]
        %v354 = vld [vmem:[%s4 + $0x1] sm:$0x1]
        %v355 = vlaneseq
        %v356 = vshrl.u32 %v355, 7
        %v357 = vsub.s32 0, %v356
        %v358 = vrot.slane %v354, %v357
        %v363 = vunpack.c.l.b16 %v350
        %v364 = vunpack.c.l.b16 %v351
        %v365 = vunpack.c.l.b16 %v352
        %v366 = vunpack.c.l.b16 %v353
        %v367 = vpack.c.b16 %v364, %v363
        %v368 = vpack.c.b16 %v366, %v365
        %371 = vmatprep.subr.bf16.mxu0 0
        %372 = vmatpush1.bf16.msra.mxu0 0
        %373 = vmatprep.subr.bf16.mxu0 0
        %374 = vmatpush1.bf16.msra.mxu0 0
        %375 = vmatprep.subr.bf16.mxu0 0
        %376 = vmatpush1.bf16.msra.mxu0 0
        %377 = vmatprep.subr.bf16.mxu0 0
        %378 = vmatpush1.bf16.msra.mxu0 0
        %379 = vmatprep.subr.bf16.mxu0 0
        %380 = vmatpush1.bf16.msra.mxu0 0
        %381 = vmatprep.subr.bf16.mxu0 0
        %382 = vmatpush1.bf16.msra.mxu0 0
        %383 = vmatprep.subr.bf16.mxu0 0
        %384 = vmatpush1.bf16.msra.mxu0 %v368
        %385 = vmatprep.subr.bf16.mxu0 0
        %386 = vmatpush1.bf16.msra.mxu0 %v367
        %387 = vmatprep.subr.bf16.mxu0 0
        %388 = vmatpush2.bf16.msra.mxu0 0
        %389 = vmatprep.subr.bf16.mxu0 0
        %390 = vmatpush2.bf16.msra.mxu0 0
        %391 = vmatprep.subr.bf16.mxu0 0
        %392 = vmatpush2.bf16.msra.mxu0 0
        %393 = vmatprep.subr.bf16.mxu0 0
        %394 = vmatpush2.bf16.msra.mxu0 0
        %395 = vmatprep.subr.bf16.mxu0 0
        %396 = vmatpush2.bf16.msra.mxu0 0
        %397 = vmatprep.subr.bf16.mxu0 0
        %398 = vmatpush2.bf16.msra.mxu0 0
        %399 = vmatprep.subr.bf16.mxu0 0
        %400 = vmatpush2.bf16.msra.mxu0 0
        %401 = vmatprep.subr.bf16.mxu0 0
        %402 = vmatpush2.bf16.msra.mxu0 0
        %403 = vmatprep.mubr.bf16.mxu0 0
        %404 = vmatmul.mubr.bf16.gmra.mxu0 %v307
        %v405 = vpop.f32.mrf.mxu0
        %v406 = vadd.f32 %v358, %v405
        %v407 = vpop.f32.mrf.mxu0
        %v408 = vpop.f32.mrf.mxu0
        %v409 = vpop.f32.mrf.mxu0
        %410 = vdwg.mxu0
        %s411 = scalar_lea.vmem [#allocation2], 32
        %v412 = vld [vmem:[%s411] sm:$0xf]
        %v413 = vld [vmem:[%s411 + $0x4] sm:$0xf]
        %v414 = vld [vmem:[%s411 + $0x8] sm:$0xf]
        %v415 = vld [vmem:[%s411 + $0xc] sm:$0xf]
        %v416 = vld [vmem:[%s4 + $0x2] sm:$0x1]
        %v417 = vlaneseq
        %v418 = vshrl.u32 %v417, 7
        %v419 = vsub.s32 0, %v418
        %v420 = vrot.slane %v416, %v419
        %v425 = vunpack.c.l.b16 %v412
        %v426 = vunpack.c.l.b16 %v413
        %v427 = vunpack.c.l.b16 %v414
        %v428 = vunpack.c.l.b16 %v415
        %v429 = vpack.c.b16 %v426, %v425
        %v430 = vpack.c.b16 %v428, %v427
        %433 = vmatprep.subr.bf16.mxu0 0
        %434 = vmatpush1.bf16.msra.mxu0 0
        %435 = vmatprep.subr.bf16.mxu0 0
        %436 = vmatpush1.bf16.msra.mxu0 0
        %437 = vmatprep.subr.bf16.mxu0 0
        %438 = vmatpush1.bf16.msra.mxu0 0
        %439 = vmatprep.subr.bf16.mxu0 0
        %440 = vmatpush1.bf16.msra.mxu0 0
        %441 = vmatprep.subr.bf16.mxu0 0
        %442 = vmatpush1.bf16.msra.mxu0 0
        %443 = vmatprep.subr.bf16.mxu0 0
        %444 = vmatpush1.bf16.msra.mxu0 0
        %445 = vmatprep.subr.bf16.mxu0 0
        %446 = vmatpush1.bf16.msra.mxu0 %v430
        %447 = vmatprep.subr.bf16.mxu0 0
        %448 = vmatpush1.bf16.msra.mxu0 %v429
        %449 = vmatprep.subr.bf16.mxu0 0
        %450 = vmatpush2.bf16.msra.mxu0 0
        %451 = vmatprep.subr.bf16.mxu0 0
        %452 = vmatpush2.bf16.msra.mxu0 0
        %453 = vmatprep.subr.bf16.mxu0 0
        %454 = vmatpush2.bf16.msra.mxu0 0
        %455 = vmatprep.subr.bf16.mxu0 0
        %456 = vmatpush2.bf16.msra.mxu0 0
        %457 = vmatprep.subr.bf16.mxu0 0
        %458 = vmatpush2.bf16.msra.mxu0 0
        %459 = vmatprep.subr.bf16.mxu0 0
        %460 = vmatpush2.bf16.msra.mxu0 0
        %461 = vmatprep.subr.bf16.mxu0 0
        %462 = vmatpush2.bf16.msra.mxu0 0
        %463 = vmatprep.subr.bf16.mxu0 0
        %464 = vmatpush2.bf16.msra.mxu0 0
        %465 = vmatprep.mubr.bf16.mxu0 0
        %466 = vmatmul.mubr.bf16.gmra.mxu0 %v307
        %v467 = vpop.f32.mrf.mxu0
        %v468 = vadd.f32 %v420, %v467
        %v469 = vpop.f32.mrf.mxu0
        %v470 = vpop.f32.mrf.mxu0
        %v471 = vpop.f32.mrf.mxu0
        %472 = vdwg.mxu0
        %v473 = vpack.c.bf16 %v344, %v344
        %v474 = vpack.c.bf16 %v406, %v406
        %v476 = vsel %vm305, %v473, 0
        %v479 = vsel %vm305, %v474, 0
        %481 = vmatprep.subr.bf16.mxu0 0
        %482 = vmatpush1.bf16.xpose.msra.mxu0 0
        %483 = vmatprep.subr.bf16.mxu0 0
        %484 = vmatpush1.bf16.xpose.msra.mxu0 0
        %485 = vmatprep.subr.bf16.mxu0 0
        %486 = vmatpush1.bf16.xpose.msra.mxu0 0
        %487 = vmatprep.subr.bf16.mxu0 0
        %488 = vmatpush1.bf16.xpose.msra.mxu0 0
        %489 = vmatprep.subr.bf16.mxu0 0
        %490 = vmatpush1.bf16.xpose.msra.mxu0 0
        %491 = vmatprep.subr.bf16.mxu0 0
        %492 = vmatpush1.bf16.xpose.msra.mxu0 0
        %493 = vmatprep.subr.bf16.mxu0 0
        %494 = vmatpush1.bf16.xpose.msra.mxu0 0
        %495 = vmatprep.subr.bf16.mxu0 0
        %496 = vmatpush1.bf16.xpose.msra.mxu0 %v479
        %497 = vmatprep.subr.bf16.mxu0 0
        %498 = vmatpush2.bf16.xpose.msra.mxu0 0
        %499 = vmatprep.subr.bf16.mxu0 0
        %500 = vmatpush2.bf16.xpose.msra.mxu0 0
        %501 = vmatprep.subr.bf16.mxu0 0
        %502 = vmatpush2.bf16.xpose.msra.mxu0 0
        %503 = vmatprep.subr.bf16.mxu0 0
        %504 = vmatpush2.bf16.xpose.msra.mxu0 0
        %505 = vmatprep.subr.bf16.mxu0 0
        %506 = vmatpush2.bf16.xpose.msra.mxu0 0
        %507 = vmatprep.subr.bf16.mxu0 0
        %508 = vmatpush2.bf16.xpose.msra.mxu0 0
        %509 = vmatprep.subr.bf16.mxu0 0
        %510 = vmatpush2.bf16.xpose.msra.mxu0 0
        %511 = vmatprep.subr.bf16.mxu0 0
        %512 = vmatpush2.bf16.xpose.msra.mxu0 0
        %513 = vmatprep.mubr.bf16.mxu0 0
        %514 = vmatmul.mubr.bf16.gmra.mxu0 %v476
        %v515 = vpop.f32.mrf.mxu0
        %v516 = vadd.f32 0.0, %v515
        %v517 = vpop.f32.mrf.mxu0
        %v518 = vpop.f32.mrf.mxu0
        %v519 = vpop.f32.mrf.mxu0
        %520 = vdwg.mxu0
        %vm521 = vcmask 64512
        %v522 = vsel %vm521, %v516, -inf
        %523 = vmax.xlane.f32.xlu0 %v522
        %v524 = vpop.xlane.xlu0 %523
        %v525 = vsub.f32 %v516, %v524
        %v526 = vmul.f32 %v525, 1.442695
        %v527 = vpow.pop %v526
        %v528 = vsel %vm521, %v527, 0.0
        %529 = vadd.xlane.f32.xlu0 %v528
        %v530 = vpop.xlane.xlu0 %529
        %v531 = vrcp.pop %v530
        %v532 = vmul.f32 %v527, %v531
        %v533 = vpack.c.bf16 %v468, %v468
        %v534 = vpack.c.bf16 %v532, %v532
        %v536 = vsel %vm521, %v534, 0
        %vm538 = vcmask 1043456
        %v540 = vsel %vm538, %v533, 0
        %542 = vmatprep.subr.bf16.mxu0 0
        %543 = vmatpush1.bf16.msra.mxu0 0
        %544 = vmatprep.subr.bf16.mxu0 0
        %545 = vmatpush1.bf16.msra.mxu0 0
        %546 = vmatprep.subr.bf16.mxu0 0
        %547 = vmatpush1.bf16.msra.mxu0 0
        %548 = vmatprep.subr.bf16.mxu0 0
        %549 = vmatpush1.bf16.msra.mxu0 0
        %550 = vmatprep.subr.bf16.mxu0 0
        %551 = vmatpush1.bf16.msra.mxu0 0
        %552 = vmatprep.subr.bf16.mxu0 0
        %553 = vmatpush1.bf16.msra.mxu0 0
        %554 = vmatprep.subr.bf16.mxu0 0
        %555 = vmatpush1.bf16.msra.mxu0 0
        %556 = vmatprep.subr.bf16.mxu0 0
        %557 = vmatpush1.bf16.msra.mxu0 %v540
        %558 = vmatprep.subr.bf16.mxu0 0
        %559 = vmatpush2.bf16.msra.mxu0 0
        %560 = vmatprep.subr.bf16.mxu0 0
        %561 = vmatpush2.bf16.msra.mxu0 0
        %562 = vmatprep.subr.bf16.mxu0 0
        %563 = vmatpush2.bf16.msra.mxu0 0
        %564 = vmatprep.subr.bf16.mxu0 0
        %565 = vmatpush2.bf16.msra.mxu0 0
        %566 = vmatprep.subr.bf16.mxu0 0
        %567 = vmatpush2.bf16.msra.mxu0 0
        %568 = vmatprep.subr.bf16.mxu0 0
        %569 = vmatpush2.bf16.msra.mxu0 0
        %570 = vmatprep.subr.bf16.mxu0 0
        %571 = vmatpush2.bf16.msra.mxu0 0
        %572 = vmatprep.subr.bf16.mxu0 0
        %573 = vmatpush2.bf16.msra.mxu0 0
        %574 = vmatprep.mubr.bf16.mxu0 0
        %575 = vmatmul.mubr.bf16.gmra.mxu0 %v536
        %v576 = vpop.f32.mrf.mxu0
        %v577 = vadd.f32 0.0, %v576
        %v578 = vpop.f32.mrf.mxu0
        %v579 = vpop.f32.mrf.mxu0
        %v580 = vpop.f32.mrf.mxu0
        %581 = vdwg.mxu0
        %s582 = scalar_lea.vmem [#allocation2], 48
        %v583 = vld [vmem:[%s582] sm:$0xf]
        %v584 = vld [vmem:[%s582 + $0x4] sm:$0xf]
        %v585 = vld [vmem:[%s582 + $0x8] sm:$0xf]
        %v586 = vld [vmem:[%s582 + $0xc] sm:$0xf]
        %v587 = vpack.c.bf16 %v577, %v577
        %v588 = vld [vmem:[%s4 + $0x3] sm:$0x1]
        %v589 = vlaneseq
        %v590 = vshrl.u32 %v589, 7
        %v591 = vsub.s32 0, %v590
        %v592 = vrot.slane %v588, %v591
        %v597 = vunpack.c.l.b16 %v583
        %v598 = vunpack.c.l.b16 %v584
        %v599 = vunpack.c.l.b16 %v585
        %v600 = vunpack.c.l.b16 %v586
        %v601 = vpack.c.b16 %v598, %v597
        %v602 = vpack.c.b16 %v600, %v599
        %v606 = vsel %vm305, %v587, 0
        %608 = vmatprep.subr.bf16.mxu0 0
        %609 = vmatpush1.bf16.msra.mxu0 0
        %610 = vmatprep.subr.bf16.mxu0 0
        %611 = vmatpush1.bf16.msra.mxu0 0
        %612 = vmatprep.subr.bf16.mxu0 0
        %613 = vmatpush1.bf16.msra.mxu0 0
        %614 = vmatprep.subr.bf16.mxu0 0
        %615 = vmatpush1.bf16.msra.mxu0 0
        %616 = vmatprep.subr.bf16.mxu0 0
        %617 = vmatpush1.bf16.msra.mxu0 0
        %618 = vmatprep.subr.bf16.mxu0 0
        %619 = vmatpush1.bf16.msra.mxu0 0
        %620 = vmatprep.subr.bf16.mxu0 0
        %621 = vmatpush1.bf16.msra.mxu0 %v602
        %622 = vmatprep.subr.bf16.mxu0 0
        %623 = vmatpush1.bf16.msra.mxu0 %v601
        %624 = vmatprep.subr.bf16.mxu0 0
        %625 = vmatpush2.bf16.msra.mxu0 0
        %626 = vmatprep.subr.bf16.mxu0 0
        %627 = vmatpush2.bf16.msra.mxu0 0
        %628 = vmatprep.subr.bf16.mxu0 0
        %629 = vmatpush2.bf16.msra.mxu0 0
        %630 = vmatprep.subr.bf16.mxu0 0
        %631 = vmatpush2.bf16.msra.mxu0 0
        %632 = vmatprep.subr.bf16.mxu0 0
        %633 = vmatpush2.bf16.msra.mxu0 0
        %634 = vmatprep.subr.bf16.mxu0 0
        %635 = vmatpush2.bf16.msra.mxu0 0
        %636 = vmatprep.subr.bf16.mxu0 0
        %637 = vmatpush2.bf16.msra.mxu0 0
        %638 = vmatprep.subr.bf16.mxu0 0
        %639 = vmatpush2.bf16.msra.mxu0 0
        %640 = vmatprep.mubr.bf16.mxu0 0
        %641 = vmatmul.mubr.bf16.gmra.mxu0 %v606
        %v642 = vpop.f32.mrf.mxu0
        %v643 = vadd.f32 %v592, %v642
        %v644 = vpop.f32.mrf.mxu0
        %v645 = vpop.f32.mrf.mxu0
        %v646 = vpop.f32.mrf.mxu0
        %647 = vdwg.mxu0
        %v648 = vadd.f32 %v263, %v643
        %v649 = vld [vmem:[%s4 + $0x9] sm:$0x1]
        %v650 = vld [vmem:[%s4 + $0xa] sm:$0x1]
        %v651 = vsel %vm305, %v648, 0.0
        %652 = vadd.xlane.f32.xlu0 %v651
        %v653 = vpop.xlane.xlu0 %652
        %v654 = vrcp.pop 32.0
        %v655 = vmul.f32 %v653, %v654
        %v656 = vsub.f32 %v648, %v655
        %v657 = vmul.f32 %v656, %v656
        %v658 = vsel %vm305, %v657, 0.0
        %659 = vadd.xlane.f32.xlu0 %v658
        %v660 = vpop.xlane.xlu0 %659
        %v661 = vmul.f32 %v660, %v654
        %v662 = vadd.f32 %v661, 1e-05
        %v663 = vrsqrt.pop %v662
        %v664 = vmul.f32 %v656, %v663
        %v665 = vlaneseq
        %v666 = vshrl.u32 %v665, 7
        %v667 = vsub.s32 0, %v666
        %v668 = vrot.slane %v649, %v667
        %v669 = vmul.f32 %v664, %v668
        %v670 = vlaneseq
        %v671 = vshrl.u32 %v670, 7
        %v672 = vsub.s32 0, %v671
        %v673 = vrot.slane %v650, %v672
        %v674 = vadd.f32 %v669, %v673
        %s675 = scalar_lea.vmem [#allocation2], 64
        %v676 = vld [vmem:[%s675] sm:$0xf]
        %v677 = vld [vmem:[%s675 + $0x4] sm:$0xf]
        %v678 = vld [vmem:[%s675 + $0x8] sm:$0xf]
        %v679 = vld [vmem:[%s675 + $0xc] sm:$0xf]
        %v680 = vpack.c.bf16 %v674, %v674
        %v681 = vld [vmem:[%s4 + $0x4] sm:$0x1]
        %v682 = vlaneseq
        %v683 = vshrl.u32 %v682, 7
        %v684 = vsub.s32 0, %v683
        %v685 = vrot.slane %v681, %v684
        %v690 = vunpack.c.l.b16 %v676
        %v691 = vunpack.c.l.b16 %v677
        %v692 = vunpack.c.l.b16 %v678
        %v693 = vunpack.c.l.b16 %v679
        %v694 = vpack.c.b16 %v691, %v690
        %v695 = vpack.c.b16 %v693, %v692
        %v699 = vsel %vm305, %v680, 0
        %701 = vmatprep.subr.bf16.mxu0 0
        %702 = vmatpush1.bf16.msra.mxu0 0
        %703 = vmatprep.subr.bf16.mxu0 0
        %704 = vmatpush1.bf16.msra.mxu0 0
        %705 = vmatprep.subr.bf16.mxu0 0
        %706 = vmatpush1.bf16.msra.mxu0 0
        %707 = vmatprep.subr.bf16.mxu0 0
        %708 = vmatpush1.bf16.msra.mxu0 0
        %709 = vmatprep.subr.bf16.mxu0 0
        %710 = vmatpush1.bf16.msra.mxu0 0
        %711 = vmatprep.subr.bf16.mxu0 0
        %712 = vmatpush1.bf16.msra.mxu0 0
        %713 = vmatprep.subr.bf16.mxu0 0
        %714 = vmatpush1.bf16.msra.mxu0 %v695
        %715 = vmatprep.subr.bf16.mxu0 0
        %716 = vmatpush1.bf16.msra.mxu0 %v694
        %717 = vmatprep.subr.bf16.mxu0 0
        %718 = vmatpush2.bf16.msra.mxu0 0
        %719 = vmatprep.subr.bf16.mxu0 0
        %720 = vmatpush2.bf16.msra.mxu0 0
        %721 = vmatprep.subr.bf16.mxu0 0
        %722 = vmatpush2.bf16.msra.mxu0 0
        %723 = vmatprep.subr.bf16.mxu0 0
        %724 = vmatpush2.bf16.msra.mxu0 0
        %725 = vmatprep.subr.bf16.mxu0 0
        %726 = vmatpush2.bf16.msra.mxu0 0
        %727 = vmatprep.subr.bf16.mxu0 0
        %728 = vmatpush2.bf16.msra.mxu0 0
        %729 = vmatprep.subr.bf16.mxu0 0
        %730 = vmatpush2.bf16.msra.mxu0 0
        %731 = vmatprep.subr.bf16.mxu0 0
        %732 = vmatpush2.bf16.msra.mxu0 0
        %733 = vmatprep.mubr.bf16.mxu0 0
        %734 = vmatmul.mubr.bf16.gmra.mxu0 %v699
        %v735 = vpop.f32.mrf.mxu0
        %v736 = vadd.f32 %v685, %v735
        %v737 = vpop.f32.mrf.mxu0
        %v738 = vpop.f32.mrf.mxu0
        %v739 = vpop.f32.mrf.mxu0
        %740 = vdwg.mxu0
        %s741 = scalar_lea.vmem [#allocation2], 80
        %v742 = vld [vmem:[%s741] sm:$0xf]
        %v743 = vld [vmem:[%s741 + $0x4] sm:$0xf]
        %v744 = vld [vmem:[%s741 + $0x8] sm:$0xf]
        %v745 = vld [vmem:[%s741 + $0xc] sm:$0xf]
        %v746 = vld [vmem:[%s4 + $0x5] sm:$0x1]
        %v747 = vlaneseq
        %v748 = vshrl.u32 %v747, 7
        %v749 = vsub.s32 0, %v748
        %v750 = vrot.slane %v746, %v749
        %v755 = vunpack.c.l.b16 %v742
        %v756 = vunpack.c.l.b16 %v743
        %v757 = vunpack.c.l.b16 %v744
        %v758 = vunpack.c.l.b16 %v745
        %v759 = vpack.c.b16 %v756, %v755
        %v760 = vpack.c.b16 %v758, %v757
        %763 = vmatprep.subr.bf16.mxu0 0
        %764 = vmatpush1.bf16.msra.mxu0 0
        %765 = vmatprep.subr.bf16.mxu0 0
        %766 = vmatpush1.bf16.msra.mxu0 0
        %767 = vmatprep.subr.bf16.mxu0 0
        %768 = vmatpush1.bf16.msra.mxu0 0
        %769 = vmatprep.subr.bf16.mxu0 0
        %770 = vmatpush1.bf16.msra.mxu0 0
        %771 = vmatprep.subr.bf16.mxu0 0
        %772 = vmatpush1.bf16.msra.mxu0 0
        %773 = vmatprep.subr.bf16.mxu0 0
        %774 = vmatpush1.bf16.msra.mxu0 0
        %775 = vmatprep.subr.bf16.mxu0 0
        %776 = vmatpush1.bf16.msra.mxu0 %v760
        %777 = vmatprep.subr.bf16.mxu0 0
        %778 = vmatpush1.bf16.msra.mxu0 %v759
        %779 = vmatprep.subr.bf16.mxu0 0
        %780 = vmatpush2.bf16.msra.mxu0 0
        %781 = vmatprep.subr.bf16.mxu0 0
        %782 = vmatpush2.bf16.msra.mxu0 0
        %783 = vmatprep.subr.bf16.mxu0 0
        %784 = vmatpush2.bf16.msra.mxu0 0
        %785 = vmatprep.subr.bf16.mxu0 0
        %786 = vmatpush2.bf16.msra.mxu0 0
        %787 = vmatprep.subr.bf16.mxu0 0
        %788 = vmatpush2.bf16.msra.mxu0 0
        %789 = vmatprep.subr.bf16.mxu0 0
        %790 = vmatpush2.bf16.msra.mxu0 0
        %791 = vmatprep.subr.bf16.mxu0 0
        %792 = vmatpush2.bf16.msra.mxu0 0
        %793 = vmatprep.subr.bf16.mxu0 0
        %794 = vmatpush2.bf16.msra.mxu0 0
        %795 = vmatprep.mubr.bf16.mxu0 0
        %796 = vmatmul.mubr.bf16.gmra.mxu0 %v307
        %v797 = vpop.f32.mrf.mxu0
        %v798 = vadd.f32 %v750, %v797
        %v799 = vpop.f32.mrf.mxu0
        %v800 = vpop.f32.mrf.mxu0
        %v801 = vpop.f32.mrf.mxu0
        %802 = vdwg.mxu0
        %s803 = scalar_lea.vmem [#allocation2], 96
        %v804 = vld [vmem:[%s803] sm:$0xf]
        %v805 = vld [vmem:[%s803 + $0x4] sm:$0xf]
        %v806 = vld [vmem:[%s803 + $0x8] sm:$0xf]
        %v807 = vld [vmem:[%s803 + $0xc] sm:$0xf]
        %v808 = vld [vmem:[%s4 + $0x6] sm:$0x1]
        %v809 = vlaneseq
        %v810 = vshrl.u32 %v809, 7
        %v811 = vsub.s32 0, %v810
        %v812 = vrot.slane %v808, %v811
        %v817 = vunpack.c.l.b16 %v804
        %v818 = vunpack.c.l.b16 %v805
        %v819 = vunpack.c.l.b16 %v806
        %v820 = vunpack.c.l.b16 %v807
        %v821 = vpack.c.b16 %v818, %v817
        %v822 = vpack.c.b16 %v820, %v819
        %825 = vmatprep.subr.bf16.mxu0 0
        %826 = vmatpush1.bf16.msra.mxu0 0
        %827 = vmatprep.subr.bf16.mxu0 0
        %828 = vmatpush1.bf16.msra.mxu0 0
        %829 = vmatprep.subr.bf16.mxu0 0
        %830 = vmatpush1.bf16.msra.mxu0 0
        %831 = vmatprep.subr.bf16.mxu0 0
        %832 = vmatpush1.bf16.msra.mxu0 0
        %833 = vmatprep.subr.bf16.mxu0 0
        %834 = vmatpush1.bf16.msra.mxu0 0
        %835 = vmatprep.subr.bf16.mxu0 0
        %836 = vmatpush1.bf16.msra.mxu0 0
        %837 = vmatprep.subr.bf16.mxu0 0
        %838 = vmatpush1.bf16.msra.mxu0 %v822
        %839 = vmatprep.subr.bf16.mxu0 0
        %840 = vmatpush1.bf16.msra.mxu0 %v821
        %841 = vmatprep.subr.bf16.mxu0 0
        %842 = vmatpush2.bf16.msra.mxu0 0
        %843 = vmatprep.subr.bf16.mxu0 0
        %844 = vmatpush2.bf16.msra.mxu0 0
        %845 = vmatprep.subr.bf16.mxu0 0
        %846 = vmatpush2.bf16.msra.mxu0 0
        %847 = vmatprep.subr.bf16.mxu0 0
        %848 = vmatpush2.bf16.msra.mxu0 0
        %849 = vmatprep.subr.bf16.mxu0 0
        %850 = vmatpush2.bf16.msra.mxu0 0
        %851 = vmatprep.subr.bf16.mxu0 0
        %852 = vmatpush2.bf16.msra.mxu0 0
        %853 = vmatprep.subr.bf16.mxu0 0
        %854 = vmatpush2.bf16.msra.mxu0 0
        %855 = vmatprep.subr.bf16.mxu0 0
        %856 = vmatpush2.bf16.msra.mxu0 0
        %857 = vmatprep.mubr.bf16.mxu0 0
        %858 = vmatmul.mubr.bf16.gmra.mxu0 %v307
        %v859 = vpop.f32.mrf.mxu0
        %v860 = vadd.f32 %v812, %v859
        %v861 = vpop.f32.mrf.mxu0
        %v862 = vpop.f32.mrf.mxu0
        %v863 = vpop.f32.mrf.mxu0
        %864 = vdwg.mxu0
        %v865 = vpack.c.bf16 %v736, %v736
        %v866 = vpack.c.bf16 %v798, %v798
        %v868 = vsel %vm305, %v865, 0
        %v871 = vsel %vm305, %v866, 0
        %873 = vmatprep.subr.bf16.mxu0 0
        %874 = vmatpush1.bf16.xpose.msra.mxu0 0
        %875 = vmatprep.subr.bf16.mxu0 0
        %876 = vmatpush1.bf16.xpose.msra.mxu0 0
        %877 = vmatprep.subr.bf16.mxu0 0
        %878 = vmatpush1.bf16.xpose.msra.mxu0 0
        %879 = vmatprep.subr.bf16.mxu0 0
        %880 = vmatpush1.bf16.xpose.msra.mxu0 0
        %881 = vmatprep.subr.bf16.mxu0 0
        %882 = vmatpush1.bf16.xpose.msra.mxu0 0
        %883 = vmatprep.subr.bf16.mxu0 0
        %884 = vmatpush1.bf16.xpose.msra.mxu0 0
        %885 = vmatprep.subr.bf16.mxu0 0
        %886 = vmatpush1.bf16.xpose.msra.mxu0 0
        %887 = vmatprep.subr.bf16.mxu0 0
        %888 = vmatpush1.bf16.xpose.msra.mxu0 %v871
        %889 = vmatprep.subr.bf16.mxu0 0
        %890 = vmatpush2.bf16.xpose.msra.mxu0 0
        %891 = vmatprep.subr.bf16.mxu0 0
        %892 = vmatpush2.bf16.xpose.msra.mxu0 0
        %893 = vmatprep.subr.bf16.mxu0 0
        %894 = vmatpush2.bf16.xpose.msra.mxu0 0
        %895 = vmatprep.subr.bf16.mxu0 0
        %896 = vmatpush2.bf16.xpose.msra.mxu0 0
        %897 = vmatprep.subr.bf16.mxu0 0
        %898 = vmatpush2.bf16.xpose.msra.mxu0 0
        %899 = vmatprep.subr.bf16.mxu0 0
        %900 = vmatpush2.bf16.xpose.msra.mxu0 0
        %901 = vmatprep.subr.bf16.mxu0 0
        %902 = vmatpush2.bf16.xpose.msra.mxu0 0
        %903 = vmatprep.subr.bf16.mxu0 0
        %904 = vmatpush2.bf16.xpose.msra.mxu0 0
        %905 = vmatprep.mubr.bf16.mxu0 0
        %906 = vmatmul.mubr.bf16.gmra.mxu0 %v868
        %v907 = vpop.f32.mrf.mxu0
        %v908 = vadd.f32 %v269, %v907
        %v909 = vpop.f32.mrf.mxu0
        %v910 = vpop.f32.mrf.mxu0
        %v911 = vpop.f32.mrf.mxu0
        %912 = vdwg.mxu0
        %v913 = vsel %vm521, %v908, -inf
        %914 = vmax.xlane.f32.xlu0 %v913
        %v915 = vpop.xlane.xlu0 %914
        %v916 = vsub.f32 %v908, %v915
        %v917 = vmul.f32 %v916, 1.442695
        %v918 = vpow.pop %v917
        %v919 = vsel %vm521, %v918, 0.0
        %920 = vadd.xlane.f32.xlu0 %v919
        %v921 = vpop.xlane.xlu0 %920
        %v922 = vrcp.pop %v921
        %v923 = vmul.f32 %v918, %v922
        %v924 = vpack.c.bf16 %v860, %v860
        %v925 = vpack.c.bf16 %v923, %v923
        %v927 = vsel %vm521, %v925, 0
        %v930 = vsel %vm538, %v924, 0
        %932 = vmatprep.subr.bf16.mxu0 0
        %933 = vmatpush1.bf16.msra.mxu0 0
        %934 = vmatprep.subr.bf16.mxu0 0
        %935 = vmatpush1.bf16.msra.mxu0 0
        %936 = vmatprep.subr.bf16.mxu0 0
        %937 = vmatpush1.bf16.msra.mxu0 0
        %938 = vmatprep.subr.bf16.mxu0 0
        %939 = vmatpush1.bf16.msra.mxu0 0
        %940 = vmatprep.subr.bf16.mxu0 0
        %941 = vmatpush1.bf16.msra.mxu0 0
        %942 = vmatprep.subr.bf16.mxu0 0
        %943 = vmatpush1.bf16.msra.mxu0 0
        %944 = vmatprep.subr.bf16.mxu0 0
        %945 = vmatpush1.bf16.msra.mxu0 0
        %946 = vmatprep.subr.bf16.mxu0 0
        %947 = vmatpush1.bf16.msra.mxu0 %v930
        %948 = vmatprep.subr.bf16.mxu0 0
        %949 = vmatpush2.bf16.msra.mxu0 0
        %950 = vmatprep.subr.bf16.mxu0 0
        %951 = vmatpush2.bf16.msra.mxu0 0
        %952 = vmatprep.subr.bf16.mxu0 0
        %953 = vmatpush2.bf16.msra.mxu0 0
        %954 = vmatprep.subr.bf16.mxu0 0
        %955 = vmatpush2.bf16.msra.mxu0 0
        %956 = vmatprep.subr.bf16.mxu0 0
        %957 = vmatpush2.bf16.msra.mxu0 0
        %958 = vmatprep.subr.bf16.mxu0 0
        %959 = vmatpush2.bf16.msra.mxu0 0
        %960 = vmatprep.subr.bf16.mxu0 0
        %961 = vmatpush2.bf16.msra.mxu0 0
        %962 = vmatprep.subr.bf16.mxu0 0
        %963 = vmatpush2.bf16.msra.mxu0 0
        %964 = vmatprep.mubr.bf16.mxu0 0
        %965 = vmatmul.mubr.bf16.gmra.mxu0 %v927
        %v966 = vpop.f32.mrf.mxu0
        %v967 = vadd.f32 0.0, %v966
        %v968 = vpop.f32.mrf.mxu0
        %v969 = vpop.f32.mrf.mxu0
        %v970 = vpop.f32.mrf.mxu0
        %971 = vdwg.mxu0
        %s972 = scalar_lea.vmem [#allocation2], 112
        %v973 = vld [vmem:[%s972] sm:$0xf]
        %v974 = vld [vmem:[%s972 + $0x4] sm:$0xf]
        %v975 = vld [vmem:[%s972 + $0x8] sm:$0xf]
        %v976 = vld [vmem:[%s972 + $0xc] sm:$0xf]
        %v977 = vpack.c.bf16 %v967, %v967
        %v978 = vld [vmem:[%s4 + $0x7] sm:$0x1]
        %v979 = vlaneseq
        %v980 = vshrl.u32 %v979, 7
        %v981 = vsub.s32 0, %v980
        %v982 = vrot.slane %v978, %v981
        %v987 = vunpack.c.l.b16 %v973
        %v988 = vunpack.c.l.b16 %v974
        %v989 = vunpack.c.l.b16 %v975
        %v990 = vunpack.c.l.b16 %v976
        %v991 = vpack.c.b16 %v988, %v987
        %v992 = vpack.c.b16 %v990, %v989
        %v996 = vsel %vm305, %v977, 0
        %998 = vmatprep.subr.bf16.mxu0 0
        %999 = vmatpush1.bf16.msra.mxu0 0
        %1000 = vmatprep.subr.bf16.mxu0 0
        %1001 = vmatpush1.bf16.msra.mxu0 0
        %1002 = vmatprep.subr.bf16.mxu0 0
        %1003 = vmatpush1.bf16.msra.mxu0 0
        %1004 = vmatprep.subr.bf16.mxu0 0
        %1005 = vmatpush1.bf16.msra.mxu0 0
        %1006 = vmatprep.subr.bf16.mxu0 0
        %1007 = vmatpush1.bf16.msra.mxu0 0
        %1008 = vmatprep.subr.bf16.mxu0 0
        %1009 = vmatpush1.bf16.msra.mxu0 0
        %1010 = vmatprep.subr.bf16.mxu0 0
        %1011 = vmatpush1.bf16.msra.mxu0 %v992
        %1012 = vmatprep.subr.bf16.mxu0 0
        %1013 = vmatpush1.bf16.msra.mxu0 %v991
        %1014 = vmatprep.subr.bf16.mxu0 0
        %1015 = vmatpush2.bf16.msra.mxu0 0
        %1016 = vmatprep.subr.bf16.mxu0 0
        %1017 = vmatpush2.bf16.msra.mxu0 0
        %1018 = vmatprep.subr.bf16.mxu0 0
        %1019 = vmatpush2.bf16.msra.mxu0 0
        %1020 = vmatprep.subr.bf16.mxu0 0
        %1021 = vmatpush2.bf16.msra.mxu0 0
        %1022 = vmatprep.subr.bf16.mxu0 0
        %1023 = vmatpush2.bf16.msra.mxu0 0
        %1024 = vmatprep.subr.bf16.mxu0 0
        %1025 = vmatpush2.bf16.msra.mxu0 0
        %1026 = vmatprep.subr.bf16.mxu0 0
        %1027 = vmatpush2.bf16.msra.mxu0 0
        %1028 = vmatprep.subr.bf16.mxu0 0
        %1029 = vmatpush2.bf16.msra.mxu0 0
        %1030 = vmatprep.mubr.bf16.mxu0 0
        %1031 = vmatmul.mubr.bf16.gmra.mxu0 %v996
        %v1032 = vpop.f32.mrf.mxu0
        %v1033 = vadd.f32 %v982, %v1032
        %v1034 = vpop.f32.mrf.mxu0
        %v1035 = vpop.f32.mrf.mxu0
        %v1036 = vpop.f32.mrf.mxu0
        %1037 = vdwg.mxu0
        %v1038 = vadd.f32 %v674, %v1033
        %v1039 = vld [vmem:[%s4 + $0xb] sm:$0x1]
        %v1040 = vld [vmem:[%s4 + $0xc] sm:$0x1]
        %v1041 = vsel %vm305, %v1038, 0.0
        %1042 = vadd.xlane.f32.xlu0 %v1041
        %v1043 = vpop.xlane.xlu0 %1042
        %v1044 = vmul.f32 %v1043, %v654
        %v1045 = vsub.f32 %v1038, %v1044
        %v1046 = vmul.f32 %v1045, %v1045
        %v1047 = vsel %vm305, %v1046, 0.0
        %1048 = vadd.xlane.f32.xlu0 %v1047
        %v1049 = vpop.xlane.xlu0 %1048
        %v1050 = vmul.f32 %v1049, %v654
        %v1051 = vadd.f32 %v1050, 1e-05
        %v1052 = vrsqrt.pop %v1051
        %v1053 = vmul.f32 %v1045, %v1052
        %v1054 = vlaneseq
        %v1055 = vshrl.u32 %v1054, 7
        %v1056 = vsub.s32 0, %v1055
        %v1057 = vrot.slane %v1039, %v1056
        %v1058 = vmul.f32 %v1053, %v1057
        %v1059 = vlaneseq
        %v1060 = vshrl.u32 %v1059, 7
        %v1061 = vsub.s32 0, %v1060
        %v1062 = vrot.slane %v1040, %v1061
        %v1063 = vadd.f32 %v1058, %v1062
        %v1064 = vpack.c.bf16 %v1063, %v1063
        %v1066 = vlaneseq
        %v1067 = vshrl.u32 %v1066, 7
        %v1068 = vsub.s32 0, %v1067
        %v1069 = vrot.slane %v274, %v1068
        %v1075 = vunpack.c.l.b16 %v270
        %v1076 = vunpack.c.l.b16 %v271
        %v1077 = vunpack.c.l.b16 %v272
        %v1078 = vunpack.c.l.b16 %v273
        %v1079 = vpack.c.b16 %v1076, %v1075
        %v1080 = vpack.c.b16 %v1078, %v1077
        %v1084 = vsel %vm305, %v1064, 0
        %1086 = vmatprep.subr.bf16.mxu0 0
        %1087 = vmatpush1.bf16.msra.mxu0 0
        %1088 = vmatprep.subr.bf16.mxu0 0
        %1089 = vmatpush1.bf16.msra.mxu0 0
        %1090 = vmatprep.subr.bf16.mxu0 0
        %1091 = vmatpush1.bf16.msra.mxu0 0
        %1092 = vmatprep.subr.bf16.mxu0 0
        %1093 = vmatpush1.bf16.msra.mxu0 0
        %1094 = vmatprep.subr.bf16.mxu0 0
        %1095 = vmatpush1.bf16.msra.mxu0 0
        %1096 = vmatprep.subr.bf16.mxu0 0
        %1097 = vmatpush1.bf16.msra.mxu0 0
        %1098 = vmatprep.subr.bf16.mxu0 0
        %1099 = vmatpush1.bf16.msra.mxu0 %v1080
        %1100 = vmatprep.subr.bf16.mxu0 0
        %1101 = vmatpush1.bf16.msra.mxu0 %v1079
        %1102 = vmatprep.subr.bf16.mxu0 0
        %1103 = vmatpush2.bf16.msra.mxu0 0
        %1104 = vmatprep.subr.bf16.mxu0 0
        %1105 = vmatpush2.bf16.msra.mxu0 0
        %1106 = vmatprep.subr.bf16.mxu0 0
        %1107 = vmatpush2.bf16.msra.mxu0 0
        %1108 = vmatprep.subr.bf16.mxu0 0
        %1109 = vmatpush2.bf16.msra.mxu0 0
        %1110 = vmatprep.subr.bf16.mxu0 0
        %1111 = vmatpush2.bf16.msra.mxu0 0
        %1112 = vmatprep.subr.bf16.mxu0 0
        %1113 = vmatpush2.bf16.msra.mxu0 0
        %1114 = vmatprep.subr.bf16.mxu0 0
        %1115 = vmatpush2.bf16.msra.mxu0 0
        %1116 = vmatprep.subr.bf16.mxu0 0
        %1117 = vmatpush2.bf16.msra.mxu0 0
        %1118 = vmatprep.mubr.bf16.mxu0 0
        %1119 = vmatmul.mubr.bf16.gmra.mxu0 %v1084
        %v1120 = vpop.f32.mrf.mxu0
        %v1121 = vadd.f32 %v1069, %v1120
        %v1122 = vpop.f32.mrf.mxu0
        %v1123 = vpop.f32.mrf.mxu0
        %v1124 = vpop.f32.mrf.mxu0
        %1125 = vdwg.mxu0
        %v1126 = vmax.f32 %v1121, 0.0
        %v1127 = vpack.c.bf16 %v1126, %v1126
        %v1128 = vld [vmem:[%s4 + $0x8] sm:$0x1]
        %v1129 = vlaneseq
        %v1130 = vshrl.u32 %v1129, 7
        %v1131 = vsub.s32 0, %v1130
        %v1132 = vrot.slane %v1128, %v1131
        %v1141 = vunpack.c.l.b16 %v275
        %v1142 = vunpack.c.l.b16 %v276
        %v1143 = vunpack.c.l.b16 %v277
        %v1144 = vunpack.c.l.b16 %v278
        %v1145 = vunpack.c.l.b16 %v279
        %v1146 = vunpack.c.l.b16 %v280
        %v1147 = vunpack.c.l.b16 %v281
        %v1148 = vunpack.c.l.b16 %v282
        %v1149 = vpack.c.b16 %v1142, %v1141
        %v1150 = vpack.c.b16 %v1144, %v1143
        %v1151 = vpack.c.b16 %v1146, %v1145
        %v1152 = vpack.c.b16 %v1148, %v1147
        %vm1157 = vcmask 523264
        %v1159 = vsel %vm1157, %v1127, 0
        %1161 = vmatprep.subr.bf16.mxu0 0
        %1162 = vmatpush1.bf16.msra.mxu0 0
        %1163 = vmatprep.subr.bf16.mxu0 0
        %1164 = vmatpush1.bf16.msra.mxu0 0
        %1165 = vmatprep.subr.bf16.mxu0 0
        %1166 = vmatpush1.bf16.msra.mxu0 0
        %1167 = vmatprep.subr.bf16.mxu0 0
        %1168 = vmatpush1.bf16.msra.mxu0 0
        %1169 = vmatprep.subr.bf16.mxu0 0
        %1170 = vmatpush1.bf16.msra.mxu0 %v1152
        %1171 = vmatprep.subr.bf16.mxu0 0
        %1172 = vmatpush1.bf16.msra.mxu0 %v1151
        %1173 = vmatprep.subr.bf16.mxu0 0
        %1174 = vmatpush1.bf16.msra.mxu0 %v1150
        %1175 = vmatprep.subr.bf16.mxu0 0
        %1176 = vmatpush1.bf16.msra.mxu0 %v1149
        %1177 = vmatprep.subr.bf16.mxu0 0
        %1178 = vmatpush2.bf16.msra.mxu0 0
        %1179 = vmatprep.subr.bf16.mxu0 0
        %1180 = vmatpush2.bf16.msra.mxu0 0
        %1181 = vmatprep.subr.bf16.mxu0 0
        %1182 = vmatpush2.bf16.msra.mxu0 0
        %1183 = vmatprep.subr.bf16.mxu0 0
        %1184 = vmatpush2.bf16.msra.mxu0 0
        %1185 = vmatprep.subr.bf16.mxu0 0
        %1186 = vmatpush2.bf16.msra.mxu0 0
        %1187 = vmatprep.subr.bf16.mxu0 0
        %1188 = vmatpush2.bf16.msra.mxu0 0
        %1189 = vmatprep.subr.bf16.mxu0 0
        %1190 = vmatpush2.bf16.msra.mxu0 0
        %1191 = vmatprep.subr.bf16.mxu0 0
        %1192 = vmatpush2.bf16.msra.mxu0 0
        %1193 = vmatprep.mubr.bf16.mxu0 0
        %1194 = vmatmul.mubr.bf16.gmra.mxu0 %v1159
        %v1195 = vpop.f32.mrf.mxu0
        %v1196 = vadd.f32 %v1132, %v1195
        %v1197 = vpop.f32.mrf.mxu0
        %v1198 = vpop.f32.mrf.mxu0
        %v1199 = vpop.f32.mrf.mxu0
        %1200 = vdwg.mxu0
        %v1201 = vadd.f32 %v1063, %v1196
        %v1202 = vld [vmem:[%s4 + $0xd] sm:$0x1]
        %v1203 = vld [vmem:[%s4 + $0xe] sm:$0x1]
        %v1204 = vsel %vm305, %v1201, 0.0
        %1205 = vadd.xlane.f32.xlu0 %v1204
        %v1206 = vpop.xlane.xlu0 %1205
        %v1207 = vmul.f32 %v1206, %v654
        %v1208 = vsub.f32 %v1201, %v1207
        %v1209 = vmul.f32 %v1208, %v1208
        %v1210 = vsel %vm305, %v1209, 0.0
        %1211 = vadd.xlane.f32.xlu0 %v1210
        %v1212 = vpop.xlane.xlu0 %1211
        %v1213 = vmul.f32 %v1212, %v654
        %v1214 = vadd.f32 %v1213, 1e-05
        %v1215 = vrsqrt.pop %v1214
        %v1216 = vmul.f32 %v1208, %v1215
        %v1217 = vlaneseq
        %v1218 = vshrl.u32 %v1217, 7
        %v1219 = vsub.s32 0, %v1218
        %v1220 = vrot.slane %v1202, %v1219
        %v1221 = vmul.f32 %v1216, %v1220
        %v1222 = vlaneseq
        %v1223 = vshrl.u32 %v1222, 7
        %v1224 = vsub.s32 0, %v1223
        %v1225 = vrot.slane %v1203, %v1224
        %v1226 = vadd.f32 %v1221, %v1225
        %s1227 = scalar_lea.vmem %s2, 16
        %v1228 = vld [vmem:[%s1227] sm:$0xf]
        %v1229 = vld [vmem:[%s1227 + $0x4] sm:$0xf]
        %v1230 = vld [vmem:[%s1227 + $0x8] sm:$0xf]
        %v1231 = vld [vmem:[%s1227 + $0xc] sm:$0xf]
        %s1232 = scalar_lea.vmem %s5, 1
        %v1233 = vld [vmem:[%s1232] sm:$0x1]
        %s1234 = scalar_lea.vmem %s3, 32
        %v1235 = vld [vmem:[%s1234] sm:$0xf]
        %v1236 = vld [vmem:[%s1234 + $0x4] sm:$0xf]
        %v1237 = vld [vmem:[%s1234 + $0x8] sm:$0xf]
        %v1238 = vld [vmem:[%s1234 + $0xc] sm:$0xf]
        %v1239 = vld [vmem:[%s1234 + $0x10] sm:$0xf]
        %v1240 = vld [vmem:[%s1234 + $0x14] sm:$0xf]
        %v1241 = vld [vmem:[%s1234 + $0x18] sm:$0xf]
        %v1242 = vld [vmem:[%s1234 + $0x1c] sm:$0xf]
        %s1243 = scalar_lea.vmem [#allocation2], 128
        %v1244 = vld [vmem:[%s1243] sm:$0xf]
        %v1245 = vld [vmem:[%s1243 + $0x4] sm:$0xf]
        %v1246 = vld [vmem:[%s1243 + $0x8] sm:$0xf]
        %v1247 = vld [vmem:[%s1243 + $0xc] sm:$0xf]
        %v1248 = vpack.c.bf16 %v1226, %v1226
        %s1249 = scalar_lea.vmem %s4, 16
        %v1250 = vld [vmem:[%s1249] sm:$0x1]
        %v1251 = vlaneseq
        %v1252 = vshrl.u32 %v1251, 7
        %v1253 = vsub.s32 0, %v1252
        %v1254 = vrot.slane %v1250, %v1253
        %v1259 = vunpack.c.l.b16 %v1244
        %v1260 = vunpack.c.l.b16 %v1245
        %v1261 = vunpack.c.l.b16 %v1246
        %v1262 = vunpack.c.l.b16 %v1247
        %v1263 = vpack.c.b16 %v1260, %v1259
        %v1264 = vpack.c.b16 %v1262, %v1261
        %v1268 = vsel %vm305, %v1248, 0
        %1270 = vmatprep.subr.bf16.mxu0 0
        %1271 = vmatpush1.bf16.msra.mxu0 0
        %1272 = vmatprep.subr.bf16.mxu0 0
        %1273 = vmatpush1.bf16.msra.mxu0 0
        %1274 = vmatprep.subr.bf16.mxu0 0
        %1275 = vmatpush1.bf16.msra.mxu0 0
        %1276 = vmatprep.subr.bf16.mxu0 0
        %1277 = vmatpush1.bf16.msra.mxu0 0
        %1278 = vmatprep.subr.bf16.mxu0 0
        %1279 = vmatpush1.bf16.msra.mxu0 0
        %1280 = vmatprep.subr.bf16.mxu0 0
        %1281 = vmatpush1.bf16.msra.mxu0 0
        %1282 = vmatprep.subr.bf16.mxu0 0
        %1283 = vmatpush1.bf16.msra.mxu0 %v1264
        %1284 = vmatprep.subr.bf16.mxu0 0
        %1285 = vmatpush1.bf16.msra.mxu0 %v1263
        %1286 = vmatprep.subr.bf16.mxu0 0
        %1287 = vmatpush2.bf16.msra.mxu0 0
        %1288 = vmatprep.subr.bf16.mxu0 0
        %1289 = vmatpush2.bf16.msra.mxu0 0
        %1290 = vmatprep.subr.bf16.mxu0 0
        %1291 = vmatpush2.bf16.msra.mxu0 0
        %1292 = vmatprep.subr.bf16.mxu0 0
        %1293 = vmatpush2.bf16.msra.mxu0 0
        %1294 = vmatprep.subr.bf16.mxu0 0
        %1295 = vmatpush2.bf16.msra.mxu0 0
        %1296 = vmatprep.subr.bf16.mxu0 0
        %1297 = vmatpush2.bf16.msra.mxu0 0
        %1298 = vmatprep.subr.bf16.mxu0 0
        %1299 = vmatpush2.bf16.msra.mxu0 0
        %1300 = vmatprep.subr.bf16.mxu0 0
        %1301 = vmatpush2.bf16.msra.mxu0 0
        %1302 = vmatprep.mubr.bf16.mxu0 0
        %1303 = vmatmul.mubr.bf16.gmra.mxu0 %v1268
        %v1304 = vpop.f32.mrf.mxu0
        %v1305 = vadd.f32 %v1254, %v1304
        %v1306 = vpop.f32.mrf.mxu0
        %v1307 = vpop.f32.mrf.mxu0
        %v1308 = vpop.f32.mrf.mxu0
        %1309 = vdwg.mxu0
        %s1310 = scalar_lea.vmem [#allocation2], 144
        %v1311 = vld [vmem:[%s1310] sm:$0xf]
        %v1312 = vld [vmem:[%s1310 + $0x4] sm:$0xf]
        %v1313 = vld [vmem:[%s1310 + $0x8] sm:$0xf]
        %v1314 = vld [vmem:[%s1310 + $0xc] sm:$0xf]
        %v1315 = vld [vmem:[%s1249 + $0x1] sm:$0x1]
        %v1316 = vlaneseq
        %v1317 = vshrl.u32 %v1316, 7
        %v1318 = vsub.s32 0, %v1317
        %v1319 = vrot.slane %v1315, %v1318
        %v1324 = vunpack.c.l.b16 %v1311
        %v1325 = vunpack.c.l.b16 %v1312
        %v1326 = vunpack.c.l.b16 %v1313
        %v1327 = vunpack.c.l.b16 %v1314
        %v1328 = vpack.c.b16 %v1325, %v1324
        %v1329 = vpack.c.b16 %v1327, %v1326
        %1332 = vmatprep.subr.bf16.mxu0 0
        %1333 = vmatpush1.bf16.msra.mxu0 0
        %1334 = vmatprep.subr.bf16.mxu0 0
        %1335 = vmatpush1.bf16.msra.mxu0 0
        %1336 = vmatprep.subr.bf16.mxu0 0
        %1337 = vmatpush1.bf16.msra.mxu0 0
        %1338 = vmatprep.subr.bf16.mxu0 0
        %1339 = vmatpush1.bf16.msra.mxu0 0
        %1340 = vmatprep.subr.bf16.mxu0 0
        %1341 = vmatpush1.bf16.msra.mxu0 0
        %1342 = vmatprep.subr.bf16.mxu0 0
        %1343 = vmatpush1.bf16.msra.mxu0 0
        %1344 = vmatprep.subr.bf16.mxu0 0
        %1345 = vmatpush1.bf16.msra.mxu0 %v1329
        %1346 = vmatprep.subr.bf16.mxu0 0
        %1347 = vmatpush1.bf16.msra.mxu0 %v1328
        %1348 = vmatprep.subr.bf16.mxu0 0
        %1349 = vmatpush2.bf16.msra.mxu0 0
        %1350 = vmatprep.subr.bf16.mxu0 0
        %1351 = vmatpush2.bf16.msra.mxu0 0
        %1352 = vmatprep.subr.bf16.mxu0 0
        %1353 = vmatpush2.bf16.msra.mxu0 0
        %1354 = vmatprep.subr.bf16.mxu0 0
        %1355 = vmatpush2.bf16.msra.mxu0 0
        %1356 = vmatprep.subr.bf16.mxu0 0
        %1357 = vmatpush2.bf16.msra.mxu0 0
        %1358 = vmatprep.subr.bf16.mxu0 0
        %1359 = vmatpush2.bf16.msra.mxu0 0
        %1360 = vmatprep.subr.bf16.mxu0 0
        %1361 = vmatpush2.bf16.msra.mxu0 0
        %1362 = vmatprep.subr.bf16.mxu0 0
        %1363 = vmatpush2.bf16.msra.mxu0 0
        %1364 = vmatprep.mubr.bf16.mxu0 0
        %1365 = vmatmul.mubr.bf16.gmra.mxu0 %v1268
        %v1366 = vpop.f32.mrf.mxu0
        %v1367 = vadd.f32 %v1319, %v1366
        %v1368 = vpop.f32.mrf.mxu0
        %v1369 = vpop.f32.mrf.mxu0
        %v1370 = vpop.f32.mrf.mxu0
        %1371 = vdwg.mxu0
        %s1372 = scalar_lea.vmem [#allocation2], 160
        %v1373 = vld [vmem:[%s1372] sm:$0xf]
        %v1374 = vld [vmem:[%s1372 + $0x4] sm:$0xf]
        %v1375 = vld [vmem:[%s1372 + $0x8] sm:$0xf]
        %v1376 = vld [vmem:[%s1372 + $0xc] sm:$0xf]
        %v1377 = vld [vmem:[%s1249 + $0x2] sm:$0x1]
        %v1378 = vlaneseq
        %v1379 = vshrl.u32 %v1378, 7
        %v1380 = vsub.s32 0, %v1379
        %v1381 = vrot.slane %v1377, %v1380
        %v1386 = vunpack.c.l.b16 %v1373
        %v1387 = vunpack.c.l.b16 %v1374
        %v1388 = vunpack.c.l.b16 %v1375
        %v1389 = vunpack.c.l.b16 %v1376
        %v1390 = vpack.c.b16 %v1387, %v1386
        %v1391 = vpack.c.b16 %v1389, %v1388
        %1394 = vmatprep.subr.bf16.mxu0 0
        %1395 = vmatpush1.bf16.msra.mxu0 0
        %1396 = vmatprep.subr.bf16.mxu0 0
        %1397 = vmatpush1.bf16.msra.mxu0 0
        %1398 = vmatprep.subr.bf16.mxu0 0
        %1399 = vmatpush1.bf16.msra.mxu0 0
        %1400 = vmatprep.subr.bf16.mxu0 0
        %1401 = vmatpush1.bf16.msra.mxu0 0
        %1402 = vmatprep.subr.bf16.mxu0 0
        %1403 = vmatpush1.bf16.msra.mxu0 0
        %1404 = vmatprep.subr.bf16.mxu0 0
        %1405 = vmatpush1.bf16.msra.mxu0 0
        %1406 = vmatprep.subr.bf16.mxu0 0
        %1407 = vmatpush1.bf16.msra.mxu0 %v1391
        %1408 = vmatprep.subr.bf16.mxu0 0
        %1409 = vmatpush1.bf16.msra.mxu0 %v1390
        %1410 = vmatprep.subr.bf16.mxu0 0
        %1411 = vmatpush2.bf16.msra.mxu0 0
        %1412 = vmatprep.subr.bf16.mxu0 0
        %1413 = vmatpush2.bf16.msra.mxu0 0
        %1414 = vmatprep.subr.bf16.mxu0 0
        %1415 = vmatpush2.bf16.msra.mxu0 0
        %1416 = vmatprep.subr.bf16.mxu0 0
        %1417 = vmatpush2.bf16.msra.mxu0 0
        %1418 = vmatprep.subr.bf16.mxu0 0
        %1419 = vmatpush2.bf16.msra.mxu0 0
        %1420 = vmatprep.subr.bf16.mxu0 0
        %1421 = vmatpush2.bf16.msra.mxu0 0
        %1422 = vmatprep.subr.bf16.mxu0 0
        %1423 = vmatpush2.bf16.msra.mxu0 0
        %1424 = vmatprep.subr.bf16.mxu0 0
        %1425 = vmatpush2.bf16.msra.mxu0 0
        %1426 = vmatprep.mubr.bf16.mxu0 0
        %1427 = vmatmul.mubr.bf16.gmra.mxu0 %v1268
        %v1428 = vpop.f32.mrf.mxu0
        %v1429 = vadd.f32 %v1381, %v1428
        %v1430 = vpop.f32.mrf.mxu0
        %v1431 = vpop.f32.mrf.mxu0
        %v1432 = vpop.f32.mrf.mxu0
        %1433 = vdwg.mxu0
        %v1434 = vpack.c.bf16 %v1305, %v1305
        %v1435 = vpack.c.bf16 %v1367, %v1367
        %v1437 = vsel %vm305, %v1434, 0
        %v1440 = vsel %vm305, %v1435, 0
        %1442 = vmatprep.subr.bf16.mxu0 0
        %1443 = vmatpush1.bf16.xpose.msra.mxu0 0
        %1444 = vmatprep.subr.bf16.mxu0 0
        %1445 = vmatpush1.bf16.xpose.msra.mxu0 0
        %1446 = vmatprep.subr.bf16.mxu0 0
        %1447 = vmatpush1.bf16.xpose.msra.mxu0 0
        %1448 = vmatprep.subr.bf16.mxu0 0
        %1449 = vmatpush1.bf16.xpose.msra.mxu0 0
        %1450 = vmatprep.subr.bf16.mxu0 0
        %1451 = vmatpush1.bf16.xpose.msra.mxu0 0
        %1452 = vmatprep.subr.bf16.mxu0 0
        %1453 = vmatpush1.bf16.xpose.msra.mxu0 0
        %1454 = vmatprep.subr.bf16.mxu0 0
        %1455 = vmatpush1.bf16.xpose.msra.mxu0 0
        %1456 = vmatprep.subr.bf16.mxu0 0
        %1457 = vmatpush1.bf16.xpose.msra.mxu0 %v1440
        %1458 = vmatprep.subr.bf16.mxu0 0
        %1459 = vmatpush2.bf16.xpose.msra.mxu0 0
        %1460 = vmatprep.subr.bf16.mxu0 0
        %1461 = vmatpush2.bf16.xpose.msra.mxu0 0
        %1462 = vmatprep.subr.bf16.mxu0 0
        %1463 = vmatpush2.bf16.xpose.msra.mxu0 0
        %1464 = vmatprep.subr.bf16.mxu0 0
        %1465 = vmatpush2.bf16.xpose.msra.mxu0 0
        %1466 = vmatprep.subr.bf16.mxu0 0
        %1467 = vmatpush2.bf16.xpose.msra.mxu0 0
        %1468 = vmatprep.subr.bf16.mxu0 0
        %1469 = vmatpush2.bf16.xpose.msra.mxu0 0
        %1470 = vmatprep.subr.bf16.mxu0 0
        %1471 = vmatpush2.bf16.xpose.msra.mxu0 0
        %1472 = vmatprep.subr.bf16.mxu0 0
        %1473 = vmatpush2.bf16.xpose.msra.mxu0 0
        %1474 = vmatprep.mubr.bf16.mxu0 0
        %1475 = vmatmul.mubr.bf16.gmra.mxu0 %v1437
        %v1476 = vpop.f32.mrf.mxu0
        %v1477 = vadd.f32 0.0, %v1476
        %v1478 = vpop.f32.mrf.mxu0
        %v1479 = vpop.f32.mrf.mxu0
        %v1480 = vpop.f32.mrf.mxu0
        %1481 = vdwg.mxu0
        %v1482 = vsel %vm521, %v1477, -inf
        %1483 = vmax.xlane.f32.xlu0 %v1482
        %v1484 = vpop.xlane.xlu0 %1483
        %v1485 = vsub.f32 %v1477, %v1484
        %v1486 = vmul.f32 %v1485, 1.442695
        %v1487 = vpow.pop %v1486
        %v1488 = vsel %vm521, %v1487, 0.0
        %1489 = vadd.xlane.f32.xlu0 %v1488
        %v1490 = vpop.xlane.xlu0 %1489
        %v1491 = vrcp.pop %v1490
        %v1492 = vmul.f32 %v1487, %v1491
        %v1493 = vpack.c.bf16 %v1429, %v1429
        %v1494 = vpack.c.bf16 %v1492, %v1492
        %v1496 = vsel %vm521, %v1494, 0
        %v1499 = vsel %vm538, %v1493, 0
        %1501 = vmatprep.subr.bf16.mxu0 0
        %1502 = vmatpush1.bf16.msra.mxu0 0
        %1503 = vmatprep.subr.bf16.mxu0 0
        %1504 = vmatpush1.bf16.msra.mxu0 0
        %1505 = vmatprep.subr.bf16.mxu0 0
        %1506 = vmatpush1.bf16.msra.mxu0 0
        %1507 = vmatprep.subr.bf16.mxu0 0
        %1508 = vmatpush1.bf16.msra.mxu0 0
        %1509 = vmatprep.subr.bf16.mxu0 0
        %1510 = vmatpush1.bf16.msra.mxu0 0
        %1511 = vmatprep.subr.bf16.mxu0 0
        %1512 = vmatpush1.bf16.msra.mxu0 0
        %1513 = vmatprep.subr.bf16.mxu0 0
        %1514 = vmatpush1.bf16.msra.mxu0 0
        %1515 = vmatprep.subr.bf16.mxu0 0
        %1516 = vmatpush1.bf16.msra.mxu0 %v1499
        %1517 = vmatprep.subr.bf16.mxu0 0
        %1518 = vmatpush2.bf16.msra.mxu0 0
        %1519 = vmatprep.subr.bf16.mxu0 0
        %1520 = vmatpush2.bf16.msra.mxu0 0
        %1521 = vmatprep.subr.bf16.mxu0 0
        %1522 = vmatpush2.bf16.msra.mxu0 0
        %1523 = vmatprep.subr.bf16.mxu0 0
        %1524 = vmatpush2.bf16.msra.mxu0 0
        %1525 = vmatprep.subr.bf16.mxu0 0
        %1526 = vmatpush2.bf16.msra.mxu0 0
        %1527 = vmatprep.subr.bf16.mxu0 0
        %1528 = vmatpush2.bf16.msra.mxu0 0
        %1529 = vmatprep.subr.bf16.mxu0 0
        %1530 = vmatpush2.bf16.msra.mxu0 0
        %1531 = vmatprep.subr.bf16.mxu0 0
        %1532 = vmatpush2.bf16.msra.mxu0 0
        %1533 = vmatprep.mubr.bf16.mxu0 0
        %1534 = vmatmul.mubr.bf16.gmra.mxu0 %v1496
        %v1535 = vpop.f32.mrf.mxu0
        %v1536 = vadd.f32 0.0, %v1535
        %v1537 = vpop.f32.mrf.mxu0
        %v1538 = vpop.f32.mrf.mxu0
        %v1539 = vpop.f32.mrf.mxu0
        %1540 = vdwg.mxu0
        %s1541 = scalar_lea.vmem [#allocation2], 176
        %v1542 = vld [vmem:[%s1541] sm:$0xf]
        %v1543 = vld [vmem:[%s1541 + $0x4] sm:$0xf]
        %v1544 = vld [vmem:[%s1541 + $0x8] sm:$0xf]
        %v1545 = vld [vmem:[%s1541 + $0xc] sm:$0xf]
        %v1546 = vpack.c.bf16 %v1536, %v1536
        %v1547 = vld [vmem:[%s1249 + $0x3] sm:$0x1]
        %v1548 = vlaneseq
        %v1549 = vshrl.u32 %v1548, 7
        %v1550 = vsub.s32 0, %v1549
        %v1551 = vrot.slane %v1547, %v1550
        %v1556 = vunpack.c.l.b16 %v1542
        %v1557 = vunpack.c.l.b16 %v1543
        %v1558 = vunpack.c.l.b16 %v1544
        %v1559 = vunpack.c.l.b16 %v1545
        %v1560 = vpack.c.b16 %v1557, %v1556
        %v1561 = vpack.c.b16 %v1559, %v1558
        %v1565 = vsel %vm305, %v1546, 0
        %1567 = vmatprep.subr.bf16.mxu0 0
        %1568 = vmatpush1.bf16.msra.mxu0 0
        %1569 = vmatprep.subr.bf16.mxu0 0
        %1570 = vmatpush1.bf16.msra.mxu0 0
        %1571 = vmatprep.subr.bf16.mxu0 0
        %1572 = vmatpush1.bf16.msra.mxu0 0
        %1573 = vmatprep.subr.bf16.mxu0 0
        %1574 = vmatpush1.bf16.msra.mxu0 0
        %1575 = vmatprep.subr.bf16.mxu0 0
        %1576 = vmatpush1.bf16.msra.mxu0 0
        %1577 = vmatprep.subr.bf16.mxu0 0
        %1578 = vmatpush1.bf16.msra.mxu0 0
        %1579 = vmatprep.subr.bf16.mxu0 0
        %1580 = vmatpush1.bf16.msra.mxu0 %v1561
        %1581 = vmatprep.subr.bf16.mxu0 0
        %1582 = vmatpush1.bf16.msra.mxu0 %v1560
        %1583 = vmatprep.subr.bf16.mxu0 0
        %1584 = vmatpush2.bf16.msra.mxu0 0
        %1585 = vmatprep.subr.bf16.mxu0 0
        %1586 = vmatpush2.bf16.msra.mxu0 0
        %1587 = vmatprep.subr.bf16.mxu0 0
        %1588 = vmatpush2.bf16.msra.mxu0 0
        %1589 = vmatprep.subr.bf16.mxu0 0
        %1590 = vmatpush2.bf16.msra.mxu0 0
        %1591 = vmatprep.subr.bf16.mxu0 0
        %1592 = vmatpush2.bf16.msra.mxu0 0
        %1593 = vmatprep.subr.bf16.mxu0 0
        %1594 = vmatpush2.bf16.msra.mxu0 0
        %1595 = vmatprep.subr.bf16.mxu0 0
        %1596 = vmatpush2.bf16.msra.mxu0 0
        %1597 = vmatprep.subr.bf16.mxu0 0
        %1598 = vmatpush2.bf16.msra.mxu0 0
        %1599 = vmatprep.mubr.bf16.mxu0 0
        %1600 = vmatmul.mubr.bf16.gmra.mxu0 %v1565
        %v1601 = vpop.f32.mrf.mxu0
        %v1602 = vadd.f32 %v1551, %v1601
        %v1603 = vpop.f32.mrf.mxu0
        %v1604 = vpop.f32.mrf.mxu0
        %v1605 = vpop.f32.mrf.mxu0
        %1606 = vdwg.mxu0
        %v1607 = vadd.f32 %v1226, %v1602
        %v1608 = vld [vmem:[%s1249 + $0x9] sm:$0x1]
        %v1609 = vld [vmem:[%s1249 + $0xa] sm:$0x1]
        %v1610 = vsel %vm305, %v1607, 0.0
        %1611 = vadd.xlane.f32.xlu0 %v1610
        %v1612 = vpop.xlane.xlu0 %1611
        %v1613 = vmul.f32 %v1612, %v654
        %v1614 = vsub.f32 %v1607, %v1613
        %v1615 = vmul.f32 %v1614, %v1614
        %v1616 = vsel %vm305, %v1615, 0.0
        %1617 = vadd.xlane.f32.xlu0 %v1616
        %v1618 = vpop.xlane.xlu0 %1617
        %v1619 = vmul.f32 %v1618, %v654
        %v1620 = vadd.f32 %v1619, 1e-05
        %v1621 = vrsqrt.pop %v1620
        %v1622 = vmul.f32 %v1614, %v1621
        %v1623 = vlaneseq
        %v1624 = vshrl.u32 %v1623, 7
        %v1625 = vsub.s32 0, %v1624
        %v1626 = vrot.slane %v1608, %v1625
        %v1627 = vmul.f32 %v1622, %v1626
        %v1628 = vlaneseq
        %v1629 = vshrl.u32 %v1628, 7
        %v1630 = vsub.s32 0, %v1629
        %v1631 = vrot.slane %v1609, %v1630
        %v1632 = vadd.f32 %v1627, %v1631
        %s1633 = scalar_lea.vmem [#allocation2], 192
        %v1634 = vld [vmem:[%s1633] sm:$0xf]
        %v1635 = vld [vmem:[%s1633 + $0x4] sm:$0xf]
        %v1636 = vld [vmem:[%s1633 + $0x8] sm:$0xf]
        %v1637 = vld [vmem:[%s1633 + $0xc] sm:$0xf]
        %v1638 = vpack.c.bf16 %v1632, %v1632
        %v1639 = vld [vmem:[%s1249 + $0x4] sm:$0x1]
        %v1640 = vlaneseq
        %v1641 = vshrl.u32 %v1640, 7
        %v1642 = vsub.s32 0, %v1641
        %v1643 = vrot.slane %v1639, %v1642
        %v1648 = vunpack.c.l.b16 %v1634
        %v1649 = vunpack.c.l.b16 %v1635
        %v1650 = vunpack.c.l.b16 %v1636
        %v1651 = vunpack.c.l.b16 %v1637
        %v1652 = vpack.c.b16 %v1649, %v1648
        %v1653 = vpack.c.b16 %v1651, %v1650
        %v1657 = vsel %vm305, %v1638, 0
        %1659 = vmatprep.subr.bf16.mxu0 0
        %1660 = vmatpush1.bf16.msra.mxu0 0
        %1661 = vmatprep.subr.bf16.mxu0 0
        %1662 = vmatpush1.bf16.msra.mxu0 0
        %1663 = vmatprep.subr.bf16.mxu0 0
        %1664 = vmatpush1.bf16.msra.mxu0 0
        %1665 = vmatprep.subr.bf16.mxu0 0
        %1666 = vmatpush1.bf16.msra.mxu0 0
        %1667 = vmatprep.subr.bf16.mxu0 0
        %1668 = vmatpush1.bf16.msra.mxu0 0
        %1669 = vmatprep.subr.bf16.mxu0 0
        %1670 = vmatpush1.bf16.msra.mxu0 0
        %1671 = vmatprep.subr.bf16.mxu0 0
        %1672 = vmatpush1.bf16.msra.mxu0 %v1653
        %1673 = vmatprep.subr.bf16.mxu0 0
        %1674 = vmatpush1.bf16.msra.mxu0 %v1652
        %1675 = vmatprep.subr.bf16.mxu0 0
        %1676 = vmatpush2.bf16.msra.mxu0 0
        %1677 = vmatprep.subr.bf16.mxu0 0
        %1678 = vmatpush2.bf16.msra.mxu0 0
        %1679 = vmatprep.subr.bf16.mxu0 0
        %1680 = vmatpush2.bf16.msra.mxu0 0
        %1681 = vmatprep.subr.bf16.mxu0 0
        %1682 = vmatpush2.bf16.msra.mxu0 0
        %1683 = vmatprep.subr.bf16.mxu0 0
        %1684 = vmatpush2.bf16.msra.mxu0 0
        %1685 = vmatprep.subr.bf16.mxu0 0
        %1686 = vmatpush2.bf16.msra.mxu0 0
        %1687 = vmatprep.subr.bf16.mxu0 0
        %1688 = vmatpush2.bf16.msra.mxu0 0
        %1689 = vmatprep.subr.bf16.mxu0 0
        %1690 = vmatpush2.bf16.msra.mxu0 0
        %1691 = vmatprep.mubr.bf16.mxu0 0
        %1692 = vmatmul.mubr.bf16.gmra.mxu0 %v1657
        %v1693 = vpop.f32.mrf.mxu0
        %v1694 = vadd.f32 %v1643, %v1693
        %v1695 = vpop.f32.mrf.mxu0
        %v1696 = vpop.f32.mrf.mxu0
        %v1697 = vpop.f32.mrf.mxu0
        %1698 = vdwg.mxu0
        %s1699 = scalar_lea.vmem [#allocation2], 208
        %v1700 = vld [vmem:[%s1699] sm:$0xf]
        %v1701 = vld [vmem:[%s1699 + $0x4] sm:$0xf]
        %v1702 = vld [vmem:[%s1699 + $0x8] sm:$0xf]
        %v1703 = vld [vmem:[%s1699 + $0xc] sm:$0xf]
        %v1704 = vld [vmem:[%s1249 + $0x5] sm:$0x1]
        %v1705 = vlaneseq
        %v1706 = vshrl.u32 %v1705, 7
        %v1707 = vsub.s32 0, %v1706
        %v1708 = vrot.slane %v1704, %v1707
        %v1713 = vunpack.c.l.b16 %v1700
        %v1714 = vunpack.c.l.b16 %v1701
        %v1715 = vunpack.c.l.b16 %v1702
        %v1716 = vunpack.c.l.b16 %v1703
        %v1717 = vpack.c.b16 %v1714, %v1713
        %v1718 = vpack.c.b16 %v1716, %v1715
        %1721 = vmatprep.subr.bf16.mxu0 0
        %1722 = vmatpush1.bf16.msra.mxu0 0
        %1723 = vmatprep.subr.bf16.mxu0 0
        %1724 = vmatpush1.bf16.msra.mxu0 0
        %1725 = vmatprep.subr.bf16.mxu0 0
        %1726 = vmatpush1.bf16.msra.mxu0 0
        %1727 = vmatprep.subr.bf16.mxu0 0
        %1728 = vmatpush1.bf16.msra.mxu0 0
        %1729 = vmatprep.subr.bf16.mxu0 0
        %1730 = vmatpush1.bf16.msra.mxu0 0
        %1731 = vmatprep.subr.bf16.mxu0 0
        %1732 = vmatpush1.bf16.msra.mxu0 0
        %1733 = vmatprep.subr.bf16.mxu0 0
        %1734 = vmatpush1.bf16.msra.mxu0 %v1718
        %1735 = vmatprep.subr.bf16.mxu0 0
        %1736 = vmatpush1.bf16.msra.mxu0 %v1717
        %1737 = vmatprep.subr.bf16.mxu0 0
        %1738 = vmatpush2.bf16.msra.mxu0 0
        %1739 = vmatprep.subr.bf16.mxu0 0
        %1740 = vmatpush2.bf16.msra.mxu0 0
        %1741 = vmatprep.subr.bf16.mxu0 0
        %1742 = vmatpush2.bf16.msra.mxu0 0
        %1743 = vmatprep.subr.bf16.mxu0 0
        %1744 = vmatpush2.bf16.msra.mxu0 0
        %1745 = vmatprep.subr.bf16.mxu0 0
        %1746 = vmatpush2.bf16.msra.mxu0 0
        %1747 = vmatprep.subr.bf16.mxu0 0
        %1748 = vmatpush2.bf16.msra.mxu0 0
        %1749 = vmatprep.subr.bf16.mxu0 0
        %1750 = vmatpush2.bf16.msra.mxu0 0
        %1751 = vmatprep.subr.bf16.mxu0 0
        %1752 = vmatpush2.bf16.msra.mxu0 0
        %1753 = vmatprep.mubr.bf16.mxu0 0
        %1754 = vmatmul.mubr.bf16.gmra.mxu0 %v1268
        %v1755 = vpop.f32.mrf.mxu0
        %v1756 = vadd.f32 %v1708, %v1755
        %v1757 = vpop.f32.mrf.mxu0
        %v1758 = vpop.f32.mrf.mxu0
        %v1759 = vpop.f32.mrf.mxu0
        %1760 = vdwg.mxu0
        %s1761 = scalar_lea.vmem [#allocation2], 224
        %v1762 = vld [vmem:[%s1761] sm:$0xf]
        %v1763 = vld [vmem:[%s1761 + $0x4] sm:$0xf]
        %v1764 = vld [vmem:[%s1761 + $0x8] sm:$0xf]
        %v1765 = vld [vmem:[%s1761 + $0xc] sm:$0xf]
        %v1766 = vld [vmem:[%s1249 + $0x6] sm:$0x1]
        %v1767 = vlaneseq
        %v1768 = vshrl.u32 %v1767, 7
        %v1769 = vsub.s32 0, %v1768
        %v1770 = vrot.slane %v1766, %v1769
        %v1775 = vunpack.c.l.b16 %v1762
        %v1776 = vunpack.c.l.b16 %v1763
        %v1777 = vunpack.c.l.b16 %v1764
        %v1778 = vunpack.c.l.b16 %v1765
        %v1779 = vpack.c.b16 %v1776, %v1775
        %v1780 = vpack.c.b16 %v1778, %v1777
        %1783 = vmatprep.subr.bf16.mxu0 0
        %1784 = vmatpush1.bf16.msra.mxu0 0
        %1785 = vmatprep.subr.bf16.mxu0 0
        %1786 = vmatpush1.bf16.msra.mxu0 0
        %1787 = vmatprep.subr.bf16.mxu0 0
        %1788 = vmatpush1.bf16.msra.mxu0 0
        %1789 = vmatprep.subr.bf16.mxu0 0
        %1790 = vmatpush1.bf16.msra.mxu0 0
        %1791 = vmatprep.subr.bf16.mxu0 0
        %1792 = vmatpush1.bf16.msra.mxu0 0
        %1793 = vmatprep.subr.bf16.mxu0 0
        %1794 = vmatpush1.bf16.msra.mxu0 0
        %1795 = vmatprep.subr.bf16.mxu0 0
        %1796 = vmatpush1.bf16.msra.mxu0 %v1780
        %1797 = vmatprep.subr.bf16.mxu0 0
        %1798 = vmatpush1.bf16.msra.mxu0 %v1779
        %1799 = vmatprep.subr.bf16.mxu0 0
        %1800 = vmatpush2.bf16.msra.mxu0 0
        %1801 = vmatprep.subr.bf16.mxu0 0
        %1802 = vmatpush2.bf16.msra.mxu0 0
        %1803 = vmatprep.subr.bf16.mxu0 0
        %1804 = vmatpush2.bf16.msra.mxu0 0
        %1805 = vmatprep.subr.bf16.mxu0 0
        %1806 = vmatpush2.bf16.msra.mxu0 0
        %1807 = vmatprep.subr.bf16.mxu0 0
        %1808 = vmatpush2.bf16.msra.mxu0 0
        %1809 = vmatprep.subr.bf16.mxu0 0
        %1810 = vmatpush2.bf16.msra.mxu0 0
        %1811 = vmatprep.subr.bf16.mxu0 0
        %1812 = vmatpush2.bf16.msra.mxu0 0
        %1813 = vmatprep.subr.bf16.mxu0 0
        %1814 = vmatpush2.bf16.msra.mxu0 0
        %1815 = vmatprep.mubr.bf16.mxu0 0
        %1816 = vmatmul.mubr.bf16.gmra.mxu0 %v1268
        %v1817 = vpop.f32.mrf.mxu0
        %v1818 = vadd.f32 %v1770, %v1817
        %v1819 = vpop.f32.mrf.mxu0
        %v1820 = vpop.f32.mrf.mxu0
        %v1821 = vpop.f32.mrf.mxu0
        %1822 = vdwg.mxu0
        %v1823 = vpack.c.bf16 %v1694, %v1694
        %v1824 = vpack.c.bf16 %v1756, %v1756
        %v1826 = vsel %vm305, %v1823, 0
        %v1829 = vsel %vm305, %v1824, 0
        %1831 = vmatprep.subr.bf16.mxu0 0
        %1832 = vmatpush1.bf16.xpose.msra.mxu0 0
        %1833 = vmatprep.subr.bf16.mxu0 0
        %1834 = vmatpush1.bf16.xpose.msra.mxu0 0
        %1835 = vmatprep.subr.bf16.mxu0 0
        %1836 = vmatpush1.bf16.xpose.msra.mxu0 0
        %1837 = vmatprep.subr.bf16.mxu0 0
        %1838 = vmatpush1.bf16.xpose.msra.mxu0 0
        %1839 = vmatprep.subr.bf16.mxu0 0
        %1840 = vmatpush1.bf16.xpose.msra.mxu0 0
        %1841 = vmatprep.subr.bf16.mxu0 0
        %1842 = vmatpush1.bf16.xpose.msra.mxu0 0
        %1843 = vmatprep.subr.bf16.mxu0 0
        %1844 = vmatpush1.bf16.xpose.msra.mxu0 0
        %1845 = vmatprep.subr.bf16.mxu0 0
        %1846 = vmatpush1.bf16.xpose.msra.mxu0 %v1829
        %1847 = vmatprep.subr.bf16.mxu0 0
        %1848 = vmatpush2.bf16.xpose.msra.mxu0 0
        %1849 = vmatprep.subr.bf16.mxu0 0
        %1850 = vmatpush2.bf16.xpose.msra.mxu0 0
        %1851 = vmatprep.subr.bf16.mxu0 0
        %1852 = vmatpush2.bf16.xpose.msra.mxu0 0
        %1853 = vmatprep.subr.bf16.mxu0 0
        %1854 = vmatpush2.bf16.xpose.msra.mxu0 0
        %1855 = vmatprep.subr.bf16.mxu0 0
        %1856 = vmatpush2.bf16.xpose.msra.mxu0 0
        %1857 = vmatprep.subr.bf16.mxu0 0
        %1858 = vmatpush2.bf16.xpose.msra.mxu0 0
        %1859 = vmatprep.subr.bf16.mxu0 0
        %1860 = vmatpush2.bf16.xpose.msra.mxu0 0
        %1861 = vmatprep.subr.bf16.mxu0 0
        %1862 = vmatpush2.bf16.xpose.msra.mxu0 0
        %1863 = vmatprep.mubr.bf16.mxu0 0
        %1864 = vmatmul.mubr.bf16.gmra.mxu0 %v1826
        %v1865 = vpop.f32.mrf.mxu0
        %v1866 = vadd.f32 %v269, %v1865
        %v1867 = vpop.f32.mrf.mxu0
        %v1868 = vpop.f32.mrf.mxu0
        %v1869 = vpop.f32.mrf.mxu0
        %1870 = vdwg.mxu0
        %v1871 = vsel %vm521, %v1866, -inf
        %1872 = vmax.xlane.f32.xlu0 %v1871
        %v1873 = vpop.xlane.xlu0 %1872
        %v1874 = vsub.f32 %v1866, %v1873
        %v1875 = vmul.f32 %v1874, 1.442695
        %v1876 = vpow.pop %v1875
        %v1877 = vsel %vm521, %v1876, 0.0
        %1878 = vadd.xlane.f32.xlu0 %v1877
        %v1879 = vpop.xlane.xlu0 %1878
        %v1880 = vrcp.pop %v1879
        %v1881 = vmul.f32 %v1876, %v1880
        %v1882 = vpack.c.bf16 %v1818, %v1818
        %v1883 = vpack.c.bf16 %v1881, %v1881
        %v1885 = vsel %vm521, %v1883, 0
        %v1888 = vsel %vm538, %v1882, 0
        %1890 = vmatprep.subr.bf16.mxu0 0
        %1891 = vmatpush1.bf16.msra.mxu0 0
        %1892 = vmatprep.subr.bf16.mxu0 0
        %1893 = vmatpush1.bf16.msra.mxu0 0
        %1894 = vmatprep.subr.bf16.mxu0 0
        %1895 = vmatpush1.bf16.msra.mxu0 0
        %1896 = vmatprep.subr.bf16.mxu0 0
        %1897 = vmatpush1.bf16.msra.mxu0 0
        %1898 = vmatprep.subr.bf16.mxu0 0
        %1899 = vmatpush1.bf16.msra.mxu0 0
        %1900 = vmatprep.subr.bf16.mxu0 0
        %1901 = vmatpush1.bf16.msra.mxu0 0
        %1902 = vmatprep.subr.bf16.mxu0 0
        %1903 = vmatpush1.bf16.msra.mxu0 0
        %1904 = vmatprep.subr.bf16.mxu0 0
        %1905 = vmatpush1.bf16.msra.mxu0 %v1888
        %1906 = vmatprep.subr.bf16.mxu0 0
        %1907 = vmatpush2.bf16.msra.mxu0 0
        %1908 = vmatprep.subr.bf16.mxu0 0
        %1909 = vmatpush2.bf16.msra.mxu0 0
        %1910 = vmatprep.subr.bf16.mxu0 0
        %1911 = vmatpush2.bf16.msra.mxu0 0
        %1912 = vmatprep.subr.bf16.mxu0 0
        %1913 = vmatpush2.bf16.msra.mxu0 0
        %1914 = vmatprep.subr.bf16.mxu0 0
        %1915 = vmatpush2.bf16.msra.mxu0 0
        %1916 = vmatprep.subr.bf16.mxu0 0
        %1917 = vmatpush2.bf16.msra.mxu0 0
        %1918 = vmatprep.subr.bf16.mxu0 0
        %1919 = vmatpush2.bf16.msra.mxu0 0
        %1920 = vmatprep.subr.bf16.mxu0 0
        %1921 = vmatpush2.bf16.msra.mxu0 0
        %1922 = vmatprep.mubr.bf16.mxu0 0
        %1923 = vmatmul.mubr.bf16.gmra.mxu0 %v1885
        %v1924 = vpop.f32.mrf.mxu0
        %v1925 = vadd.f32 0.0, %v1924
        %v1926 = vpop.f32.mrf.mxu0
        %v1927 = vpop.f32.mrf.mxu0
        %v1928 = vpop.f32.mrf.mxu0
        %1929 = vdwg.mxu0
        %s1930 = scalar_lea.vmem [#allocation2], 240
        %v1931 = vld [vmem:[%s1930] sm:$0xf]
        %v1932 = vld [vmem:[%s1930 + $0x4] sm:$0xf]
        %v1933 = vld [vmem:[%s1930 + $0x8] sm:$0xf]
        %v1934 = vld [vmem:[%s1930 + $0xc] sm:$0xf]
        %v1935 = vpack.c.bf16 %v1925, %v1925
        %v1936 = vld [vmem:[%s1249 + $0x7] sm:$0x1]
        %v1937 = vlaneseq
        %v1938 = vshrl.u32 %v1937, 7
        %v1939 = vsub.s32 0, %v1938
        %v1940 = vrot.slane %v1936, %v1939
        %v1945 = vunpack.c.l.b16 %v1931
        %v1946 = vunpack.c.l.b16 %v1932
        %v1947 = vunpack.c.l.b16 %v1933
        %v1948 = vunpack.c.l.b16 %v1934
        %v1949 = vpack.c.b16 %v1946, %v1945
        %v1950 = vpack.c.b16 %v1948, %v1947
        %v1954 = vsel %vm305, %v1935, 0
        %1956 = vmatprep.subr.bf16.mxu0 0
        %1957 = vmatpush1.bf16.msra.mxu0 0
        %1958 = vmatprep.subr.bf16.mxu0 0
        %1959 = vmatpush1.bf16.msra.mxu0 0
        %1960 = vmatprep.subr.bf16.mxu0 0
        %1961 = vmatpush1.bf16.msra.mxu0 0
        %1962 = vmatprep.subr.bf16.mxu0 0
        %1963 = vmatpush1.bf16.msra.mxu0 0
        %1964 = vmatprep.subr.bf16.mxu0 0
        %1965 = vmatpush1.bf16.msra.mxu0 0
        %1966 = vmatprep.subr.bf16.mxu0 0
        %1967 = vmatpush1.bf16.msra.mxu0 0
        %1968 = vmatprep.subr.bf16.mxu0 0
        %1969 = vmatpush1.bf16.msra.mxu0 %v1950
        %1970 = vmatprep.subr.bf16.mxu0 0
        %1971 = vmatpush1.bf16.msra.mxu0 %v1949
        %1972 = vmatprep.subr.bf16.mxu0 0
        %1973 = vmatpush2.bf16.msra.mxu0 0
        %1974 = vmatprep.subr.bf16.mxu0 0
        %1975 = vmatpush2.bf16.msra.mxu0 0
        %1976 = vmatprep.subr.bf16.mxu0 0
        %1977 = vmatpush2.bf16.msra.mxu0 0
        %1978 = vmatprep.subr.bf16.mxu0 0
        %1979 = vmatpush2.bf16.msra.mxu0 0
        %1980 = vmatprep.subr.bf16.mxu0 0
        %1981 = vmatpush2.bf16.msra.mxu0 0
        %1982 = vmatprep.subr.bf16.mxu0 0
        %1983 = vmatpush2.bf16.msra.mxu0 0
        %1984 = vmatprep.subr.bf16.mxu0 0
        %1985 = vmatpush2.bf16.msra.mxu0 0
        %1986 = vmatprep.subr.bf16.mxu0 0
        %1987 = vmatpush2.bf16.msra.mxu0 0
        %1988 = vmatprep.mubr.bf16.mxu0 0
        %1989 = vmatmul.mubr.bf16.gmra.mxu0 %v1954
        %v1990 = vpop.f32.mrf.mxu0
        %v1991 = vadd.f32 %v1940, %v1990
        %v1992 = vpop.f32.mrf.mxu0
        %v1993 = vpop.f32.mrf.mxu0
        %v1994 = vpop.f32.mrf.mxu0
        %1995 = vdwg.mxu0
        %v1996 = vadd.f32 %v1632, %v1991
        %v1997 = vld [vmem:[%s1249 + $0xb] sm:$0x1]
        %v1998 = vld [vmem:[%s1249 + $0xc] sm:$0x1]
        %v1999 = vsel %vm305, %v1996, 0.0
        %2000 = vadd.xlane.f32.xlu0 %v1999
        %v2001 = vpop.xlane.xlu0 %2000
        %v2002 = vmul.f32 %v2001, %v654
        %v2003 = vsub.f32 %v1996, %v2002
        %v2004 = vmul.f32 %v2003, %v2003
        %v2005 = vsel %vm305, %v2004, 0.0
        %2006 = vadd.xlane.f32.xlu0 %v2005
        %v2007 = vpop.xlane.xlu0 %2006
        %v2008 = vmul.f32 %v2007, %v654
        %v2009 = vadd.f32 %v2008, 1e-05
        %v2010 = vrsqrt.pop %v2009
        %v2011 = vmul.f32 %v2003, %v2010
        %v2012 = vlaneseq
        %v2013 = vshrl.u32 %v2012, 7
        %v2014 = vsub.s32 0, %v2013
        %v2015 = vrot.slane %v1997, %v2014
        %v2016 = vmul.f32 %v2011, %v2015
        %v2017 = vlaneseq
        %v2018 = vshrl.u32 %v2017, 7
        %v2019 = vsub.s32 0, %v2018
        %v2020 = vrot.slane %v1998, %v2019
        %v2021 = vadd.f32 %v2016, %v2020
        %v2022 = vpack.c.bf16 %v2021, %v2021
        %v2024 = vlaneseq
        %v2025 = vshrl.u32 %v2024, 7
        %v2026 = vsub.s32 0, %v2025
        %v2027 = vrot.slane %v1233, %v2026
        %v2033 = vunpack.c.l.b16 %v1228
        %v2034 = vunpack.c.l.b16 %v1229
        %v2035 = vunpack.c.l.b16 %v1230
        %v2036 = vunpack.c.l.b16 %v1231
        %v2037 = vpack.c.b16 %v2034, %v2033
        %v2038 = vpack.c.b16 %v2036, %v2035
        %v2042 = vsel %vm305, %v2022, 0
        %2044 = vmatprep.subr.bf16.mxu0 0
        %2045 = vmatpush1.bf16.msra.mxu0 0
        %2046 = vmatprep.subr.bf16.mxu0 0
        %2047 = vmatpush1.bf16.msra.mxu0 0
        %2048 = vmatprep.subr.bf16.mxu0 0
        %2049 = vmatpush1.bf16.msra.mxu0 0
        %2050 = vmatprep.subr.bf16.mxu0 0
        %2051 = vmatpush1.bf16.msra.mxu0 0
        %2052 = vmatprep.subr.bf16.mxu0 0
        %2053 = vmatpush1.bf16.msra.mxu0 0
        %2054 = vmatprep.subr.bf16.mxu0 0
        %2055 = vmatpush1.bf16.msra.mxu0 0
        %2056 = vmatprep.subr.bf16.mxu0 0
        %2057 = vmatpush1.bf16.msra.mxu0 %v2038
        %2058 = vmatprep.subr.bf16.mxu0 0
        %2059 = vmatpush1.bf16.msra.mxu0 %v2037
        %2060 = vmatprep.subr.bf16.mxu0 0
        %2061 = vmatpush2.bf16.msra.mxu0 0
        %2062 = vmatprep.subr.bf16.mxu0 0
        %2063 = vmatpush2.bf16.msra.mxu0 0
        %2064 = vmatprep.subr.bf16.mxu0 0
        %2065 = vmatpush2.bf16.msra.mxu0 0
        %2066 = vmatprep.subr.bf16.mxu0 0
        %2067 = vmatpush2.bf16.msra.mxu0 0
        %2068 = vmatprep.subr.bf16.mxu0 0
        %2069 = vmatpush2.bf16.msra.mxu0 0
        %2070 = vmatprep.subr.bf16.mxu0 0
        %2071 = vmatpush2.bf16.msra.mxu0 0
        %2072 = vmatprep.subr.bf16.mxu0 0
        %2073 = vmatpush2.bf16.msra.mxu0 0
        %2074 = vmatprep.subr.bf16.mxu0 0
        %2075 = vmatpush2.bf16.msra.mxu0 0
        %2076 = vmatprep.mubr.bf16.mxu0 0
        %2077 = vmatmul.mubr.bf16.gmra.mxu0 %v2042
        %v2078 = vpop.f32.mrf.mxu0
        %v2079 = vadd.f32 %v2027, %v2078
        %v2080 = vpop.f32.mrf.mxu0
        %v2081 = vpop.f32.mrf.mxu0
        %v2082 = vpop.f32.mrf.mxu0
        %2083 = vdwg.mxu0
        %v2084 = vmax.f32 %v2079, 0.0
        %v2085 = vpack.c.bf16 %v2084, %v2084
        %v2086 = vld [vmem:[%s1249 + $0x8] sm:$0x1]
        %v2087 = vlaneseq
        %v2088 = vshrl.u32 %v2087, 7
        %v2089 = vsub.s32 0, %v2088
        %v2090 = vrot.slane %v2086, %v2089
        %v2099 = vunpack.c.l.b16 %v1235
        %v2100 = vunpack.c.l.b16 %v1236
        %v2101 = vunpack.c.l.b16 %v1237
        %v2102 = vunpack.c.l.b16 %v1238
        %v2103 = vunpack.c.l.b16 %v1239
        %v2104 = vunpack.c.l.b16 %v1240
        %v2105 = vunpack.c.l.b16 %v1241
        %v2106 = vunpack.c.l.b16 %v1242
        %v2107 = vpack.c.b16 %v2100, %v2099
        %v2108 = vpack.c.b16 %v2102, %v2101
        %v2109 = vpack.c.b16 %v2104, %v2103
        %v2110 = vpack.c.b16 %v2106, %v2105
        %v2116 = vsel %vm1157, %v2085, 0
        %2118 = vmatprep.subr.bf16.mxu0 0
        %2119 = vmatpush1.bf16.msra.mxu0 0
        %2120 = vmatprep.subr.bf16.mxu0 0
        %2121 = vmatpush1.bf16.msra.mxu0 0
        %2122 = vmatprep.subr.bf16.mxu0 0
        %2123 = vmatpush1.bf16.msra.mxu0 0
        %2124 = vmatprep.subr.bf16.mxu0 0
        %2125 = vmatpush1.bf16.msra.mxu0 0
        %2126 = vmatprep.subr.bf16.mxu0 0
        %2127 = vmatpush1.bf16.msra.mxu0 %v2110
        %2128 = vmatprep.subr.bf16.mxu0 0
        %2129 = vmatpush1.bf16.msra.mxu0 %v2109
        %2130 = vmatprep.subr.bf16.mxu0 0
        %2131 = vmatpush1.bf16.msra.mxu0 %v2108
        %2132 = vmatprep.subr.bf16.mxu0 0
        %2133 = vmatpush1.bf16.msra.mxu0 %v2107
        %2134 = vmatprep.subr.bf16.mxu0 0
        %2135 = vmatpush2.bf16.msra.mxu0 0
        %2136 = vmatprep.subr.bf16.mxu0 0
        %2137 = vmatpush2.bf16.msra.mxu0 0
        %2138 = vmatprep.subr.bf16.mxu0 0
        %2139 = vmatpush2.bf16.msra.mxu0 0
        %2140 = vmatprep.subr.bf16.mxu0 0
        %2141 = vmatpush2.bf16.msra.mxu0 0
        %2142 = vmatprep.subr.bf16.mxu0 0
        %2143 = vmatpush2.bf16.msra.mxu0 0
        %2144 = vmatprep.subr.bf16.mxu0 0
        %2145 = vmatpush2.bf16.msra.mxu0 0
        %2146 = vmatprep.subr.bf16.mxu0 0
        %2147 = vmatpush2.bf16.msra.mxu0 0
        %2148 = vmatprep.subr.bf16.mxu0 0
        %2149 = vmatpush2.bf16.msra.mxu0 0
        %2150 = vmatprep.mubr.bf16.mxu0 0
        %2151 = vmatmul.mubr.bf16.gmra.mxu0 %v2116
        %v2152 = vpop.f32.mrf.mxu0
        %v2153 = vadd.f32 %v2090, %v2152
        %v2154 = vpop.f32.mrf.mxu0
        %v2155 = vpop.f32.mrf.mxu0
        %v2156 = vpop.f32.mrf.mxu0
        %2157 = vdwg.mxu0
        %v2158 = vadd.f32 %v2021, %v2153
        %v2159 = vld [vmem:[%s1249 + $0xd] sm:$0x1]
        %v2160 = vld [vmem:[%s1249 + $0xe] sm:$0x1]
        %v2161 = vsel %vm305, %v2158, 0.0
        %2162 = vadd.xlane.f32.xlu0 %v2161
        %v2163 = vpop.xlane.xlu0 %2162
        %v2164 = vmul.f32 %v2163, %v654
        %v2165 = vsub.f32 %v2158, %v2164
        %v2166 = vmul.f32 %v2165, %v2165
        %v2167 = vsel %vm305, %v2166, 0.0
        %2168 = vadd.xlane.f32.xlu0 %v2167
        %v2169 = vpop.xlane.xlu0 %2168
        %v2170 = vmul.f32 %v2169, %v654
        %v2171 = vadd.f32 %v2170, 1e-05
        %v2172 = vrsqrt.pop %v2171
        %v2173 = vmul.f32 %v2165, %v2172
        %v2174 = vlaneseq
        %v2175 = vshrl.u32 %v2174, 7
        %v2176 = vsub.s32 0, %v2175
        %v2177 = vrot.slane %v2159, %v2176
        %v2178 = vmul.f32 %v2173, %v2177
        %v2179 = vlaneseq
        %v2180 = vshrl.u32 %v2179, 7
        %v2181 = vsub.s32 0, %v2180
        %v2182 = vrot.slane %v2160, %v2181
        %v2183 = vadd.f32 %v2178, %v2182
        %2184 = vst.msk [vmem:[%s257] sm:$0xff] %vm305, %v2183
        %s2185 = sand.u32 %s160, 1
        %s2186 = scalar_lea.sflag [#allocation4], %s2185
        %s2187 = sand.u32 %s160, 1
        %s2188 = smul.addr %s2187, 8
        %s2189 = scalar_lea.vmem [#allocation5], %s2188
        // Predicated region
        $region49: #{tpu_custom_call.1} parent=43 // pred_check
          %p2190 = pneg %p170
        $region50: #{tpu_custom_call.1} parent=43 // pred_check_branch
          %2192 = sbr.rel (%p2190) target = $region52
        $region51: #{tpu_custom_call.1} parent=43 // pred_region
          %s2194 = ssub.s32 128, 128
          %2195 = vsyncadd %s2186, %s2194
          %s2196 = smul.addr %s21, 128
          %s2197 = scalar_lea.hbm %s6, %s2196
          %s2199 = sshll.u32 %s2189, 4
          %s2200 = int_to_ptr.vmem [resolvable:$true] %s2199
          %2202 = dma.vmem_to_hbm [thread:$0]  %s2200, 128, %s2197, %s2186
        $region52: #{tpu_custom_call.1} parent=43 // pred_fallthru
          _
      $region44: #{tpu_custom_call.1} parent=5 // pred_fallthru
        _
      %p2203 = scmp.le.s32.totalorder 2, %s16
      // Predicated region
      $region53: #{tpu_custom_call.1} parent=5 // pred_check
        %p2204 = pneg %p2203
      $region54: #{tpu_custom_call.1} parent=5 // pred_check_branch
        %2206 = sbr.rel (%p2204) target = $region56
      $region55: #{tpu_custom_call.1} parent=5 // pred_region
        %s2207 = ssub.s32 %s16, 2
        // Predicated region
        $region57: #{tpu_custom_call.1} parent=55 // pred_check
          %p2208 = pneg %p176
        $region58: #{tpu_custom_call.1} parent=55 // pred_check_branch
          %2210 = sbr.rel (%p2208) target = $region60
        $region59: #{tpu_custom_call.1} parent=55 // pred_region
          %s2211 = sand.u32 %s161, 1
          %s2212 = scalar_lea.sflag [#allocation4], %s2211
          %s2213 = sand.u32 %s161, 1
          %s2214 = smul.addr %s2213, 8
          %s2215 = scalar_lea.vmem [#allocation5], %s2214
          %2216 = dma.done %s2212, 128
        $region60: #{tpu_custom_call.1} parent=55 // pred_fallthru
          _
      $region56: #{tpu_custom_call.1} parent=5 // pred_fallthru
        _
    $region6: #{tpu_custom_call.1} parent=1 // loop_footer
      %s20 = sadd.s32 1, %s16
    $region7: #{tpu_custom_call.1} parent=1 // loop_footer_branch
      %15 = sbr.rel target = $region3
    $region8: #{tpu_custom_call.1} parent=1 // loop_exit
      _
    %2217 = vsyncpa [#allocation3], 1
    %s2218 = scalar_lea.sflag [#allocation3], 1
    %2219 = vsyncpa %s2218, 1
    %2220 = vsyncpa [#allocation4], 1
    %s2221 = scalar_lea.sflag [#allocation4], 1
    %2222 = vsyncpa %s2221, 1

</llo_original>
